<compile_context>
chip_gen: v6e
topology: v6e:2x2x1
jax: 0.10.0
libtpu: 0.0.40
codegen_flags: <defaults>
</compile_context>

<pallas_src>
import functools

import jax
import jax.numpy as jnp
from jax.experimental import pallas as pl
from jax.experimental.pallas import tpu as pltpu


# ---------------------------------------------------------------------------
# helpers
# ---------------------------------------------------------------------------
def _round_up(x, m):
    return ((x + m - 1) // m) * m


def _node_tile(n):
    # 256-aligned tiles keep the 256x256 MXU (v6e/v7x) full; 128-aligned is
    # enough on v5e and still fine here. Small graphs use one 8-aligned tile.
    return 256 if n >= 256 else _round_up(max(n, 8), 8)


def _feat_tile(f):
    # K-tile over the input-feature dim of the X @ W_cat projection.
    return 512 if f >= 1024 else _round_up(max(f, 128), 128)


def _pad2(a, rows, cols):
    return jnp.pad(a, ((0, rows - a.shape[0]), (0, cols - a.shape[1])))


_COMPILER_PARAMS = pltpu.CompilerParams(
    dimension_semantics=("parallel", "arbitrary"),
    vmem_limit_bytes=64 * 1024 * 1024,  # <= physical VMEM on every generation
)


# ---------------------------------------------------------------------------
# kernel 1: tiled projection  XW = X @ [W_l | W_r]
# ---------------------------------------------------------------------------
def _matmul_kernel(x_ref, w_ref, o_ref, acc_ref):
    k = pl.program_id(1)

    @pl.when(k == 0)
    def _():
        acc_ref[...] = jnp.zeros_like(acc_ref)

    acc_ref[...] += jnp.dot(x_ref[...], w_ref[...],
                            preferred_element_type=jnp.float32)

    @pl.when(k == pl.num_programs(1) - 1)
    def _():
        o_ref[...] = acc_ref[...].astype(o_ref.dtype)


def matmul(x, w, *, tm, tk, out_dtype):
    m, kdim = x.shape
    n = w.shape[1]
    return pl.pallas_call(
        _matmul_kernel,
        out_shape=jax.ShapeDtypeStruct((m, n), out_dtype),
        grid=(m // tm, kdim // tk),
        in_specs=[
            pl.BlockSpec((tm, tk), lambda i, k: (i, k)),   # X tile
            pl.BlockSpec((tk, n), lambda i, k: (k, 0)),    # W_cat K-slab
        ],
        out_specs=pl.BlockSpec((tm, n), lambda i, k: (i, 0)),
        scratch_shapes=[pltpu.VMEM((tm, n), jnp.float32)],
        compiler_params=_COMPILER_PARAMS,
    )(x, w)


# ---------------------------------------------------------------------------
# kernel 2: SAGE aggregation
#   out = A_norm @ XW_l + XW_r + b  (+ ReLU)  (+ optional fused h @ W_next)
# ---------------------------------------------------------------------------
def _sage_agg_kernel(a_ref, xwl_ref, xwr_ref, b_ref, *rest,
                     apply_relu, fuse_next):
    if fuse_next:
        w_next_ref, o_ref, acc_ref = rest
    else:
        o_ref, acc_ref = rest

    k = pl.program_id(1)

    @pl.when(k == 0)
    def _():
        acc_ref[...] = jnp.zeros_like(acc_ref)

    # neighbor-mean aggregation of already-projected features: MXU-only loop.
    acc_ref[...] += jnp.dot(a_ref[...], xwl_ref[...],
                            preferred_element_type=jnp.float32)

    # root path + bias (+ ReLU, + fused next-layer projection) only on the
    # last reduction step.
    @pl.when(k == pl.num_programs(1) - 1)
    def _():
        h = acc_ref[...] + xwr_ref[...].astype(jnp.float32) + b_ref[...]
        if apply_relu:
            h = jnp.maximum(h, 0.0)
        if fuse_next:
            # h stays in VMEM; emit layer-2's input projection directly.
            o_ref[...] = jnp.dot(h.astype(w_next_ref.dtype), w_next_ref[...],
                                 preferred_element_type=jnp.float32
                                 ).astype(o_ref.dtype)
        else:
            o_ref[...] = h.astype(o_ref.dtype)


def sage_aggregate(a_norm, xw, bias, *, tm, tk, apply_relu,
                   w_next=None, out_dtype=jnp.float32):
    n_pad = a_norm.shape[0]
    f_out = xw.shape[1] // 2            # padded output width of this layer
    fuse_next = w_next is not None
    out_cols = w_next.shape[1] if fuse_next else f_out

    in_specs = [
        pl.BlockSpec((tm, tk), lambda i, k: (i, k)),     # A_norm tile
        pl.BlockSpec((tk, f_out), lambda i, k: (k, 0)),  # (X @ W_l) K-slab
        pl.BlockSpec((tm, f_out), lambda i, k: (i, 1)),  # (X @ W_r) row slab
        pl.BlockSpec((1, f_out), lambda i, k: (0, 0)),   # bias (resident)
    ]
    args = [a_norm, xw, xw, bias]
    if fuse_next:
        in_specs.append(pl.BlockSpec(w_next.shape, lambda i, k: (0, 0)))
        args.append(w_next)

    kernel = functools.partial(_sage_agg_kernel, apply_relu=apply_relu,
                               fuse_next=fuse_next)
    return pl.pallas_call(
        kernel,
        out_shape=jax.ShapeDtypeStruct((n_pad, out_cols), out_dtype),
        grid=(n_pad // tm, n_pad // tk),
        in_specs=in_specs,
        out_specs=pl.BlockSpec((tm, out_cols), lambda i, k: (i, 0)),
        scratch_shapes=[pltpu.VMEM((tm, f_out), jnp.float32)],
        compiler_params=_COMPILER_PARAMS,
    )(*args)


# ---------------------------------------------------------------------------
# model wrapper (plain-JAX glue)
# ---------------------------------------------------------------------------
def build_mean_aggregation_matrix(edge_index, num_nodes):
    """Dense row-normalized adjacency from COO edge_index [2, E]."""
    src, dst = edge_index[0], edge_index[1]
    adj = jnp.zeros((num_nodes, num_nodes), jnp.float32).at[dst, src].add(1.0)
    deg = adj.sum(axis=1, keepdims=True)
    return adj / jnp.maximum(deg, 1.0)


def graphsage_forward(x, edge_index, params):
    n, f_in = x.shape
    hidden = params["w1_l"].shape[1]
    n_classes = params["w2_l"].shape[1]

    tm = _node_tile(n)
    n_pad = _round_up(n, tm)
    tkf = _feat_tile(f_in)
    f_pad = _round_up(f_in, tkf)
    h_pad = _round_up(hidden, 128)
    c_pad = _round_up(n_classes, 128)

    # padded / bf16 operands (one-time layout plumbing outside the kernels)
    a = build_mean_aggregation_matrix(edge_index, n)
    a = _pad2(a, n_pad, n_pad).astype(jnp.bfloat16)
    x_p = _pad2(x, n_pad, f_pad).astype(jnp.bfloat16)

    w1 = jnp.concatenate(
        [_pad2(params["w1_l"], f_pad, h_pad),
         _pad2(params["w1_r"], f_pad, h_pad)], axis=1).astype(jnp.bfloat16)
    w2 = jnp.concatenate(
        [_pad2(params["w2_l"], h_pad, c_pad),
         _pad2(params["w2_r"], h_pad, c_pad)], axis=1).astype(jnp.bfloat16)
    b1 = _pad2(params["b1"], 1, h_pad)
    b2 = _pad2(params["b2"], 1, c_pad)

    # layer 1 input projection (root + neighbor weights in one matmul)
    xw1 = matmul(x_p, w1, tm=tm, tk=tkf, out_dtype=jnp.bfloat16)

    # layer 1: aggregate + bias + ReLU, fused with layer-2 input projection
    # TODO(synk): F.dropout(p=0.5, training=...) — inference mode (identity).
    xw2 = sage_aggregate(a, xw1, b1, tm=tm, tk=tm, apply_relu=True,
                         w_next=w2, out_dtype=jnp.bfloat16)

    # layer 2: aggregate + bias -> logits
    out = sage_aggregate(a, xw2, b2, tm=tm, tk=tm, apply_relu=False,
                         out_dtype=jnp.float32)
    return out[:n, :n_classes]


def init_params(key, num_features, hidden_channels, num_classes):
    k1, k2, k3, k4 = jax.random.split(key, 4)
    s1 = 1.0 / jnp.sqrt(num_features)
    s2 = 1.0 / jnp.sqrt(hidden_channels)
    return {
        "w1_l": jax.random.uniform(k1, (num_features, hidden_channels),
                                   jnp.float32, -s1, s1),
        "w1_r": jax.random.uniform(k2, (num_features, hidden_channels),
                                   jnp.float32, -s1, s1),
        "b1": jnp.zeros((1, hidden_channels), jnp.float32),
        "w2_l": jax.random.uniform(k3, (hidden_channels, num_classes),
                                   jnp.float32, -s2, s2),
        "w2_r": jax.random.uniform(k4, (hidden_channels, num_classes),
                                   jnp.float32, -s2, s2),
        "b2": jnp.zeros((1, num_classes), jnp.float32),
    }


if __name__ == "__main__":
    # Small synthetic graph (stands in for a Planetoid dataset), large enough
    # to exercise the tiled (row x source-node) grid.
    NUM_NODES = 512
    NUM_FEATURES = 384
    HIDDEN_CHANNELS = 64
    NUM_CLASSES = 8
    NUM_EDGES = 2048

    key = jax.random.PRNGKey(0)
    kx, ke, kp = jax.random.split(key, 3)

    x = jax.random.normal(kx, (NUM_NODES, NUM_FEATURES), jnp.float32)
    edge_index = jax.random.randint(ke, (2, NUM_EDGES), 0, NUM_NODES, jnp.int32)
    params = init_params(kp, NUM_FEATURES, HIDDEN_CHANNELS, NUM_CLASSES)

    out = jax.jit(graphsage_forward)(x, edge_index, params)
    out = jax.block_until_ready(out)
    assert out.shape == (NUM_NODES, NUM_CLASSES)

    # loose sanity check vs. an f32 pure-JAX reference (kernel uses bf16 MXU)
    a_ref = build_mean_aggregation_matrix(edge_index, NUM_NODES)
    h = a_ref @ (x @ params["w1_l"]) + x @ params["w1_r"] + params["b1"]
    h = jnp.maximum(h, 0.0)
    ref = a_ref @ (h @ params["w2_l"]) + h @ params["w2_r"] + params["b2"]
    rel = float(jnp.max(jnp.abs(out - ref)) / (jnp.max(jnp.abs(ref)) + 1e-6))
    assert rel < 5e-2, f"numerical mismatch: rel={rel}"

    print("KERNEL_OK")
</pallas_src>

<mosaic_0001>
module attributes {stable_mosaic.version = 11 : i64} {
  func.func private @main(%arg0: i32) attributes {dimension_semantics = [#tpu.dimension_semantics<core_parallel>], iteration_bounds = array<i64: 2>, tpu.core_type = #tpu.core_type<sc_scalar_subcore>, window_params = []} {
    return
  }
}

module attributes {stable_mosaic.version = 11 : i64} {
  func.func private @main(%arg0: i32) attributes {dimension_semantics = [#tpu.dimension_semantics<core_parallel>], iteration_bounds = array<i64: 2>, tpu.core_type = #tpu.core_type<sc_scalar_subcore>, window_params = []} {
    return
  }
}

module attributes {stable_mosaic.version = 11 : i64} {
  func.func @_matmul_kernel(%arg0: i32, %arg1: i32, %arg2: memref<256x384xbf16, #tpu.memory_space<vmem>>, %arg3: memref<384x256xbf16, #tpu.memory_space<vmem>>, %arg4: memref<256x256xbf16, #tpu.memory_space<vmem>>, %arg5: memref<256x256xf32, #tpu.memory_space<vmem>>) attributes {dimension_semantics = [#tpu.dimension_semantics<parallel>, #tpu.dimension_semantics<arbitrary>], iteration_bounds = array<i64: 2, 1>, scalar_prefetch = 0 : i64, scratch_operands = 1 : i64, tpu.core_type = #tpu.core_type<tc>, window_params = [{transform_indices = @transform_0, window_bounds = array<i64: 256, 384>}, {transform_indices = @transform_1, window_bounds = array<i64: 384, 256>}, {transform_indices = @transform_2, window_bounds = array<i64: 256, 256>}]} {
    %c0_i32 = arith.constant 0 : i32
    %0 = arith.cmpi eq, %arg1, %c0_i32 : i32
    %1 = arith.extui %0 : i1 to i32
    %c0_i32_0 = arith.constant 0 : i32
    %2 = arith.cmpi ne, %1, %c0_i32_0 : i32
    scf.if %2 {
      %cst_10 = arith.constant 0.000000e+00 : f32
      %12 = vector.broadcast %cst_10 : f32 to vector<256x256xf32>
      %c0_11 = arith.constant 0 : index
      %c0_12 = arith.constant 0 : index
      %13 = vector.load %arg5[%c0_11, %c0_12] : memref<256x256xf32, #tpu.memory_space<vmem>>, vector<256x256xf32>
      tpu.vector_store %arg5[%c0_11, %c0_12], %12 {strides = array<i32>} : memref<256x256xf32, #tpu.memory_space<vmem>>, vector<256x256xf32>,
    } else {
    }
    %c0 = arith.constant 0 : index
    %c0_1 = arith.constant 0 : index
    %3 = vector.load %arg5[%c0, %c0_1] : memref<256x256xf32, #tpu.memory_space<vmem>>, vector<256x256xf32>
    %c0_2 = arith.constant 0 : index
    %c0_3 = arith.constant 0 : index
    %4 = vector.load %arg2[%c0_2, %c0_3] : memref<256x384xbf16, #tpu.memory_space<vmem>>, vector<256x384xbf16>
    %c0_4 = arith.constant 0 : index
    %c0_5 = arith.constant 0 : index
    %5 = vector.load %arg3[%c0_4, %c0_5] : memref<384x256xbf16, #tpu.memory_space<vmem>>, vector<384x256xbf16>
    %cst = arith.constant dense<0.000000e+00> : vector<256x256xf32>
    %6 = tpu.matmul %4, %5, %cst {dimension_numbers = #tpu.dot_dimension_numbers<[1], [0], [0], [1], [0, 0, 1, 1], [], []>} : vector<256x384xbf16>, vector<384x256xbf16>, vector<256x256xf32> -> vector<256x256xf32>
    %7 = arith.addf %3, %6 : vector<256x256xf32>
    %c0_6 = arith.constant 0 : index
    %c0_7 = arith.constant 0 : index
    %8 = vector.load %arg5[%c0_6, %c0_7] : memref<256x256xf32, #tpu.memory_space<vmem>>, vector<256x256xf32>
    tpu.vector_store %arg5[%c0_6, %c0_7], %7 {strides = array<i32>} : memref<256x256xf32, #tpu.memory_space<vmem>>, vector<256x256xf32>,
    %c0_i32_8 = arith.constant 0 : i32
    %9 = arith.cmpi eq, %arg1, %c0_i32_8 : i32
    %10 = arith.extui %9 : i1 to i32
    %c0_i32_9 = arith.constant 0 : i32
    %11 = arith.cmpi ne, %10, %c0_i32_9 : i32
    scf.if %11 {
      %c0_10 = arith.constant 0 : index
      %c0_11 = arith.constant 0 : index
      %12 = vector.load %arg5[%c0_10, %c0_11] : memref<256x256xf32, #tpu.memory_space<vmem>>, vector<256x256xf32>
      %13 = arith.truncf %12 : vector<256x256xf32> to vector<256x256xbf16>
      %c0_12 = arith.constant 0 : index
      %c0_13 = arith.constant 0 : index
      %14 = vector.load %arg4[%c0_12, %c0_13] : memref<256x256xbf16, #tpu.memory_space<vmem>>, vector<256x256xbf16>
      tpu.vector_store %arg4[%c0_12, %c0_13], %13 {strides = array<i32>} : memref<256x256xbf16, #tpu.memory_space<vmem>>, vector<256x256xbf16>,
    } else {
    }
    return
  }
  func.func @transform_0(%arg0: i32, %arg1: i32) -> (i32, i32) {
    %c0_i32 = arith.constant 0 : i32
    return %arg0, %arg1 : i32, i32
  }
  func.func @transform_1(%arg0: i32, %arg1: i32) -> (i32, i32) {
    %c0_i32 = arith.constant 0 : i32
    %c0_i32_0 = arith.constant 0 : i32
    return %arg1, %c0_i32 : i32, i32
  }
  func.func @transform_2(%arg0: i32, %arg1: i32) -> (i32, i32) {
    %c0_i32 = arith.constant 0 : i32
    %c0_i32_0 = arith.constant 0 : i32
    return %arg0, %c0_i32 : i32, i32
  }
}

module attributes {stable_mosaic.version = 11 : i64} {
  func.func @_sage_agg_kernel(%arg0: i32, %arg1: i32, %arg2: memref<256x256xbf16, #tpu.memory_space<vmem>>, %arg3: memref<256x128xbf16, #tpu.memory_space<vmem>>, %arg4: memref<256x128xbf16, #tpu.memory_space<vmem>>, %arg5: memref<1x128xf32, #tpu.memory_space<vmem>>, %arg6: memref<128x256xbf16, #tpu.memory_space<vmem>>, %arg7: memref<256x256xbf16, #tpu.memory_space<vmem>>, %arg8: memref<256x128xf32, #tpu.memory_space<vmem>>) attributes {dimension_semantics = [#tpu.dimension_semantics<parallel>, #tpu.dimension_semantics<arbitrary>], iteration_bounds = array<i64: 2, 2>, scalar_prefetch = 0 : i64, scratch_operands = 1 : i64, tpu.core_type = #tpu.core_type<tc>, window_params = [{transform_indices = @transform_0, window_bounds = array<i64: 256, 256>}, {transform_indices = @transform_1, window_bounds = array<i64: 256, 128>}, {transform_indices = @transform_2, window_bounds = array<i64: 256, 128>}, {pipeline_mode = #tpu.pipeline_mode<synchronous>, transform_indices = @transform_3, window_bounds = array<i64: 1, 128>}, {pipeline_mode = #tpu.pipeline_mode<synchronous>, transform_indices = @transform_4, window_bounds = array<i64: 128, 256>}, {transform_indices = @transform_5, window_bounds = array<i64: 256, 256>}]} {
    %c0_i32 = arith.constant 0 : i32
    %0 = arith.cmpi eq, %arg1, %c0_i32 : i32
    %1 = arith.extui %0 : i1 to i32
    %c0_i32_0 = arith.constant 0 : i32
    %2 = arith.cmpi ne, %1, %c0_i32_0 : i32
    scf.if %2 {
      %cst_9 = arith.constant 0.000000e+00 : f32
      %12 = vector.broadcast %cst_9 : f32 to vector<256x128xf32>
      %c0_10 = arith.constant 0 : index
      %c0_11 = arith.constant 0 : index
      %13 = vector.load %arg8[%c0_10, %c0_11] : memref<256x128xf32, #tpu.memory_space<vmem>>, vector<256x128xf32>
      tpu.vector_store %arg8[%c0_10, %c0_11], %12 {strides = array<i32>} : memref<256x128xf32, #tpu.memory_space<vmem>>, vector<256x128xf32>,
    } else {
    }
    %c0 = arith.constant 0 : index
    %c0_1 = arith.constant 0 : index
    %3 = vector.load %arg8[%c0, %c0_1] : memref<256x128xf32, #tpu.memory_space<vmem>>, vector<256x128xf32>
    %c0_2 = arith.constant 0 : index
    %c0_3 = arith.constant 0 : index
    %4 = vector.load %arg2[%c0_2, %c0_3] : memref<256x256xbf16, #tpu.memory_space<vmem>>, vector<256x256xbf16>
    %c0_4 = arith.constant 0 : index
    %c0_5 = arith.constant 0 : index
    %5 = vector.load %arg3[%c0_4, %c0_5] : memref<256x128xbf16, #tpu.memory_space<vmem>>, vector<256x128xbf16>
    %cst = arith.constant dense<0.000000e+00> : vector<256x128xf32>
    %6 = tpu.matmul %4, %5, %cst {dimension_numbers = #tpu.dot_dimension_numbers<[1], [0], [0], [1], [0, 0, 1, 1], [], []>} : vector<256x256xbf16>, vector<256x128xbf16>, vector<256x128xf32> -> vector<256x128xf32>
    %7 = arith.addf %3, %6 : vector<256x128xf32>
    %c0_6 = arith.constant 0 : index
    %c0_7 = arith.constant 0 : index
    %8 = vector.load %arg8[%c0_6, %c0_7] : memref<256x128xf32, #tpu.memory_space<vmem>>, vector<256x128xf32>
    tpu.vector_store %arg8[%c0_6, %c0_7], %7 {strides = array<i32>} : memref<256x128xf32, #tpu.memory_space<vmem>>, vector<256x128xf32>,
    %c1_i32 = arith.constant 1 : i32
    %9 = arith.cmpi eq, %arg1, %c1_i32 : i32
    %10 = arith.extui %9 : i1 to i32
    %c0_i32_8 = arith.constant 0 : i32
    %11 = arith.cmpi ne, %10, %c0_i32_8 : i32
    scf.if %11 {
      %c0_9 = arith.constant 0 : index
      %c0_10 = arith.constant 0 : index
      %12 = vector.load %arg8[%c0_9, %c0_10] : memref<256x128xf32, #tpu.memory_space<vmem>>, vector<256x128xf32>
      %c0_11 = arith.constant 0 : index
      %c0_12 = arith.constant 0 : index
      %13 = vector.load %arg4[%c0_11, %c0_12] : memref<256x128xbf16, #tpu.memory_space<vmem>>, vector<256x128xbf16>
      %14 = arith.extf %13 : vector<256x128xbf16> to vector<256x128xf32>
      %15 = arith.addf %12, %14 : vector<256x128xf32>
      %c0_13 = arith.constant 0 : index
      %c0_14 = arith.constant 0 : index
      %16 = vector.load %arg5[%c0_13, %c0_14] : memref<1x128xf32, #tpu.memory_space<vmem>>, vector<1x128xf32>
      %17 = vector.broadcast %16 : vector<1x128xf32> to vector<256x128xf32>
      %18 = arith.addf %15, %17 : vector<256x128xf32>
      %cst_15 = arith.constant 0.000000e+00 : f32
      %19 = vector.broadcast %cst_15 : f32 to vector<256x128xf32>
      %20 = arith.maximumf %18, %19 : vector<256x128xf32>
      %21 = arith.truncf %20 : vector<256x128xf32> to vector<256x128xbf16>
      %c0_16 = arith.constant 0 : index
      %c0_17 = arith.constant 0 : index
      %22 = vector.load %arg6[%c0_16, %c0_17] : memref<128x256xbf16, #tpu.memory_space<vmem>>, vector<128x256xbf16>
      %cst_18 = arith.constant dense<0.000000e+00> : vector<256x256xf32>
      %23 = tpu.matmul %21, %22, %cst_18 {dimension_numbers = #tpu.dot_dimension_numbers<[1], [0], [0], [1], [0, 0, 1, 1], [], []>} : vector<256x128xbf16>, vector<128x256xbf16>, vector<256x256xf32> -> vector<256x256xf32>
      %24 = arith.truncf %23 : vector<256x256xf32> to vector<256x256xbf16>
      %c0_19 = arith.constant 0 : index
      %c0_20 = arith.constant 0 : index
      %25 = vector.load %arg7[%c0_19, %c0_20] : memref<256x256xbf16, #tpu.memory_space<vmem>>, vector<256x256xbf16>
      tpu.vector_store %arg7[%c0_19, %c0_20], %24 {strides = array<i32>} : memref<256x256xbf16, #tpu.memory_space<vmem>>, vector<256x256xbf16>,
    } else {
    }
    return
  }
  func.func @transform_0(%arg0: i32, %arg1: i32) -> (i32, i32) {
    %c0_i32 = arith.constant 0 : i32
    return %arg0, %arg1 : i32, i32
  }
  func.func @transform_1(%arg0: i32, %arg1: i32) -> (i32, i32) {
    %c0_i32 = arith.constant 0 : i32
    %c0_i32_0 = arith.constant 0 : i32
    return %arg1, %c0_i32 : i32, i32
  }
  func.func @transform_2(%arg0: i32, %arg1: i32) -> (i32, i32) {
    %c1_i32 = arith.constant 1 : i32
    %c0_i32 = arith.constant 0 : i32
    return %arg0, %c1_i32 : i32, i32
  }
  func.func @transform_3(%arg0: i32, %arg1: i32) -> (i32, i32) {
    %c0_i32 = arith.constant 0 : i32
    %c0_i32_0 = arith.constant 0 : i32
    %c0_i32_1 = arith.constant 0 : i32
    return %c0_i32, %c0_i32_0 : i32, i32
  }
  func.func @transform_4(%arg0: i32, %arg1: i32) -> (i32, i32) {
    %c0_i32 = arith.constant 0 : i32
    %c0_i32_0 = arith.constant 0 : i32
    %c0_i32_1 = arith.constant 0 : i32
    return %c0_i32, %c0_i32_0 : i32, i32
  }
  func.func @transform_5(%arg0: i32, %arg1: i32) -> (i32, i32) {
    %c0_i32 = arith.constant 0 : i32
    %c0_i32_0 = arith.constant 0 : i32
    return %arg0, %c0_i32 : i32, i32
  }
}

module attributes {stable_mosaic.version = 11 : i64} {
  func.func @_sage_agg_kernel(%arg0: i32, %arg1: i32, %arg2: memref<256x256xbf16, #tpu.memory_space<vmem>>, %arg3: memref<256x128xbf16, #tpu.memory_space<vmem>>, %arg4: memref<256x128xbf16, #tpu.memory_space<vmem>>, %arg5: memref<1x128xf32, #tpu.memory_space<vmem>>, %arg6: memref<256x128xf32, #tpu.memory_space<vmem>>, %arg7: memref<256x128xf32, #tpu.memory_space<vmem>>) attributes {dimension_semantics = [#tpu.dimension_semantics<parallel>, #tpu.dimension_semantics<arbitrary>], iteration_bounds = array<i64: 2, 2>, scalar_prefetch = 0 : i64, scratch_operands = 1 : i64, tpu.core_type = #tpu.core_type<tc>, window_params = [{transform_indices = @transform_0, window_bounds = array<i64: 256, 256>}, {transform_indices = @transform_1, window_bounds = array<i64: 256, 128>}, {transform_indices = @transform_2, window_bounds = array<i64: 256, 128>}, {pipeline_mode = #tpu.pipeline_mode<synchronous>, transform_indices = @transform_3, window_bounds = array<i64: 1, 128>}, {transform_indices = @transform_4, window_bounds = array<i64: 256, 128>}]} {
    %c0_i32 = arith.constant 0 : i32
    %0 = arith.cmpi eq, %arg1, %c0_i32 : i32
    %1 = arith.extui %0 : i1 to i32
    %c0_i32_0 = arith.constant 0 : i32
    %2 = arith.cmpi ne, %1, %c0_i32_0 : i32
    scf.if %2 {
      %cst_9 = arith.constant 0.000000e+00 : f32
      %12 = vector.broadcast %cst_9 : f32 to vector<256x128xf32>
      %c0_10 = arith.constant 0 : index
      %c0_11 = arith.constant 0 : index
      %13 = vector.load %arg7[%c0_10, %c0_11] : memref<256x128xf32, #tpu.memory_space<vmem>>, vector<256x128xf32>
      tpu.vector_store %arg7[%c0_10, %c0_11], %12 {strides = array<i32>} : memref<256x128xf32, #tpu.memory_space<vmem>>, vector<256x128xf32>,
    } else {
    }
    %c0 = arith.constant 0 : index
    %c0_1 = arith.constant 0 : index
    %3 = vector.load %arg7[%c0, %c0_1] : memref<256x128xf32, #tpu.memory_space<vmem>>, vector<256x128xf32>
    %c0_2 = arith.constant 0 : index
    %c0_3 = arith.constant 0 : index
    %4 = vector.load %arg2[%c0_2, %c0_3] : memref<256x256xbf16, #tpu.memory_space<vmem>>, vector<256x256xbf16>
    %c0_4 = arith.constant 0 : index
    %c0_5 = arith.constant 0 : index
    %5 = vector.load %arg3[%c0_4, %c0_5] : memref<256x128xbf16, #tpu.memory_space<vmem>>, vector<256x128xbf16>
    %cst = arith.constant dense<0.000000e+00> : vector<256x128xf32>
    %6 = tpu.matmul %4, %5, %cst {dimension_numbers = #tpu.dot_dimension_numbers<[1], [0], [0], [1], [0, 0, 1, 1], [], []>} : vector<256x256xbf16>, vector<256x128xbf16>, vector<256x128xf32> -> vector<256x128xf32>
    %7 = arith.addf %3, %6 : vector<256x128xf32>
    %c0_6 = arith.constant 0 : index
    %c0_7 = arith.constant 0 : index
    %8 = vector.load %arg7[%c0_6, %c0_7] : memref<256x128xf32, #tpu.memory_space<vmem>>, vector<256x128xf32>
    tpu.vector_store %arg7[%c0_6, %c0_7], %7 {strides = array<i32>} : memref<256x128xf32, #tpu.memory_space<vmem>>, vector<256x128xf32>,
    %c1_i32 = arith.constant 1 : i32
    %9 = arith.cmpi eq, %arg1, %c1_i32 : i32
    %10 = arith.extui %9 : i1 to i32
    %c0_i32_8 = arith.constant 0 : i32
    %11 = arith.cmpi ne, %10, %c0_i32_8 : i32
    scf.if %11 {
      %c0_9 = arith.constant 0 : index
      %c0_10 = arith.constant 0 : index
      %12 = vector.load %arg7[%c0_9, %c0_10] : memref<256x128xf32, #tpu.memory_space<vmem>>, vector<256x128xf32>
      %c0_11 = arith.constant 0 : index
      %c0_12 = arith.constant 0 : index
      %13 = vector.load %arg4[%c0_11, %c0_12] : memref<256x128xbf16, #tpu.memory_space<vmem>>, vector<256x128xbf16>
      %14 = arith.extf %13 : vector<256x128xbf16> to vector<256x128xf32>
      %15 = arith.addf %12, %14 : vector<256x128xf32>
      %c0_13 = arith.constant 0 : index
      %c0_14 = arith.constant 0 : index
      %16 = vector.load %arg5[%c0_13, %c0_14] : memref<1x128xf32, #tpu.memory_space<vmem>>, vector<1x128xf32>
      %17 = vector.broadcast %16 : vector<1x128xf32> to vector<256x128xf32>
      %18 = arith.addf %15, %17 : vector<256x128xf32>
      %c0_15 = arith.constant 0 : index
      %c0_16 = arith.constant 0 : index
      %19 = vector.load %arg6[%c0_15, %c0_16] : memref<256x128xf32, #tpu.memory_space<vmem>>, vector<256x128xf32>
      tpu.vector_store %arg6[%c0_15, %c0_16], %18 {strides = array<i32>} : memref<256x128xf32, #tpu.memory_space<vmem>>, vector<256x128xf32>,
    } else {
    }
    return
  }
  func.func @transform_0(%arg0: i32, %arg1: i32) -> (i32, i32) {
    %c0_i32 = arith.constant 0 : i32
    return %arg0, %arg1 : i32, i32
  }
  func.func @transform_1(%arg0: i32, %arg1: i32) -> (i32, i32) {
    %c0_i32 = arith.constant 0 : i32
    %c0_i32_0 = arith.constant 0 : i32
    return %arg1, %c0_i32 : i32, i32
  }
  func.func @transform_2(%arg0: i32, %arg1: i32) -> (i32, i32) {
    %c1_i32 = arith.constant 1 : i32
    %c0_i32 = arith.constant 0 : i32
    return %arg0, %c1_i32 : i32, i32
  }
  func.func @transform_3(%arg0: i32, %arg1: i32) -> (i32, i32) {
    %c0_i32 = arith.constant 0 : i32
    %c0_i32_0 = arith.constant 0 : i32
    %c0_i32_1 = arith.constant 0 : i32
    return %c0_i32, %c0_i32_0 : i32, i32
  }
  func.func @transform_4(%arg0: i32, %arg1: i32) -> (i32, i32) {
    %c0_i32 = arith.constant 0 : i32
    %c0_i32_0 = arith.constant 0 : i32
    return %arg0, %c0_i32 : i32, i32
  }
}

</mosaic_0001>

<llo_original>
// kernel: graphsage_forward.3
$region0: #{graphsage_forward.3}
  #allocation0 [shape = 'u32[]', space=smem, size = 0x4, offset = 0x4, fixed_abs, tag = 'smem constant byte address 0x4 - core index']
  #allocation1 [shape = 'u32[144,128]{1,0:T(1,128)}', space=vmem, size = 0x12000, scoped, tag = 'internal scratch']
  #allocation2 [shape = 'f32[256,256]{1,0:T(8,128)}', space=vmem, size = 0x40000, scoped, tag = 'scratch operand']
  %s0 = inlined_call_operand.vmem [shape: bf16[512,384], index: 0, kind: input, shape index: {}]
  %s1 = inlined_call_operand.vmem [shape: bf16[384,256], index: 1, kind: input, shape index: {}]
  %s2 = inlined_call_operand.vmem [shape: bf16[512,256], index: 2, kind: output, shape index: {}]
  %s3 = sld [smem:[#allocation0]]
  $region49: #{graphsage_forward.3} parent=0
    _
  %s5 = ssub.s32 1, %s3
  %s6 = scalar_select 0, %s5, %s3
  loop: start=0, step=1, limit=4
  $region2: #{graphsage_forward.3} parent=0 // loop_pre_header
    _
  $region3: #{graphsage_forward.3} parent=0 // loop_header
    %s8 = sphi 0, %s12
    %p9 = scmp.ge.s32.totalorder %s8, 4
    %s15 = sphi 0, %s27
    %s16 = sphi 0, %s23
    %s17 = sphi 0, %s15
    %s18 = sphi 0, %s16
    %s19 = sphi 0, %s17
    %s20 = sphi 0, %s18
    %s32 = sphi 0, %s34
    %s35 = sphi 0, %s32
    %s36 = sphi 0, %s35
    %s52 = sphi 0, %s36
    %s58 = sphi 0, %s60
    %s61 = sphi 0, %s58
    %s62 = sphi 0, %s61
    %s78 = sphi 0, %s62
    %s84 = sphi 0, %s86
    %s87 = sphi 0, %s84
    %s88 = sphi 0, %s87
    %s104 = sphi 0, %s88
  $region4: #{graphsage_forward.3} parent=0 // loop_header_branch
    %11 = sbr.rel (%p9) target = $region8
  $region5: #{graphsage_forward.3} parent=0 // loop_body
    %s13 = ssub.s32 %s8, 1
    %s14 = ssub.s32 %s8, 2
    %s21 = sadd.s32 1, %s16
    %p22 = scmp.ge.s32.totalorder %s21, 1
    %s23 = scalar_select %p22, 0, %s21
    %s24 = sadd.s32 1, %s15
    %s25 = scalar_select %p22, %s24, %s15
    %p26 = scmp.ge.s32.totalorder %s25, 2
    %s27 = scalar_select %p26, 0, %s25
    %s28 = ssub.s32 %s15, %s27
    %s29 = ssub.s32 %s16, %s23
    %s30 = sor.u32 %s28, %s29
    %p31 = scmp.eq.s32.totalorder %s30, 0
    %s33 = sadd.s32 %s32, 1
    %s34 = scalar_select %p31, %s32, %s33
    %p37 = pneg %p31
    %p38 = scmp.eq.s32.totalorder %s8, 1
    %p39 = por %p37, %p38
    %p40 = scmp.ne.s32.totalorder %s32, %s35
    %p41 = scmp.eq.s32.totalorder %s8, 0
    %p42 = por %p40, %p41
    %p43 = scmp.ne.s32.totalorder %s32, %s35
    %p44 = scmp.eq.s32.totalorder %s13, 1
    %p45 = por %p43, %p44
    %p46 = scmp.ne.s32.totalorder %s35, %s36
    %p47 = scmp.eq.s32.totalorder %s13, 0
    %p48 = por %p46, %p47
    %p49 = scmp.ne.s32.totalorder %s35, %s36
    %p50 = scmp.eq.s32.totalorder %s14, 1
    %p51 = por %p49, %p50
    %p53 = scmp.ne.s32.totalorder %s36, %s52
    %p54 = scmp.eq.s32.totalorder %s14, 0
    %p55 = por %p53, %p54
    %s56 = ssub.s32 %s16, %s23
    %p57 = scmp.eq.s32.totalorder %s56, 0
    %s59 = sadd.s32 %s58, 1
    %s60 = scalar_select %p57, %s58, %s59
    %p63 = pneg %p57
    %p64 = scmp.eq.s32.totalorder %s8, 1
    %p65 = por %p63, %p64
    %p66 = scmp.ne.s32.totalorder %s58, %s61
    %p67 = scmp.eq.s32.totalorder %s8, 0
    %p68 = por %p66, %p67
    %p69 = scmp.ne.s32.totalorder %s58, %s61
    %p70 = scmp.eq.s32.totalorder %s13, 1
    %p71 = por %p69, %p70
    %p72 = scmp.ne.s32.totalorder %s61, %s62
    %p73 = scmp.eq.s32.totalorder %s13, 0
    %p74 = por %p72, %p73
    %p75 = scmp.ne.s32.totalorder %s61, %s62
    %p76 = scmp.eq.s32.totalorder %s14, 1
    %p77 = por %p75, %p76
    %p79 = scmp.ne.s32.totalorder %s62, %s78
    %p80 = scmp.eq.s32.totalorder %s14, 0
    %p81 = por %p79, %p80
    %s82 = ssub.s32 %s15, %s27
    %p83 = scmp.eq.s32.totalorder %s82, 0
    %s85 = sadd.s32 %s84, 1
    %s86 = scalar_select %p83, %s84, %s85
    %p89 = pneg %p83
    %p90 = scmp.eq.s32.totalorder %s8, 1
    %p91 = por %p89, %p90
    %p92 = scmp.ne.s32.totalorder %s84, %s87
    %p93 = scmp.eq.s32.totalorder %s8, 0
    %p94 = por %p92, %p93
    %p95 = scmp.ne.s32.totalorder %s84, %s87
    %p96 = scmp.eq.s32.totalorder %s13, 1
    %p97 = por %p95, %p96
    %p98 = scmp.ne.s32.totalorder %s87, %s88
    %p99 = scmp.eq.s32.totalorder %s13, 0
    %p100 = por %p98, %p99
    %p101 = scmp.ne.s32.totalorder %s87, %s88
    %p102 = scmp.eq.s32.totalorder %s14, 1
    %p103 = por %p101, %p102
    %p105 = scmp.ne.s32.totalorder %s88, %s104
    %p106 = scmp.eq.s32.totalorder %s14, 0
    %p107 = por %p105, %p106
    %p108 = scmp.le.s32.totalorder 1, %s8
    %p109 = scmp.lt.s32.totalorder %s8, 3
    %p110 = pnand %p108, %p109
    %p111 = pneg %p110
    // Predicated region
    $region9: #{graphsage_forward.3} parent=5 // pred_check
      _
    $region10: #{graphsage_forward.3} parent=5 // pred_check_branch
      %113 = sbr.rel (%p110) target = $region12
    $region11: #{graphsage_forward.3} parent=5 // pred_region
      %s114 = ssub.s32 %s8, 1
      // Predicated region
      $region13: #{graphsage_forward.3} parent=11 // pred_check
        %p115 = pneg %p74
      $region14: #{graphsage_forward.3} parent=11 // pred_check_branch
        %117 = sbr.rel (%p115) target = $region16
      $region15: #{graphsage_forward.3} parent=11 // pred_region
        %s118 = smul.u32 48, %s18
        %p119 = scmp.lt.s32.totalorder %s118, 47
        %s120 = scalar_select %p119, %s118, 47
        %s121 = smul.addr %s120, 2
        %s122 = smul.addr %s121, 4
        %s123 = scalar_lea.vmem %s1, %s122
        %s124 = smul.u32 48, %s18
      $region16: #{graphsage_forward.3} parent=11 // pred_fallthru
        _
    $region12: #{graphsage_forward.3} parent=5 // pred_fallthru
      _
    %p125 = scmp.lt.s32.totalorder %s8, 2
    // Predicated region
    $region17: #{graphsage_forward.3} parent=5 // pred_check
      %p126 = pneg %p125
    $region18: #{graphsage_forward.3} parent=5 // pred_check_branch
      %128 = sbr.rel (%p126) target = $region20
    $region19: #{graphsage_forward.3} parent=5 // pred_region
      // Predicated region
      $region21: #{graphsage_forward.3} parent=19 // pred_check
        %p129 = pneg %p42
      $region22: #{graphsage_forward.3} parent=19 // pred_check_branch
        %131 = sbr.rel (%p129) target = $region24
      $region23: #{graphsage_forward.3} parent=19 // pred_region
        %s132 = smul.u32 32, %s15
        %s133 = smul.u32 3, %s16
        %p134 = scmp.lt.s32.totalorder %s132, 63
        %s135 = scalar_select %p134, %s132, 63
        %p136 = scmp.lt.s32.totalorder %s133, 2
        %s137 = scalar_select %p136, %s133, 2
        %s138 = smul.addr %s135, 3
        %s139 = sadd.s32 %s137, %s138
        %s140 = smul.addr %s139, 4
        %s141 = scalar_lea.vmem %s0, %s140
        %s142 = smul.u32 32, %s15
        %s143 = smul.u32 3, %s16
      $region24: #{graphsage_forward.3} parent=19 // pred_fallthru
        _
    $region20: #{graphsage_forward.3} parent=5 // pred_fallthru
      _
    %p144 = scmp.le.s32.totalorder 1, %s8
    %p145 = scmp.lt.s32.totalorder %s8, 3
    %p146 = pnand %p144, %p145
    %p147 = pneg %p146
    // Predicated region
    $region25: #{graphsage_forward.3} parent=5 // pred_check
      _
    $region26: #{graphsage_forward.3} parent=5 // pred_check_branch
      %149 = sbr.rel (%p146) target = $region28
    $region27: #{graphsage_forward.3} parent=5 // pred_region
      %s150 = ssub.s32 %s8, 1
      %s151 = smul.u32 32, %s17
      %s152 = smul.u32 3, %s18
      %p153 = scmp.lt.s32.totalorder %s151, 63
      %s154 = scalar_select %p153, %s151, 63
      %p155 = scmp.lt.s32.totalorder %s152, 2
      %s156 = scalar_select %p155, %s152, 2
      %s157 = smul.addr %s154, 3
      %s158 = sadd.s32 %s156, %s157
      %s159 = smul.addr %s158, 4
      %s160 = scalar_lea.vmem %s0, %s159
      %p161 = pneg %p48
      %p162 = pneg %p45
      %s163 = smul.u32 48, %s18
      %p164 = scmp.lt.s32.totalorder %s163, 47
      %s165 = scalar_select %p164, %s163, 47
      %s166 = smul.addr %s165, 2
      %s167 = smul.addr %s166, 4
      %s168 = scalar_lea.vmem %s1, %s167
      %p169 = pneg %p74
      %p170 = pneg %p71
      %p171 = pneg %p100
      %p172 = pneg %p97
      %s173 = smul.u32 32, %s17
      %p174 = scmp.lt.s32.totalorder %s173, 63
      %s175 = scalar_select %p174, %s173, 63
      %s176 = smul.addr %s175, 2
      %s177 = smul.addr %s176, 4
      %s178 = scalar_lea.vmem %s2, %s177
      %s179 = smul.u32 32, %s17
      %s180 = smul.u32 3, %s18
      %p181 = scmp.lt.s32.totalorder %s179, 63
      %s182 = scalar_select %p181, %s179, 63
      %p183 = scmp.lt.s32.totalorder %s180, 2
      %s184 = scalar_select %p183, %s180, 2
      %s185 = smul.addr %s182, 3
      %s186 = sadd.s32 %s184, %s185
      %s187 = smul.addr %s186, 4
      %s188 = scalar_lea.vmem %s0, %s187
      %s189 = smul.u32 32, %s17
      %s190 = smul.u32 3, %s18
      %s191 = smul.u32 48, %s18
      %p192 = scmp.lt.s32.totalorder %s191, 47
      %s193 = scalar_select %p192, %s191, 47
      %s194 = smul.addr %s193, 2
      %s195 = smul.addr %s194, 4
      %s196 = scalar_lea.vmem %s1, %s195
      %s197 = smul.u32 48, %s18
      %s198 = smul.u32 32, %s17
      %p199 = scmp.lt.s32.totalorder %s198, 63
      %s200 = scalar_select %p199, %s198, 63
      %s201 = smul.addr %s200, 2
      %s202 = smul.addr %s201, 4
      %s203 = scalar_lea.vmem %s2, %s202
      %s204 = smul.u32 32, %s17
      %p206 = scmp.eq.s32.totalorder %s18, 0
      // Predicated region
      $region29: #{graphsage_forward.3} parent=27 // pred_check
        %p207 = pneg %p206
      $region30: #{graphsage_forward.3} parent=27 // pred_check_branch
        %209 = sbr.rel (%p207) target = $region32
      $region31: #{graphsage_forward.3} parent=27 // pred_region
        %210 = vst [vmem:[#allocation2] sm:$0xff] 0.0
        %211 = vst [vmem:[#allocation2 + $0x8] sm:$0xff] 0.0
        %212 = vst [vmem:[#allocation2 + $0x10] sm:$0xff] 0.0
        %213 = vst [vmem:[#allocation2 + $0x18] sm:$0xff] 0.0
        %214 = vst [vmem:[#allocation2 + $0x20] sm:$0xff] 0.0
        %215 = vst [vmem:[#allocation2 + $0x28] sm:$0xff] 0.0
        %216 = vst [vmem:[#allocation2 + $0x30] sm:$0xff] 0.0
        %217 = vst [vmem:[#allocation2 + $0x38] sm:$0xff] 0.0
        %218 = vst [vmem:[#allocation2 + $0x40] sm:$0xff] 0.0
        %219 = vst [vmem:[#allocation2 + $0x48] sm:$0xff] 0.0
        %220 = vst [vmem:[#allocation2 + $0x50] sm:$0xff] 0.0
        %221 = vst [vmem:[#allocation2 + $0x58] sm:$0xff] 0.0
        %222 = vst [vmem:[#allocation2 + $0x60] sm:$0xff] 0.0
        %223 = vst [vmem:[#allocation2 + $0x68] sm:$0xff] 0.0
        %224 = vst [vmem:[#allocation2 + $0x70] sm:$0xff] 0.0
        %225 = vst [vmem:[#allocation2 + $0x78] sm:$0xff] 0.0
        %226 = vst [vmem:[#allocation2 + $0x80] sm:$0xff] 0.0
        %227 = vst [vmem:[#allocation2 + $0x88] sm:$0xff] 0.0
        %228 = vst [vmem:[#allocation2 + $0x90] sm:$0xff] 0.0
        %229 = vst [vmem:[#allocation2 + $0x98] sm:$0xff] 0.0
        %230 = vst [vmem:[#allocation2 + $0xa0] sm:$0xff] 0.0
        %231 = vst [vmem:[#allocation2 + $0xa8] sm:$0xff] 0.0
        %232 = vst [vmem:[#allocation2 + $0xb0] sm:$0xff] 0.0
        %233 = vst [vmem:[#allocation2 + $0xb8] sm:$0xff] 0.0
        %234 = vst [vmem:[#allocation2 + $0xc0] sm:$0xff] 0.0
        %235 = vst [vmem:[#allocation2 + $0xc8] sm:$0xff] 0.0
        %236 = vst [vmem:[#allocation2 + $0xd0] sm:$0xff] 0.0
        %237 = vst [vmem:[#allocation2 + $0xd8] sm:$0xff] 0.0
        %238 = vst [vmem:[#allocation2 + $0xe0] sm:$0xff] 0.0
        %239 = vst [vmem:[#allocation2 + $0xe8] sm:$0xff] 0.0
        %240 = vst [vmem:[#allocation2 + $0xf0] sm:$0xff] 0.0
        %241 = vst [vmem:[#allocation2 + $0xf8] sm:$0xff] 0.0
        %242 = vst [vmem:[#allocation2 + $0x100] sm:$0xff] 0.0
        %243 = vst [vmem:[#allocation2 + $0x108] sm:$0xff] 0.0
        %244 = vst [vmem:[#allocation2 + $0x110] sm:$0xff] 0.0
        %245 = vst [vmem:[#allocation2 + $0x118] sm:$0xff] 0.0
        %246 = vst [vmem:[#allocation2 + $0x120] sm:$0xff] 0.0
        %247 = vst [vmem:[#allocation2 + $0x128] sm:$0xff] 0.0
        %248 = vst [vmem:[#allocation2 + $0x130] sm:$0xff] 0.0
        %249 = vst [vmem:[#allocation2 + $0x138] sm:$0xff] 0.0
        %250 = vst [vmem:[#allocation2 + $0x140] sm:$0xff] 0.0
        %251 = vst [vmem:[#allocation2 + $0x148] sm:$0xff] 0.0
        %252 = vst [vmem:[#allocation2 + $0x150] sm:$0xff] 0.0
        %253 = vst [vmem:[#allocation2 + $0x158] sm:$0xff] 0.0
        %254 = vst [vmem:[#allocation2 + $0x160] sm:$0xff] 0.0
        %255 = vst [vmem:[#allocation2 + $0x168] sm:$0xff] 0.0
        %256 = vst [vmem:[#allocation2 + $0x170] sm:$0xff] 0.0
        %257 = vst [vmem:[#allocation2 + $0x178] sm:$0xff] 0.0
        %258 = vst [vmem:[#allocation2 + $0x180] sm:$0xff] 0.0
        %259 = vst [vmem:[#allocation2 + $0x188] sm:$0xff] 0.0
        %260 = vst [vmem:[#allocation2 + $0x190] sm:$0xff] 0.0
        %261 = vst [vmem:[#allocation2 + $0x198] sm:$0xff] 0.0
        %262 = vst [vmem:[#allocation2 + $0x1a0] sm:$0xff] 0.0
        %263 = vst [vmem:[#allocation2 + $0x1a8] sm:$0xff] 0.0
        %264 = vst [vmem:[#allocation2 + $0x1b0] sm:$0xff] 0.0
        %265 = vst [vmem:[#allocation2 + $0x1b8] sm:$0xff] 0.0
        %266 = vst [vmem:[#allocation2 + $0x1c0] sm:$0xff] 0.0
        %267 = vst [vmem:[#allocation2 + $0x1c8] sm:$0xff] 0.0
        %268 = vst [vmem:[#allocation2 + $0x1d0] sm:$0xff] 0.0
        %269 = vst [vmem:[#allocation2 + $0x1d8] sm:$0xff] 0.0
        %270 = vst [vmem:[#allocation2 + $0x1e0] sm:$0xff] 0.0
        %271 = vst [vmem:[#allocation2 + $0x1e8] sm:$0xff] 0.0
        %272 = vst [vmem:[#allocation2 + $0x1f0] sm:$0xff] 0.0
        %273 = vst [vmem:[#allocation2 + $0x1f8] sm:$0xff] 0.0
      $region32: #{graphsage_forward.3} parent=27 // pred_fallthru
        _
      %v274 = vld [vmem:[#allocation2] sm:$0xff]
      %v275 = vld [vmem:[#allocation2 + $0x8] sm:$0xff]
      %v276 = vld [vmem:[#allocation2 + $0x10] sm:$0xff]
      %v277 = vld [vmem:[#allocation2 + $0x18] sm:$0xff]
      %v278 = vld [vmem:[#allocation2 + $0x20] sm:$0xff]
      %v279 = vld [vmem:[#allocation2 + $0x28] sm:$0xff]
      %v280 = vld [vmem:[#allocation2 + $0x30] sm:$0xff]
      %v281 = vld [vmem:[#allocation2 + $0x38] sm:$0xff]
      %v282 = vld [vmem:[#allocation2 + $0x40] sm:$0xff]
      %v283 = vld [vmem:[#allocation2 + $0x48] sm:$0xff]
      %v284 = vld [vmem:[#allocation2 + $0x50] sm:$0xff]
      %v285 = vld [vmem:[#allocation2 + $0x58] sm:$0xff]
      %v286 = vld [vmem:[#allocation2 + $0x60] sm:$0xff]
      %v287 = vld [vmem:[#allocation2 + $0x68] sm:$0xff]
      %v288 = vld [vmem:[#allocation2 + $0x70] sm:$0xff]
      %v289 = vld [vmem:[#allocation2 + $0x78] sm:$0xff]
      %v290 = vld [vmem:[#allocation2 + $0x80] sm:$0xff]
      %v291 = vld [vmem:[#allocation2 + $0x88] sm:$0xff]
      %v292 = vld [vmem:[#allocation2 + $0x90] sm:$0xff]
      %v293 = vld [vmem:[#allocation2 + $0x98] sm:$0xff]
      %v294 = vld [vmem:[#allocation2 + $0xa0] sm:$0xff]
      %v295 = vld [vmem:[#allocation2 + $0xa8] sm:$0xff]
      %v296 = vld [vmem:[#allocation2 + $0xb0] sm:$0xff]
      %v297 = vld [vmem:[#allocation2 + $0xb8] sm:$0xff]
      %v298 = vld [vmem:[#allocation2 + $0xc0] sm:$0xff]
      %v299 = vld [vmem:[#allocation2 + $0xc8] sm:$0xff]
      %v300 = vld [vmem:[#allocation2 + $0xd0] sm:$0xff]
      %v301 = vld [vmem:[#allocation2 + $0xd8] sm:$0xff]
      %v302 = vld [vmem:[#allocation2 + $0xe0] sm:$0xff]
      %v303 = vld [vmem:[#allocation2 + $0xe8] sm:$0xff]
      %v304 = vld [vmem:[#allocation2 + $0xf0] sm:$0xff]
      %v305 = vld [vmem:[#allocation2 + $0xf8] sm:$0xff]
      %v306 = vld [vmem:[#allocation2 + $0x100] sm:$0xff]
      %v307 = vld [vmem:[#allocation2 + $0x108] sm:$0xff]
      %v308 = vld [vmem:[#allocation2 + $0x110] sm:$0xff]
      %v309 = vld [vmem:[#allocation2 + $0x118] sm:$0xff]
      %v310 = vld [vmem:[#allocation2 + $0x120] sm:$0xff]
      %v311 = vld [vmem:[#allocation2 + $0x128] sm:$0xff]
      %v312 = vld [vmem:[#allocation2 + $0x130] sm:$0xff]
      %v313 = vld [vmem:[#allocation2 + $0x138] sm:$0xff]
      %v314 = vld [vmem:[#allocation2 + $0x140] sm:$0xff]
      %v315 = vld [vmem:[#allocation2 + $0x148] sm:$0xff]
      %v316 = vld [vmem:[#allocation2 + $0x150] sm:$0xff]
      %v317 = vld [vmem:[#allocation2 + $0x158] sm:$0xff]
      %v318 = vld [vmem:[#allocation2 + $0x160] sm:$0xff]
      %v319 = vld [vmem:[#allocation2 + $0x168] sm:$0xff]
      %v320 = vld [vmem:[#allocation2 + $0x170] sm:$0xff]
      %v321 = vld [vmem:[#allocation2 + $0x178] sm:$0xff]
      %v322 = vld [vmem:[#allocation2 + $0x180] sm:$0xff]
      %v323 = vld [vmem:[#allocation2 + $0x188] sm:$0xff]
      %v324 = vld [vmem:[#allocation2 + $0x190] sm:$0xff]
      %v325 = vld [vmem:[#allocation2 + $0x198] sm:$0xff]
      %v326 = vld [vmem:[#allocation2 + $0x1a0] sm:$0xff]
      %v327 = vld [vmem:[#allocation2 + $0x1a8] sm:$0xff]
      %v328 = vld [vmem:[#allocation2 + $0x1b0] sm:$0xff]
      %v329 = vld [vmem:[#allocation2 + $0x1b8] sm:$0xff]
      %v330 = vld [vmem:[#allocation2 + $0x1c0] sm:$0xff]
      %v331 = vld [vmem:[#allocation2 + $0x1c8] sm:$0xff]
      %v332 = vld [vmem:[#allocation2 + $0x1d0] sm:$0xff]
      %v333 = vld [vmem:[#allocation2 + $0x1d8] sm:$0xff]
      %v334 = vld [vmem:[#allocation2 + $0x1e0] sm:$0xff]
      %v335 = vld [vmem:[#allocation2 + $0x1e8] sm:$0xff]
      %v336 = vld [vmem:[#allocation2 + $0x1f0] sm:$0xff]
      %v337 = vld [vmem:[#allocation2 + $0x1f8] sm:$0xff]
      %v338 = vld [vmem:[%s188] sm:$0xff]
      %v339 = vld [vmem:[%s188 + $0x8] sm:$0xf]
      %v340 = vld [vmem:[%s188 + $0xc] sm:$0xff]
      %v341 = vld [vmem:[%s188 + $0x14] sm:$0xf]
      %v342 = vld [vmem:[%s188 + $0x18] sm:$0xff]
      %v343 = vld [vmem:[%s188 + $0x20] sm:$0xf]
      %v344 = vld [vmem:[%s188 + $0x24] sm:$0xff]
      %v345 = vld [vmem:[%s188 + $0x2c] sm:$0xf]
      %v346 = vld [vmem:[%s188 + $0x30] sm:$0xff]
      %v347 = vld [vmem:[%s188 + $0x38] sm:$0xf]
      %v348 = vld [vmem:[%s188 + $0x3c] sm:$0xff]
      %v349 = vld [vmem:[%s188 + $0x44] sm:$0xf]
      %v350 = vld [vmem:[%s188 + $0x48] sm:$0xff]
      %v351 = vld [vmem:[%s188 + $0x50] sm:$0xf]
      %v352 = vld [vmem:[%s188 + $0x54] sm:$0xff]
      %v353 = vld [vmem:[%s188 + $0x5c] sm:$0xf]
      %v354 = vld [vmem:[%s188 + $0x60] sm:$0xff]
      %v355 = vld [vmem:[%s188 + $0x68] sm:$0xf]
      %v356 = vld [vmem:[%s188 + $0x6c] sm:$0xff]
      %v357 = vld [vmem:[%s188 + $0x74] sm:$0xf]
      %v358 = vld [vmem:[%s188 + $0x78] sm:$0xff]
      %v359 = vld [vmem:[%s188 + $0x80] sm:$0xf]
      %v360 = vld [vmem:[%s188 + $0x84] sm:$0xff]
      %v361 = vld [vmem:[%s188 + $0x8c] sm:$0xf]
      %v362 = vld [vmem:[%s188 + $0x90] sm:$0xff]
      %v363 = vld [vmem:[%s188 + $0x98] sm:$0xf]
      %v364 = vld [vmem:[%s188 + $0x9c] sm:$0xff]
      %v365 = vld [vmem:[%s188 + $0xa4] sm:$0xf]
      %v366 = vld [vmem:[%s188 + $0xa8] sm:$0xff]
      %v367 = vld [vmem:[%s188 + $0xb0] sm:$0xf]
      %v368 = vld [vmem:[%s188 + $0xb4] sm:$0xff]
      %v369 = vld [vmem:[%s188 + $0xbc] sm:$0xf]
      %v370 = vld [vmem:[%s188 + $0xc0] sm:$0xff]
      %v371 = vld [vmem:[%s188 + $0xc8] sm:$0xf]
      %v372 = vld [vmem:[%s188 + $0xcc] sm:$0xff]
      %v373 = vld [vmem:[%s188 + $0xd4] sm:$0xf]
      %v374 = vld [vmem:[%s188 + $0xd8] sm:$0xff]
      %v375 = vld [vmem:[%s188 + $0xe0] sm:$0xf]
      %v376 = vld [vmem:[%s188 + $0xe4] sm:$0xff]
      %v377 = vld [vmem:[%s188 + $0xec] sm:$0xf]
      %v378 = vld [vmem:[%s188 + $0xf0] sm:$0xff]
      %v379 = vld [vmem:[%s188 + $0xf8] sm:$0xf]
      %v380 = vld [vmem:[%s188 + $0xfc] sm:$0xff]
      %v381 = vld [vmem:[%s188 + $0x104] sm:$0xf]
      %v382 = vld [vmem:[%s188 + $0x108] sm:$0xff]
      %v383 = vld [vmem:[%s188 + $0x110] sm:$0xf]
      %v384 = vld [vmem:[%s188 + $0x114] sm:$0xff]
      %v385 = vld [vmem:[%s188 + $0x11c] sm:$0xf]
      %v386 = vld [vmem:[%s188 + $0x120] sm:$0xff]
      %v387 = vld [vmem:[%s188 + $0x128] sm:$0xf]
      %v388 = vld [vmem:[%s188 + $0x12c] sm:$0xff]
      %v389 = vld [vmem:[%s188 + $0x134] sm:$0xf]
      %v390 = vld [vmem:[%s188 + $0x138] sm:$0xff]
      %v391 = vld [vmem:[%s188 + $0x140] sm:$0xf]
      %v392 = vld [vmem:[%s188 + $0x144] sm:$0xff]
      %v393 = vld [vmem:[%s188 + $0x14c] sm:$0xf]
      %v394 = vld [vmem:[%s188 + $0x150] sm:$0xff]
      %v395 = vld [vmem:[%s188 + $0x158] sm:$0xf]
      %v396 = vld [vmem:[%s188 + $0x15c] sm:$0xff]
      %v397 = vld [vmem:[%s188 + $0x164] sm:$0xf]
      %v398 = vld [vmem:[%s188 + $0x168] sm:$0xff]
      %v399 = vld [vmem:[%s188 + $0x170] sm:$0xf]
      %v400 = vld [vmem:[%s188 + $0x174] sm:$0xff]
      %v401 = vld [vmem:[%s188 + $0x17c] sm:$0xf]
      %v402 = vld [vmem:[%s196] sm:$0xff]
      %v403 = vld [vmem:[%s196 + $0x8] sm:$0xff]
      %v404 = vld [vmem:[%s196 + $0x10] sm:$0xff]
      %v405 = vld [vmem:[%s196 + $0x18] sm:$0xff]
      %v406 = vld [vmem:[%s196 + $0x20] sm:$0xff]
      %v407 = vld [vmem:[%s196 + $0x28] sm:$0xff]
      %v408 = vld [vmem:[%s196 + $0x30] sm:$0xff]
      %v409 = vld [vmem:[%s196 + $0x38] sm:$0xff]
      %v410 = vld [vmem:[%s196 + $0x40] sm:$0xff]
      %v411 = vld [vmem:[%s196 + $0x48] sm:$0xff]
      %v412 = vld [vmem:[%s196 + $0x50] sm:$0xff]
      %v413 = vld [vmem:[%s196 + $0x58] sm:$0xff]
      %v414 = vld [vmem:[%s196 + $0x60] sm:$0xff]
      %v415 = vld [vmem:[%s196 + $0x68] sm:$0xff]
      %v416 = vld [vmem:[%s196 + $0x70] sm:$0xff]
      %v417 = vld [vmem:[%s196 + $0x78] sm:$0xff]
      %v418 = vld [vmem:[%s196 + $0x80] sm:$0xff]
      %v419 = vld [vmem:[%s196 + $0x88] sm:$0xff]
      %v420 = vld [vmem:[%s196 + $0x90] sm:$0xff]
      %v421 = vld [vmem:[%s196 + $0x98] sm:$0xff]
      %v422 = vld [vmem:[%s196 + $0xa0] sm:$0xff]
      %v423 = vld [vmem:[%s196 + $0xa8] sm:$0xff]
      %v424 = vld [vmem:[%s196 + $0xb0] sm:$0xff]
      %v425 = vld [vmem:[%s196 + $0xb8] sm:$0xff]
      %v426 = vld [vmem:[%s196 + $0xc0] sm:$0xff]
      %v427 = vld [vmem:[%s196 + $0xc8] sm:$0xff]
      %v428 = vld [vmem:[%s196 + $0xd0] sm:$0xff]
      %v429 = vld [vmem:[%s196 + $0xd8] sm:$0xff]
      %v430 = vld [vmem:[%s196 + $0xe0] sm:$0xff]
      %v431 = vld [vmem:[%s196 + $0xe8] sm:$0xff]
      %v432 = vld [vmem:[%s196 + $0xf0] sm:$0xff]
      %v433 = vld [vmem:[%s196 + $0xf8] sm:$0xff]
      %v434 = vld [vmem:[%s196 + $0x100] sm:$0xff]
      %v435 = vld [vmem:[%s196 + $0x108] sm:$0xff]
      %v436 = vld [vmem:[%s196 + $0x110] sm:$0xff]
      %v437 = vld [vmem:[%s196 + $0x118] sm:$0xff]
      %v438 = vld [vmem:[%s196 + $0x120] sm:$0xff]
      %v439 = vld [vmem:[%s196 + $0x128] sm:$0xff]
      %v440 = vld [vmem:[%s196 + $0x130] sm:$0xff]
      %v441 = vld [vmem:[%s196 + $0x138] sm:$0xff]
      %v442 = vld [vmem:[%s196 + $0x140] sm:$0xff]
      %v443 = vld [vmem:[%s196 + $0x148] sm:$0xff]
      %v444 = vld [vmem:[%s196 + $0x150] sm:$0xff]
      %v445 = vld [vmem:[%s196 + $0x158] sm:$0xff]
      %v446 = vld [vmem:[%s196 + $0x160] sm:$0xff]
      %v447 = vld [vmem:[%s196 + $0x168] sm:$0xff]
      %v448 = vld [vmem:[%s196 + $0x170] sm:$0xff]
      %v449 = vld [vmem:[%s196 + $0x178] sm:$0xff]
      %v514 = vunpack.c.l.b16 %v338
      %v515 = vunpack.c.h.b16 %v338
      %v516 = vunpack.c.l.b16 %v339
      %v517 = vunpack.c.l.b16 %v340
      %v518 = vunpack.c.h.b16 %v340
      %v519 = vunpack.c.l.b16 %v341
      %v520 = vunpack.c.l.b16 %v342
      %v521 = vunpack.c.h.b16 %v342
      %v522 = vunpack.c.l.b16 %v343
      %v523 = vunpack.c.l.b16 %v344
      %v524 = vunpack.c.h.b16 %v344
      %v525 = vunpack.c.l.b16 %v345
      %v526 = vunpack.c.l.b16 %v346
      %v527 = vunpack.c.h.b16 %v346
      %v528 = vunpack.c.l.b16 %v347
      %v529 = vunpack.c.l.b16 %v348
      %v530 = vunpack.c.h.b16 %v348
      %v531 = vunpack.c.l.b16 %v349
      %v532 = vunpack.c.l.b16 %v350
      %v533 = vunpack.c.h.b16 %v350
      %v534 = vunpack.c.l.b16 %v351
      %v535 = vunpack.c.l.b16 %v352
      %v536 = vunpack.c.h.b16 %v352
      %v537 = vunpack.c.l.b16 %v353
      %v538 = vunpack.c.l.b16 %v354
      %v539 = vunpack.c.h.b16 %v354
      %v540 = vunpack.c.l.b16 %v355
      %v541 = vunpack.c.l.b16 %v356
      %v542 = vunpack.c.h.b16 %v356
      %v543 = vunpack.c.l.b16 %v357
      %v544 = vunpack.c.l.b16 %v358
      %v545 = vunpack.c.h.b16 %v358
      %v546 = vunpack.c.l.b16 %v359
      %v547 = vunpack.c.l.b16 %v360
      %v548 = vunpack.c.h.b16 %v360
      %v549 = vunpack.c.l.b16 %v361
      %v550 = vunpack.c.l.b16 %v362
      %v551 = vunpack.c.h.b16 %v362
      %v552 = vunpack.c.l.b16 %v363
      %v553 = vunpack.c.l.b16 %v364
      %v554 = vunpack.c.h.b16 %v364
      %v555 = vunpack.c.l.b16 %v365
      %v556 = vunpack.c.l.b16 %v366
      %v557 = vunpack.c.h.b16 %v366
      %v558 = vunpack.c.l.b16 %v367
      %v559 = vunpack.c.l.b16 %v368
      %v560 = vunpack.c.h.b16 %v368
      %v561 = vunpack.c.l.b16 %v369
      %v562 = vunpack.c.l.b16 %v370
      %v563 = vunpack.c.h.b16 %v370
      %v564 = vunpack.c.l.b16 %v371
      %v565 = vunpack.c.l.b16 %v372
      %v566 = vunpack.c.h.b16 %v372
      %v567 = vunpack.c.l.b16 %v373
      %v568 = vunpack.c.l.b16 %v374
      %v569 = vunpack.c.h.b16 %v374
      %v570 = vunpack.c.l.b16 %v375
      %v571 = vunpack.c.l.b16 %v376
      %v572 = vunpack.c.h.b16 %v376
      %v573 = vunpack.c.l.b16 %v377
      %v574 = vunpack.c.l.b16 %v378
      %v575 = vunpack.c.h.b16 %v378
      %v576 = vunpack.c.l.b16 %v379
      %v577 = vunpack.c.l.b16 %v380
      %v578 = vunpack.c.h.b16 %v380
      %v579 = vunpack.c.l.b16 %v381
      %v580 = vunpack.c.l.b16 %v382
      %v581 = vunpack.c.h.b16 %v382
      %v582 = vunpack.c.l.b16 %v383
      %v583 = vunpack.c.l.b16 %v384
      %v584 = vunpack.c.h.b16 %v384
      %v585 = vunpack.c.l.b16 %v385
      %v586 = vunpack.c.l.b16 %v386
      %v587 = vunpack.c.h.b16 %v386
      %v588 = vunpack.c.l.b16 %v387
      %v589 = vunpack.c.l.b16 %v388
      %v590 = vunpack.c.h.b16 %v388
      %v591 = vunpack.c.l.b16 %v389
      %v592 = vunpack.c.l.b16 %v390
      %v593 = vunpack.c.h.b16 %v390
      %v594 = vunpack.c.l.b16 %v391
      %v595 = vunpack.c.l.b16 %v392
      %v596 = vunpack.c.h.b16 %v392
      %v597 = vunpack.c.l.b16 %v393
      %v598 = vunpack.c.l.b16 %v394
      %v599 = vunpack.c.h.b16 %v394
      %v600 = vunpack.c.l.b16 %v395
      %v601 = vunpack.c.l.b16 %v396
      %v602 = vunpack.c.h.b16 %v396
      %v603 = vunpack.c.l.b16 %v397
      %v604 = vunpack.c.l.b16 %v398
      %v605 = vunpack.c.h.b16 %v398
      %v606 = vunpack.c.l.b16 %v399
      %v607 = vunpack.c.l.b16 %v400
      %v608 = vunpack.c.h.b16 %v400
      %v609 = vunpack.c.l.b16 %v401
      %v610 = vpack.c.b16 %v517, %v514
      %v611 = vpack.c.b16 %v518, %v515
      %v612 = vpack.c.b16 %v519, %v516
      %v613 = vpack.c.b16 %v523, %v520
      %v614 = vpack.c.b16 %v524, %v521
      %v615 = vpack.c.b16 %v525, %v522
      %v616 = vpack.c.b16 %v529, %v526
      %v617 = vpack.c.b16 %v530, %v527
      %v618 = vpack.c.b16 %v531, %v528
      %v619 = vpack.c.b16 %v535, %v532
      %v620 = vpack.c.b16 %v536, %v533
      %v621 = vpack.c.b16 %v537, %v534
      %v622 = vpack.c.b16 %v541, %v538
      %v623 = vpack.c.b16 %v542, %v539
      %v624 = vpack.c.b16 %v543, %v540
      %v625 = vpack.c.b16 %v547, %v544
      %v626 = vpack.c.b16 %v548, %v545
      %v627 = vpack.c.b16 %v549, %v546
      %v628 = vpack.c.b16 %v553, %v550
      %v629 = vpack.c.b16 %v554, %v551
      %v630 = vpack.c.b16 %v555, %v552
      %v631 = vpack.c.b16 %v559, %v556
      %v632 = vpack.c.b16 %v560, %v557
      %v633 = vpack.c.b16 %v561, %v558
      %v634 = vpack.c.b16 %v565, %v562
      %v635 = vpack.c.b16 %v566, %v563
      %v636 = vpack.c.b16 %v567, %v564
      %v637 = vpack.c.b16 %v571, %v568
      %v638 = vpack.c.b16 %v572, %v569
      %v639 = vpack.c.b16 %v573, %v570
      %v640 = vpack.c.b16 %v577, %v574
      %v641 = vpack.c.b16 %v578, %v575
      %v642 = vpack.c.b16 %v579, %v576
      %v643 = vpack.c.b16 %v583, %v580
      %v644 = vpack.c.b16 %v584, %v581
      %v645 = vpack.c.b16 %v585, %v582
      %v646 = vpack.c.b16 %v589, %v586
      %v647 = vpack.c.b16 %v590, %v587
      %v648 = vpack.c.b16 %v591, %v588
      %v649 = vpack.c.b16 %v595, %v592
      %v650 = vpack.c.b16 %v596, %v593
      %v651 = vpack.c.b16 %v597, %v594
      %v652 = vpack.c.b16 %v601, %v598
      %v653 = vpack.c.b16 %v602, %v599
      %v654 = vpack.c.b16 %v603, %v600
      %v655 = vpack.c.b16 %v607, %v604
      %v656 = vpack.c.b16 %v608, %v605
      %v657 = vpack.c.b16 %v609, %v606
      %v754 = vunpack.c.l.b16 %v402
      %v755 = vunpack.c.h.b16 %v402
      %v756 = vunpack.c.l.b16 %v403
      %v757 = vunpack.c.h.b16 %v403
      %v758 = vunpack.c.l.b16 %v404
      %v759 = vunpack.c.h.b16 %v404
      %v760 = vunpack.c.l.b16 %v405
      %v761 = vunpack.c.h.b16 %v405
      %v762 = vunpack.c.l.b16 %v406
      %v763 = vunpack.c.h.b16 %v406
      %v764 = vunpack.c.l.b16 %v407
      %v765 = vunpack.c.h.b16 %v407
      %v766 = vunpack.c.l.b16 %v408
      %v767 = vunpack.c.h.b16 %v408
      %v768 = vunpack.c.l.b16 %v409
      %v769 = vunpack.c.h.b16 %v409
      %v770 = vunpack.c.l.b16 %v410
      %v771 = vunpack.c.h.b16 %v410
      %v772 = vunpack.c.l.b16 %v411
      %v773 = vunpack.c.h.b16 %v411
      %v774 = vunpack.c.l.b16 %v412
      %v775 = vunpack.c.h.b16 %v412
      %v776 = vunpack.c.l.b16 %v413
      %v777 = vunpack.c.h.b16 %v413
      %v778 = vunpack.c.l.b16 %v414
      %v779 = vunpack.c.h.b16 %v414
      %v780 = vunpack.c.l.b16 %v415
      %v781 = vunpack.c.h.b16 %v415
      %v782 = vunpack.c.l.b16 %v416
      %v783 = vunpack.c.h.b16 %v416
      %v784 = vunpack.c.l.b16 %v417
      %v785 = vunpack.c.h.b16 %v417
      %v786 = vunpack.c.l.b16 %v418
      %v787 = vunpack.c.h.b16 %v418
      %v788 = vunpack.c.l.b16 %v419
      %v789 = vunpack.c.h.b16 %v419
      %v790 = vunpack.c.l.b16 %v420
      %v791 = vunpack.c.h.b16 %v420
      %v792 = vunpack.c.l.b16 %v421
      %v793 = vunpack.c.h.b16 %v421
      %v794 = vunpack.c.l.b16 %v422
      %v795 = vunpack.c.h.b16 %v422
      %v796 = vunpack.c.l.b16 %v423
      %v797 = vunpack.c.h.b16 %v423
      %v798 = vunpack.c.l.b16 %v424
      %v799 = vunpack.c.h.b16 %v424
      %v800 = vunpack.c.l.b16 %v425
      %v801 = vunpack.c.h.b16 %v425
      %v802 = vunpack.c.l.b16 %v426
      %v803 = vunpack.c.h.b16 %v426
      %v804 = vunpack.c.l.b16 %v427
      %v805 = vunpack.c.h.b16 %v427
      %v806 = vunpack.c.l.b16 %v428
      %v807 = vunpack.c.h.b16 %v428
      %v808 = vunpack.c.l.b16 %v429
      %v809 = vunpack.c.h.b16 %v429
      %v810 = vunpack.c.l.b16 %v430
      %v811 = vunpack.c.h.b16 %v430
      %v812 = vunpack.c.l.b16 %v431
      %v813 = vunpack.c.h.b16 %v431
      %v814 = vunpack.c.l.b16 %v432
      %v815 = vunpack.c.h.b16 %v432
      %v816 = vunpack.c.l.b16 %v433
      %v817 = vunpack.c.h.b16 %v433
      %v818 = vunpack.c.l.b16 %v434
      %v819 = vunpack.c.h.b16 %v434
      %v820 = vunpack.c.l.b16 %v435
      %v821 = vunpack.c.h.b16 %v435
      %v822 = vunpack.c.l.b16 %v436
      %v823 = vunpack.c.h.b16 %v436
      %v824 = vunpack.c.l.b16 %v437
      %v825 = vunpack.c.h.b16 %v437
      %v826 = vunpack.c.l.b16 %v438
      %v827 = vunpack.c.h.b16 %v438
      %v828 = vunpack.c.l.b16 %v439
      %v829 = vunpack.c.h.b16 %v439
      %v830 = vunpack.c.l.b16 %v440
      %v831 = vunpack.c.h.b16 %v440
      %v832 = vunpack.c.l.b16 %v441
      %v833 = vunpack.c.h.b16 %v441
      %v834 = vunpack.c.l.b16 %v442
      %v835 = vunpack.c.h.b16 %v442
      %v836 = vunpack.c.l.b16 %v443
      %v837 = vunpack.c.h.b16 %v443
      %v838 = vunpack.c.l.b16 %v444
      %v839 = vunpack.c.h.b16 %v444
      %v840 = vunpack.c.l.b16 %v445
      %v841 = vunpack.c.h.b16 %v445
      %v842 = vunpack.c.l.b16 %v446
      %v843 = vunpack.c.h.b16 %v446
      %v844 = vunpack.c.l.b16 %v447
      %v845 = vunpack.c.h.b16 %v447
      %v846 = vunpack.c.l.b16 %v448
      %v847 = vunpack.c.h.b16 %v448
      %v848 = vunpack.c.l.b16 %v449
      %v849 = vunpack.c.h.b16 %v449
      %v850 = vpack.c.b16 %v756, %v754
      %v851 = vpack.c.b16 %v757, %v755
      %v852 = vpack.c.b16 %v760, %v758
      %v853 = vpack.c.b16 %v761, %v759
      %v854 = vpack.c.b16 %v764, %v762
      %v855 = vpack.c.b16 %v765, %v763
      %v856 = vpack.c.b16 %v768, %v766
      %v857 = vpack.c.b16 %v769, %v767
      %v858 = vpack.c.b16 %v772, %v770
      %v859 = vpack.c.b16 %v773, %v771
      %v860 = vpack.c.b16 %v776, %v774
      %v861 = vpack.c.b16 %v777, %v775
      %v862 = vpack.c.b16 %v780, %v778
      %v863 = vpack.c.b16 %v781, %v779
      %v864 = vpack.c.b16 %v784, %v782
      %v865 = vpack.c.b16 %v785, %v783
      %v866 = vpack.c.b16 %v788, %v786
      %v867 = vpack.c.b16 %v789, %v787
      %v868 = vpack.c.b16 %v792, %v790
      %v869 = vpack.c.b16 %v793, %v791
      %v870 = vpack.c.b16 %v796, %v794
      %v871 = vpack.c.b16 %v797, %v795
      %v872 = vpack.c.b16 %v800, %v798
      %v873 = vpack.c.b16 %v801, %v799
      %v874 = vpack.c.b16 %v804, %v802
      %v875 = vpack.c.b16 %v805, %v803
      %v876 = vpack.c.b16 %v808, %v806
      %v877 = vpack.c.b16 %v809, %v807
      %v878 = vpack.c.b16 %v812, %v810
      %v879 = vpack.c.b16 %v813, %v811
      %v880 = vpack.c.b16 %v816, %v814
      %v881 = vpack.c.b16 %v817, %v815
      %v882 = vpack.c.b16 %v820, %v818
      %v883 = vpack.c.b16 %v821, %v819
      %v884 = vpack.c.b16 %v824, %v822
      %v885 = vpack.c.b16 %v825, %v823
      %v886 = vpack.c.b16 %v828, %v826
      %v887 = vpack.c.b16 %v829, %v827
      %v888 = vpack.c.b16 %v832, %v830
      %v889 = vpack.c.b16 %v833, %v831
      %v890 = vpack.c.b16 %v836, %v834
      %v891 = vpack.c.b16 %v837, %v835
      %v892 = vpack.c.b16 %v840, %v838
      %v893 = vpack.c.b16 %v841, %v839
      %v894 = vpack.c.b16 %v844, %v842
      %v895 = vpack.c.b16 %v845, %v843
      %v896 = vpack.c.b16 %v848, %v846
      %v897 = vpack.c.b16 %v849, %v847
      %946 = vmatprep.subr.bf16.mxu0 %v865
      %947 = vmatpush1.bf16.msra.mxu0 %v864
      %948 = vmatprep.subr.bf16.mxu0 %v863
      %949 = vmatpush1.bf16.msra.mxu0 %v862
      %950 = vmatprep.subr.bf16.mxu0 %v861
      %951 = vmatpush1.bf16.msra.mxu0 %v860
      %952 = vmatprep.subr.bf16.mxu0 %v859
      %953 = vmatpush1.bf16.msra.mxu0 %v858
      %954 = vmatprep.subr.bf16.mxu0 %v857
      %955 = vmatpush1.bf16.msra.mxu0 %v856
      %956 = vmatprep.subr.bf16.mxu0 %v855
      %957 = vmatpush1.bf16.msra.mxu0 %v854
      %958 = vmatprep.subr.bf16.mxu0 %v853
      %959 = vmatpush1.bf16.msra.mxu0 %v852
      %960 = vmatprep.subr.bf16.mxu0 %v851
      %961 = vmatpush1.bf16.msra.mxu0 %v850
      %962 = vmatprep.subr.bf16.mxu0 %v881
      %963 = vmatpush2.bf16.msra.mxu0 %v880
      %964 = vmatprep.subr.bf16.mxu0 %v879
      %965 = vmatpush2.bf16.msra.mxu0 %v878
      %966 = vmatprep.subr.bf16.mxu0 %v877
      %967 = vmatpush2.bf16.msra.mxu0 %v876
      %968 = vmatprep.subr.bf16.mxu0 %v875
      %969 = vmatpush2.bf16.msra.mxu0 %v874
      %970 = vmatprep.subr.bf16.mxu0 %v873
      %971 = vmatpush2.bf16.msra.mxu0 %v872
      %972 = vmatprep.subr.bf16.mxu0 %v871
      %973 = vmatpush2.bf16.msra.mxu0 %v870
      %974 = vmatprep.subr.bf16.mxu0 %v869
      %975 = vmatpush2.bf16.msra.mxu0 %v868
      %976 = vmatprep.subr.bf16.mxu0 %v867
      %977 = vmatpush2.bf16.msra.mxu0 %v866
      %978 = vmatprep.mubr.bf16.mxu0 %v611
      %979 = vmatmul.mubr.bf16.gmra.mxu0 %v610
      %v980 = vpop.f32.mrf.mxu0
      %v981 = vadd.f32 0.0, %v980
      %v982 = vpop.f32.mrf.mxu0
      %v983 = vadd.f32 0.0, %v982
      %v984 = vpop.f32.mrf.mxu0
      %v985 = vadd.f32 0.0, %v984
      %v986 = vpop.f32.mrf.mxu0
      %v987 = vadd.f32 0.0, %v986
      %988 = vmatprep.mubr.bf16.mxu0 %v614
      %989 = vmatmul.mubr.bf16.gmra.mxu0 %v613
      %v990 = vpop.f32.mrf.mxu0
      %v991 = vadd.f32 0.0, %v990
      %v992 = vpop.f32.mrf.mxu0
      %v993 = vadd.f32 0.0, %v992
      %v994 = vpop.f32.mrf.mxu0
      %v995 = vadd.f32 0.0, %v994
      %v996 = vpop.f32.mrf.mxu0
      %v997 = vadd.f32 0.0, %v996
      %998 = vmatprep.mubr.bf16.mxu0 %v617
      %999 = vmatmul.mubr.bf16.gmra.mxu0 %v616
      %v1000 = vpop.f32.mrf.mxu0
      %v1001 = vadd.f32 0.0, %v1000
      %v1002 = vpop.f32.mrf.mxu0
      %v1003 = vadd.f32 0.0, %v1002
      %v1004 = vpop.f32.mrf.mxu0
      %v1005 = vadd.f32 0.0, %v1004
      %v1006 = vpop.f32.mrf.mxu0
      %v1007 = vadd.f32 0.0, %v1006
      %1008 = vmatprep.mubr.bf16.mxu0 %v620
      %1009 = vmatmul.mubr.bf16.gmra.mxu0 %v619
      %v1010 = vpop.f32.mrf.mxu0
      %v1011 = vadd.f32 0.0, %v1010
      %v1012 = vpop.f32.mrf.mxu0
      %v1013 = vadd.f32 0.0, %v1012
      %v1014 = vpop.f32.mrf.mxu0
      %v1015 = vadd.f32 0.0, %v1014
      %v1016 = vpop.f32.mrf.mxu0
      %v1017 = vadd.f32 0.0, %v1016
      %1018 = vmatprep.mubr.bf16.mxu0 %v623
      %1019 = vmatmul.mubr.bf16.gmra.mxu0 %v622
      %v1020 = vpop.f32.mrf.mxu0
      %v1021 = vadd.f32 0.0, %v1020
      %v1022 = vpop.f32.mrf.mxu0
      %v1023 = vadd.f32 0.0, %v1022
      %v1024 = vpop.f32.mrf.mxu0
      %v1025 = vadd.f32 0.0, %v1024
      %v1026 = vpop.f32.mrf.mxu0
      %v1027 = vadd.f32 0.0, %v1026
      %1028 = vmatprep.mubr.bf16.mxu0 %v626
      %1029 = vmatmul.mubr.bf16.gmra.mxu0 %v625
      %v1030 = vpop.f32.mrf.mxu0
      %v1031 = vadd.f32 0.0, %v1030
      %v1032 = vpop.f32.mrf.mxu0
      %v1033 = vadd.f32 0.0, %v1032
      %v1034 = vpop.f32.mrf.mxu0
      %v1035 = vadd.f32 0.0, %v1034
      %v1036 = vpop.f32.mrf.mxu0
      %v1037 = vadd.f32 0.0, %v1036
      %1038 = vmatprep.mubr.bf16.mxu0 %v629
      %1039 = vmatmul.mubr.bf16.gmra.mxu0 %v628
      %v1040 = vpop.f32.mrf.mxu0
      %v1041 = vadd.f32 0.0, %v1040
      %v1042 = vpop.f32.mrf.mxu0
      %v1043 = vadd.f32 0.0, %v1042
      %v1044 = vpop.f32.mrf.mxu0
      %v1045 = vadd.f32 0.0, %v1044
      %v1046 = vpop.f32.mrf.mxu0
      %v1047 = vadd.f32 0.0, %v1046
      %1048 = vmatprep.mubr.bf16.mxu0 %v632
      %1049 = vmatmul.mubr.bf16.gmra.mxu0 %v631
      %v1050 = vpop.f32.mrf.mxu0
      %v1051 = vadd.f32 0.0, %v1050
      %v1052 = vpop.f32.mrf.mxu0
      %v1053 = vadd.f32 0.0, %v1052
      %v1054 = vpop.f32.mrf.mxu0
      %v1055 = vadd.f32 0.0, %v1054
      %v1056 = vpop.f32.mrf.mxu0
      %v1057 = vadd.f32 0.0, %v1056
      %1058 = vmatprep.mubr.bf16.mxu0 %v635
      %1059 = vmatmul.mubr.bf16.gmra.mxu0 %v634
      %v1060 = vpop.f32.mrf.mxu0
      %v1061 = vadd.f32 0.0, %v1060
      %v1062 = vpop.f32.mrf.mxu0
      %v1063 = vadd.f32 0.0, %v1062
      %v1064 = vpop.f32.mrf.mxu0
      %v1065 = vadd.f32 0.0, %v1064
      %v1066 = vpop.f32.mrf.mxu0
      %v1067 = vadd.f32 0.0, %v1066
      %1068 = vmatprep.mubr.bf16.mxu0 %v638
      %1069 = vmatmul.mubr.bf16.gmra.mxu0 %v637
      %v1070 = vpop.f32.mrf.mxu0
      %v1071 = vadd.f32 0.0, %v1070
      %v1072 = vpop.f32.mrf.mxu0
      %v1073 = vadd.f32 0.0, %v1072
      %v1074 = vpop.f32.mrf.mxu0
      %v1075 = vadd.f32 0.0, %v1074
      %v1076 = vpop.f32.mrf.mxu0
      %v1077 = vadd.f32 0.0, %v1076
      %1078 = vmatprep.mubr.bf16.mxu0 %v641
      %1079 = vmatmul.mubr.bf16.gmra.mxu0 %v640
      %v1080 = vpop.f32.mrf.mxu0
      %v1081 = vadd.f32 0.0, %v1080
      %v1082 = vpop.f32.mrf.mxu0
      %v1083 = vadd.f32 0.0, %v1082
      %v1084 = vpop.f32.mrf.mxu0
      %v1085 = vadd.f32 0.0, %v1084
      %v1086 = vpop.f32.mrf.mxu0
      %v1087 = vadd.f32 0.0, %v1086
      %1088 = vmatprep.mubr.bf16.mxu0 %v644
      %1089 = vmatmul.mubr.bf16.gmra.mxu0 %v643
      %v1090 = vpop.f32.mrf.mxu0
      %v1091 = vadd.f32 0.0, %v1090
      %v1092 = vpop.f32.mrf.mxu0
      %v1093 = vadd.f32 0.0, %v1092
      %v1094 = vpop.f32.mrf.mxu0
      %v1095 = vadd.f32 0.0, %v1094
      %v1096 = vpop.f32.mrf.mxu0
      %v1097 = vadd.f32 0.0, %v1096
      %1098 = vmatprep.mubr.bf16.mxu0 %v647
      %1099 = vmatmul.mubr.bf16.gmra.mxu0 %v646
      %v1100 = vpop.f32.mrf.mxu0
      %v1101 = vadd.f32 0.0, %v1100
      %v1102 = vpop.f32.mrf.mxu0
      %v1103 = vadd.f32 0.0, %v1102
      %v1104 = vpop.f32.mrf.mxu0
      %v1105 = vadd.f32 0.0, %v1104
      %v1106 = vpop.f32.mrf.mxu0
      %v1107 = vadd.f32 0.0, %v1106
      %1108 = vmatprep.mubr.bf16.mxu0 %v650
      %1109 = vmatmul.mubr.bf16.gmra.mxu0 %v649
      %v1110 = vpop.f32.mrf.mxu0
      %v1111 = vadd.f32 0.0, %v1110
      %v1112 = vpop.f32.mrf.mxu0
      %v1113 = vadd.f32 0.0, %v1112
      %v1114 = vpop.f32.mrf.mxu0
      %v1115 = vadd.f32 0.0, %v1114
      %v1116 = vpop.f32.mrf.mxu0
      %v1117 = vadd.f32 0.0, %v1116
      %1118 = vmatprep.mubr.bf16.mxu0 %v653
      %1119 = vmatmul.mubr.bf16.gmra.mxu0 %v652
      %v1120 = vpop.f32.mrf.mxu0
      %v1121 = vadd.f32 0.0, %v1120
      %v1122 = vpop.f32.mrf.mxu0
      %v1123 = vadd.f32 0.0, %v1122
      %v1124 = vpop.f32.mrf.mxu0
      %v1125 = vadd.f32 0.0, %v1124
      %v1126 = vpop.f32.mrf.mxu0
      %v1127 = vadd.f32 0.0, %v1126
      %1128 = vmatprep.mubr.bf16.mxu0 %v656
      %1129 = vmatmul.mubr.bf16.gmra.mxu0 %v655
      %v1130 = vpop.f32.mrf.mxu0
      %v1131 = vadd.f32 0.0, %v1130
      %v1132 = vpop.f32.mrf.mxu0
      %v1133 = vadd.f32 0.0, %v1132
      %v1134 = vpop.f32.mrf.mxu0
      %v1135 = vadd.f32 0.0, %v1134
      %v1136 = vpop.f32.mrf.mxu0
      %v1137 = vadd.f32 0.0, %v1136
      %1138 = vdwg.mxu0
      %1139 = vmatprep.subr.bf16.mxu0 %v897
      %1140 = vmatpush1.bf16.msra.mxu0 %v896
      %1141 = vmatprep.subr.bf16.mxu0 %v895
      %1142 = vmatpush1.bf16.msra.mxu0 %v894
      %1143 = vmatprep.subr.bf16.mxu0 %v893
      %1144 = vmatpush1.bf16.msra.mxu0 %v892
      %1145 = vmatprep.subr.bf16.mxu0 %v891
      %1146 = vmatpush1.bf16.msra.mxu0 %v890
      %1147 = vmatprep.subr.bf16.mxu0 %v889
      %1148 = vmatpush1.bf16.msra.mxu0 %v888
      %1149 = vmatprep.subr.bf16.mxu0 %v887
      %1150 = vmatpush1.bf16.msra.mxu0 %v886
      %1151 = vmatprep.subr.bf16.mxu0 %v885
      %1152 = vmatpush1.bf16.msra.mxu0 %v884
      %1153 = vmatprep.subr.bf16.mxu0 %v883
      %1154 = vmatpush1.bf16.msra.mxu0 %v882
      %1155 = vmatprep.subr.bf16.mxu0 0
      %1156 = vmatpush2.bf16.msra.mxu0 0
      %1157 = vmatprep.subr.bf16.mxu0 0
      %1158 = vmatpush2.bf16.msra.mxu0 0
      %1159 = vmatprep.subr.bf16.mxu0 0
      %1160 = vmatpush2.bf16.msra.mxu0 0
      %1161 = vmatprep.subr.bf16.mxu0 0
      %1162 = vmatpush2.bf16.msra.mxu0 0
      %1163 = vmatprep.subr.bf16.mxu0 0
      %1164 = vmatpush2.bf16.msra.mxu0 0
      %1165 = vmatprep.subr.bf16.mxu0 0
      %1166 = vmatpush2.bf16.msra.mxu0 0
      %1167 = vmatprep.subr.bf16.mxu0 0
      %1168 = vmatpush2.bf16.msra.mxu0 0
      %1169 = vmatprep.subr.bf16.mxu0 0
      %1170 = vmatpush2.bf16.msra.mxu0 0
      %1171 = vmatprep.mubr.bf16.mxu0 0
      %1172 = vmatmul.mubr.bf16.gmra.mxu0 %v612
      %v1173 = vpop.f32.mrf.mxu0
      %v1174 = vadd.f32 %v981, %v1173
      %v1175 = vpop.f32.mrf.mxu0
      %v1176 = vadd.f32 %v983, %v1175
      %v1177 = vpop.f32.mrf.mxu0
      %v1178 = vadd.f32 %v985, %v1177
      %v1179 = vpop.f32.mrf.mxu0
      %v1180 = vadd.f32 %v987, %v1179
      %1181 = vmatprep.mubr.bf16.mxu0 0
      %1182 = vmatmul.mubr.bf16.gmra.mxu0 %v615
      %v1183 = vpop.f32.mrf.mxu0
      %v1184 = vadd.f32 %v991, %v1183
      %v1185 = vpop.f32.mrf.mxu0
      %v1186 = vadd.f32 %v993, %v1185
      %v1187 = vpop.f32.mrf.mxu0
      %v1188 = vadd.f32 %v995, %v1187
      %v1189 = vpop.f32.mrf.mxu0
      %v1190 = vadd.f32 %v997, %v1189
      %1191 = vmatprep.mubr.bf16.mxu0 0
      %1192 = vmatmul.mubr.bf16.gmra.mxu0 %v618
      %v1193 = vpop.f32.mrf.mxu0
      %v1194 = vadd.f32 %v1001, %v1193
      %v1195 = vpop.f32.mrf.mxu0
      %v1196 = vadd.f32 %v1003, %v1195
      %v1197 = vpop.f32.mrf.mxu0
      %v1198 = vadd.f32 %v1005, %v1197
      %v1199 = vpop.f32.mrf.mxu0
      %v1200 = vadd.f32 %v1007, %v1199
      %1201 = vmatprep.mubr.bf16.mxu0 0
      %1202 = vmatmul.mubr.bf16.gmra.mxu0 %v621
      %v1203 = vpop.f32.mrf.mxu0
      %v1204 = vadd.f32 %v1011, %v1203
      %v1205 = vpop.f32.mrf.mxu0
      %v1206 = vadd.f32 %v1013, %v1205
      %v1207 = vpop.f32.mrf.mxu0
      %v1208 = vadd.f32 %v1015, %v1207
      %v1209 = vpop.f32.mrf.mxu0
      %v1210 = vadd.f32 %v1017, %v1209
      %1211 = vmatprep.mubr.bf16.mxu0 0
      %1212 = vmatmul.mubr.bf16.gmra.mxu0 %v624
      %v1213 = vpop.f32.mrf.mxu0
      %v1214 = vadd.f32 %v1021, %v1213
      %v1215 = vpop.f32.mrf.mxu0
      %v1216 = vadd.f32 %v1023, %v1215
      %v1217 = vpop.f32.mrf.mxu0
      %v1218 = vadd.f32 %v1025, %v1217
      %v1219 = vpop.f32.mrf.mxu0
      %v1220 = vadd.f32 %v1027, %v1219
      %1221 = vmatprep.mubr.bf16.mxu0 0
      %1222 = vmatmul.mubr.bf16.gmra.mxu0 %v627
      %v1223 = vpop.f32.mrf.mxu0
      %v1224 = vadd.f32 %v1031, %v1223
      %v1225 = vpop.f32.mrf.mxu0
      %v1226 = vadd.f32 %v1033, %v1225
      %v1227 = vpop.f32.mrf.mxu0
      %v1228 = vadd.f32 %v1035, %v1227
      %v1229 = vpop.f32.mrf.mxu0
      %v1230 = vadd.f32 %v1037, %v1229
      %1231 = vmatprep.mubr.bf16.mxu0 0
      %1232 = vmatmul.mubr.bf16.gmra.mxu0 %v630
      %v1233 = vpop.f32.mrf.mxu0
      %v1234 = vadd.f32 %v1041, %v1233
      %v1235 = vpop.f32.mrf.mxu0
      %v1236 = vadd.f32 %v1043, %v1235
      %v1237 = vpop.f32.mrf.mxu0
      %v1238 = vadd.f32 %v1045, %v1237
      %v1239 = vpop.f32.mrf.mxu0
      %v1240 = vadd.f32 %v1047, %v1239
      %1241 = vmatprep.mubr.bf16.mxu0 0
      %1242 = vmatmul.mubr.bf16.gmra.mxu0 %v633
      %v1243 = vpop.f32.mrf.mxu0
      %v1244 = vadd.f32 %v1051, %v1243
      %v1245 = vpop.f32.mrf.mxu0
      %v1246 = vadd.f32 %v1053, %v1245
      %v1247 = vpop.f32.mrf.mxu0
      %v1248 = vadd.f32 %v1055, %v1247
      %v1249 = vpop.f32.mrf.mxu0
      %v1250 = vadd.f32 %v1057, %v1249
      %1251 = vmatprep.mubr.bf16.mxu0 0
      %1252 = vmatmul.mubr.bf16.gmra.mxu0 %v636
      %v1253 = vpop.f32.mrf.mxu0
      %v1254 = vadd.f32 %v1061, %v1253
      %v1255 = vpop.f32.mrf.mxu0
      %v1256 = vadd.f32 %v1063, %v1255
      %v1257 = vpop.f32.mrf.mxu0
      %v1258 = vadd.f32 %v1065, %v1257
      %v1259 = vpop.f32.mrf.mxu0
      %v1260 = vadd.f32 %v1067, %v1259
      %1261 = vmatprep.mubr.bf16.mxu0 0
      %1262 = vmatmul.mubr.bf16.gmra.mxu0 %v639
      %v1263 = vpop.f32.mrf.mxu0
      %v1264 = vadd.f32 %v1071, %v1263
      %v1265 = vpop.f32.mrf.mxu0
      %v1266 = vadd.f32 %v1073, %v1265
      %v1267 = vpop.f32.mrf.mxu0
      %v1268 = vadd.f32 %v1075, %v1267
      %v1269 = vpop.f32.mrf.mxu0
      %v1270 = vadd.f32 %v1077, %v1269
      %1271 = vmatprep.mubr.bf16.mxu0 0
      %1272 = vmatmul.mubr.bf16.gmra.mxu0 %v642
      %v1273 = vpop.f32.mrf.mxu0
      %v1274 = vadd.f32 %v1081, %v1273
      %v1275 = vpop.f32.mrf.mxu0
      %v1276 = vadd.f32 %v1083, %v1275
      %v1277 = vpop.f32.mrf.mxu0
      %v1278 = vadd.f32 %v1085, %v1277
      %v1279 = vpop.f32.mrf.mxu0
      %v1280 = vadd.f32 %v1087, %v1279
      %1281 = vmatprep.mubr.bf16.mxu0 0
      %1282 = vmatmul.mubr.bf16.gmra.mxu0 %v645
      %v1283 = vpop.f32.mrf.mxu0
      %v1284 = vadd.f32 %v1091, %v1283
      %v1285 = vpop.f32.mrf.mxu0
      %v1286 = vadd.f32 %v1093, %v1285
      %v1287 = vpop.f32.mrf.mxu0
      %v1288 = vadd.f32 %v1095, %v1287
      %v1289 = vpop.f32.mrf.mxu0
      %v1290 = vadd.f32 %v1097, %v1289
      %1291 = vmatprep.mubr.bf16.mxu0 0
      %1292 = vmatmul.mubr.bf16.gmra.mxu0 %v648
      %v1293 = vpop.f32.mrf.mxu0
      %v1294 = vadd.f32 %v1101, %v1293
      %v1295 = vpop.f32.mrf.mxu0
      %v1296 = vadd.f32 %v1103, %v1295
      %v1297 = vpop.f32.mrf.mxu0
      %v1298 = vadd.f32 %v1105, %v1297
      %v1299 = vpop.f32.mrf.mxu0
      %v1300 = vadd.f32 %v1107, %v1299
      %1301 = vmatprep.mubr.bf16.mxu0 0
      %1302 = vmatmul.mubr.bf16.gmra.mxu0 %v651
      %v1303 = vpop.f32.mrf.mxu0
      %v1304 = vadd.f32 %v1111, %v1303
      %v1305 = vpop.f32.mrf.mxu0
      %v1306 = vadd.f32 %v1113, %v1305
      %v1307 = vpop.f32.mrf.mxu0
      %v1308 = vadd.f32 %v1115, %v1307
      %v1309 = vpop.f32.mrf.mxu0
      %v1310 = vadd.f32 %v1117, %v1309
      %1311 = vmatprep.mubr.bf16.mxu0 0
      %1312 = vmatmul.mubr.bf16.gmra.mxu0 %v654
      %v1313 = vpop.f32.mrf.mxu0
      %v1314 = vadd.f32 %v1121, %v1313
      %v1315 = vpop.f32.mrf.mxu0
      %v1316 = vadd.f32 %v1123, %v1315
      %v1317 = vpop.f32.mrf.mxu0
      %v1318 = vadd.f32 %v1125, %v1317
      %v1319 = vpop.f32.mrf.mxu0
      %v1320 = vadd.f32 %v1127, %v1319
      %1321 = vmatprep.mubr.bf16.mxu0 0
      %1322 = vmatmul.mubr.bf16.gmra.mxu0 %v657
      %v1323 = vpop.f32.mrf.mxu0
      %v1324 = vadd.f32 %v1131, %v1323
      %v1325 = vpop.f32.mrf.mxu0
      %v1326 = vadd.f32 %v1133, %v1325
      %v1327 = vpop.f32.mrf.mxu0
      %v1328 = vadd.f32 %v1135, %v1327
      %v1329 = vpop.f32.mrf.mxu0
      %v1330 = vadd.f32 %v1137, %v1329
      %1331 = vdwg.mxu0
      %v1332 = vadd.f32 %v274, %v1174
      %v1333 = vadd.f32 %v275, %v1176
      %v1334 = vadd.f32 %v276, %v1178
      %v1335 = vadd.f32 %v277, %v1180
      %v1336 = vadd.f32 %v278, %v1184
      %v1337 = vadd.f32 %v279, %v1186
      %v1338 = vadd.f32 %v280, %v1188
      %v1339 = vadd.f32 %v281, %v1190
      %v1340 = vadd.f32 %v282, %v1194
      %v1341 = vadd.f32 %v283, %v1196
      %v1342 = vadd.f32 %v284, %v1198
      %v1343 = vadd.f32 %v285, %v1200
      %v1344 = vadd.f32 %v286, %v1204
      %v1345 = vadd.f32 %v287, %v1206
      %v1346 = vadd.f32 %v288, %v1208
      %v1347 = vadd.f32 %v289, %v1210
      %v1348 = vadd.f32 %v290, %v1214
      %v1349 = vadd.f32 %v291, %v1216
      %v1350 = vadd.f32 %v292, %v1218
      %v1351 = vadd.f32 %v293, %v1220
      %v1352 = vadd.f32 %v294, %v1224
      %v1353 = vadd.f32 %v295, %v1226
      %v1354 = vadd.f32 %v296, %v1228
      %v1355 = vadd.f32 %v297, %v1230
      %v1356 = vadd.f32 %v298, %v1234
      %v1357 = vadd.f32 %v299, %v1236
      %v1358 = vadd.f32 %v300, %v1238
      %v1359 = vadd.f32 %v301, %v1240
      %v1360 = vadd.f32 %v302, %v1244
      %v1361 = vadd.f32 %v303, %v1246
      %v1362 = vadd.f32 %v304, %v1248
      %v1363 = vadd.f32 %v305, %v1250
      %v1364 = vadd.f32 %v306, %v1254
      %v1365 = vadd.f32 %v307, %v1256
      %v1366 = vadd.f32 %v308, %v1258
      %v1367 = vadd.f32 %v309, %v1260
      %v1368 = vadd.f32 %v310, %v1264
      %v1369 = vadd.f32 %v311, %v1266
      %v1370 = vadd.f32 %v312, %v1268
      %v1371 = vadd.f32 %v313, %v1270
      %v1372 = vadd.f32 %v314, %v1274
      %v1373 = vadd.f32 %v315, %v1276
      %v1374 = vadd.f32 %v316, %v1278
      %v1375 = vadd.f32 %v317, %v1280
      %v1376 = vadd.f32 %v318, %v1284
      %v1377 = vadd.f32 %v319, %v1286
      %v1378 = vadd.f32 %v320, %v1288
      %v1379 = vadd.f32 %v321, %v1290
      %v1380 = vadd.f32 %v322, %v1294
      %v1381 = vadd.f32 %v323, %v1296
      %v1382 = vadd.f32 %v324, %v1298
      %v1383 = vadd.f32 %v325, %v1300
      %v1384 = vadd.f32 %v326, %v1304
      %v1385 = vadd.f32 %v327, %v1306
      %v1386 = vadd.f32 %v328, %v1308
      %v1387 = vadd.f32 %v329, %v1310
      %v1388 = vadd.f32 %v330, %v1314
      %v1389 = vadd.f32 %v331, %v1316
      %v1390 = vadd.f32 %v332, %v1318
      %v1391 = vadd.f32 %v333, %v1320
      %v1392 = vadd.f32 %v334, %v1324
      %v1393 = vadd.f32 %v335, %v1326
      %v1394 = vadd.f32 %v336, %v1328
      %v1395 = vadd.f32 %v337, %v1330
      %1396 = vst [vmem:[#allocation2] sm:$0xff] %v1332
      %1397 = vst [vmem:[#allocation2 + $0x8] sm:$0xff] %v1333
      %1398 = vst [vmem:[#allocation2 + $0x10] sm:$0xff] %v1334
      %1399 = vst [vmem:[#allocation2 + $0x18] sm:$0xff] %v1335
      %1400 = vst [vmem:[#allocation2 + $0x20] sm:$0xff] %v1336
      %1401 = vst [vmem:[#allocation2 + $0x28] sm:$0xff] %v1337
      %1402 = vst [vmem:[#allocation2 + $0x30] sm:$0xff] %v1338
      %1403 = vst [vmem:[#allocation2 + $0x38] sm:$0xff] %v1339
      %1404 = vst [vmem:[#allocation2 + $0x40] sm:$0xff] %v1340
      %1405 = vst [vmem:[#allocation2 + $0x48] sm:$0xff] %v1341
      %1406 = vst [vmem:[#allocation2 + $0x50] sm:$0xff] %v1342
      %1407 = vst [vmem:[#allocation2 + $0x58] sm:$0xff] %v1343
      %1408 = vst [vmem:[#allocation2 + $0x60] sm:$0xff] %v1344
      %1409 = vst [vmem:[#allocation2 + $0x68] sm:$0xff] %v1345
      %1410 = vst [vmem:[#allocation2 + $0x70] sm:$0xff] %v1346
      %1411 = vst [vmem:[#allocation2 + $0x78] sm:$0xff] %v1347
      %1412 = vst [vmem:[#allocation2 + $0x80] sm:$0xff] %v1348
      %1413 = vst [vmem:[#allocation2 + $0x88] sm:$0xff] %v1349
      %1414 = vst [vmem:[#allocation2 + $0x90] sm:$0xff] %v1350
      %1415 = vst [vmem:[#allocation2 + $0x98] sm:$0xff] %v1351
      %1416 = vst [vmem:[#allocation2 + $0xa0] sm:$0xff] %v1352
      %1417 = vst [vmem:[#allocation2 + $0xa8] sm:$0xff] %v1353
      %1418 = vst [vmem:[#allocation2 + $0xb0] sm:$0xff] %v1354
      %1419 = vst [vmem:[#allocation2 + $0xb8] sm:$0xff] %v1355
      %1420 = vst [vmem:[#allocation2 + $0xc0] sm:$0xff] %v1356
      %1421 = vst [vmem:[#allocation2 + $0xc8] sm:$0xff] %v1357
      %1422 = vst [vmem:[#allocation2 + $0xd0] sm:$0xff] %v1358
      %1423 = vst [vmem:[#allocation2 + $0xd8] sm:$0xff] %v1359
      %1424 = vst [vmem:[#allocation2 + $0xe0] sm:$0xff] %v1360
      %1425 = vst [vmem:[#allocation2 + $0xe8] sm:$0xff] %v1361
      %1426 = vst [vmem:[#allocation2 + $0xf0] sm:$0xff] %v1362
      %1427 = vst [vmem:[#allocation2 + $0xf8] sm:$0xff] %v1363
      %1428 = vst [vmem:[#allocation2 + $0x100] sm:$0xff] %v1364
      %1429 = vst [vmem:[#allocation2 + $0x108] sm:$0xff] %v1365
      %1430 = vst [vmem:[#allocation2 + $0x110] sm:$0xff] %v1366
      %1431 = vst [vmem:[#allocation2 + $0x118] sm:$0xff] %v1367
      %1432 = vst [vmem:[#allocation2 + $0x120] sm:$0xff] %v1368
      %1433 = vst [vmem:[#allocation2 + $0x128] sm:$0xff] %v1369
      %1434 = vst [vmem:[#allocation2 + $0x130] sm:$0xff] %v1370
      %1435 = vst [vmem:[#allocation2 + $0x138] sm:$0xff] %v1371
      %1436 = vst [vmem:[#allocation2 + $0x140] sm:$0xff] %v1372
      %1437 = vst [vmem:[#allocation2 + $0x148] sm:$0xff] %v1373
      %1438 = vst [vmem:[#allocation2 + $0x150] sm:$0xff] %v1374
      %1439 = vst [vmem:[#allocation2 + $0x158] sm:$0xff] %v1375
      %1440 = vst [vmem:[#allocation2 + $0x160] sm:$0xff] %v1376
      %1441 = vst [vmem:[#allocation2 + $0x168] sm:$0xff] %v1377
      %1442 = vst [vmem:[#allocation2 + $0x170] sm:$0xff] %v1378
      %1443 = vst [vmem:[#allocation2 + $0x178] sm:$0xff] %v1379
      %1444 = vst [vmem:[#allocation2 + $0x180] sm:$0xff] %v1380
      %1445 = vst [vmem:[#allocation2 + $0x188] sm:$0xff] %v1381
      %1446 = vst [vmem:[#allocation2 + $0x190] sm:$0xff] %v1382
      %1447 = vst [vmem:[#allocation2 + $0x198] sm:$0xff] %v1383
      %1448 = vst [vmem:[#allocation2 + $0x1a0] sm:$0xff] %v1384
      %1449 = vst [vmem:[#allocation2 + $0x1a8] sm:$0xff] %v1385
      %1450 = vst [vmem:[#allocation2 + $0x1b0] sm:$0xff] %v1386
      %1451 = vst [vmem:[#allocation2 + $0x1b8] sm:$0xff] %v1387
      %1452 = vst [vmem:[#allocation2 + $0x1c0] sm:$0xff] %v1388
      %1453 = vst [vmem:[#allocation2 + $0x1c8] sm:$0xff] %v1389
      %1454 = vst [vmem:[#allocation2 + $0x1d0] sm:$0xff] %v1390
      %1455 = vst [vmem:[#allocation2 + $0x1d8] sm:$0xff] %v1391
      %1456 = vst [vmem:[#allocation2 + $0x1e0] sm:$0xff] %v1392
      %1457 = vst [vmem:[#allocation2 + $0x1e8] sm:$0xff] %v1393
      %1458 = vst [vmem:[#allocation2 + $0x1f0] sm:$0xff] %v1394
      %1459 = vst [vmem:[#allocation2 + $0x1f8] sm:$0xff] %v1395
      // Predicated region
      $region33: #{graphsage_forward.3} parent=27 // pred_check
        %p1460 = pneg %p206
      $region34: #{graphsage_forward.3} parent=27 // pred_check_branch
        %1462 = sbr.rel (%p1460) target = $region36
      $region35: #{graphsage_forward.3} parent=27 // pred_region
        %v1463 = vld [vmem:[#allocation2] sm:$0xff]
        %v1464 = vld [vmem:[#allocation2 + $0x8] sm:$0xff]
        %v1465 = vld [vmem:[#allocation2 + $0x10] sm:$0xff]
        %v1466 = vld [vmem:[#allocation2 + $0x18] sm:$0xff]
        %v1467 = vld [vmem:[#allocation2 + $0x20] sm:$0xff]
        %v1468 = vld [vmem:[#allocation2 + $0x28] sm:$0xff]
        %v1469 = vld [vmem:[#allocation2 + $0x30] sm:$0xff]
        %v1470 = vld [vmem:[#allocation2 + $0x38] sm:$0xff]
        %v1471 = vld [vmem:[#allocation2 + $0x40] sm:$0xff]
        %v1472 = vld [vmem:[#allocation2 + $0x48] sm:$0xff]
        %v1473 = vld [vmem:[#allocation2 + $0x50] sm:$0xff]
        %v1474 = vld [vmem:[#allocation2 + $0x58] sm:$0xff]
        %v1475 = vld [vmem:[#allocation2 + $0x60] sm:$0xff]
        %v1476 = vld [vmem:[#allocation2 + $0x68] sm:$0xff]
        %v1477 = vld [vmem:[#allocation2 + $0x70] sm:$0xff]
        %v1478 = vld [vmem:[#allocation2 + $0x78] sm:$0xff]
        %v1479 = vld [vmem:[#allocation2 + $0x80] sm:$0xff]
        %v1480 = vld [vmem:[#allocation2 + $0x88] sm:$0xff]
        %v1481 = vld [vmem:[#allocation2 + $0x90] sm:$0xff]
        %v1482 = vld [vmem:[#allocation2 + $0x98] sm:$0xff]
        %v1483 = vld [vmem:[#allocation2 + $0xa0] sm:$0xff]
        %v1484 = vld [vmem:[#allocation2 + $0xa8] sm:$0xff]
        %v1485 = vld [vmem:[#allocation2 + $0xb0] sm:$0xff]
        %v1486 = vld [vmem:[#allocation2 + $0xb8] sm:$0xff]
        %v1487 = vld [vmem:[#allocation2 + $0xc0] sm:$0xff]
        %v1488 = vld [vmem:[#allocation2 + $0xc8] sm:$0xff]
        %v1489 = vld [vmem:[#allocation2 + $0xd0] sm:$0xff]
        %v1490 = vld [vmem:[#allocation2 + $0xd8] sm:$0xff]
        %v1491 = vld [vmem:[#allocation2 + $0xe0] sm:$0xff]
        %v1492 = vld [vmem:[#allocation2 + $0xe8] sm:$0xff]
        %v1493 = vld [vmem:[#allocation2 + $0xf0] sm:$0xff]
        %v1494 = vld [vmem:[#allocation2 + $0xf8] sm:$0xff]
        %v1495 = vld [vmem:[#allocation2 + $0x100] sm:$0xff]
        %v1496 = vld [vmem:[#allocation2 + $0x108] sm:$0xff]
        %v1497 = vld [vmem:[#allocation2 + $0x110] sm:$0xff]
        %v1498 = vld [vmem:[#allocation2 + $0x118] sm:$0xff]
        %v1499 = vld [vmem:[#allocation2 + $0x120] sm:$0xff]
        %v1500 = vld [vmem:[#allocation2 + $0x128] sm:$0xff]
        %v1501 = vld [vmem:[#allocation2 + $0x130] sm:$0xff]
        %v1502 = vld [vmem:[#allocation2 + $0x138] sm:$0xff]
        %v1503 = vld [vmem:[#allocation2 + $0x140] sm:$0xff]
        %v1504 = vld [vmem:[#allocation2 + $0x148] sm:$0xff]
        %v1505 = vld [vmem:[#allocation2 + $0x150] sm:$0xff]
        %v1506 = vld [vmem:[#allocation2 + $0x158] sm:$0xff]
        %v1507 = vld [vmem:[#allocation2 + $0x160] sm:$0xff]
        %v1508 = vld [vmem:[#allocation2 + $0x168] sm:$0xff]
        %v1509 = vld [vmem:[#allocation2 + $0x170] sm:$0xff]
        %v1510 = vld [vmem:[#allocation2 + $0x178] sm:$0xff]
        %v1511 = vld [vmem:[#allocation2 + $0x180] sm:$0xff]
        %v1512 = vld [vmem:[#allocation2 + $0x188] sm:$0xff]
        %v1513 = vld [vmem:[#allocation2 + $0x190] sm:$0xff]
        %v1514 = vld [vmem:[#allocation2 + $0x198] sm:$0xff]
        %v1515 = vld [vmem:[#allocation2 + $0x1a0] sm:$0xff]
        %v1516 = vld [vmem:[#allocation2 + $0x1a8] sm:$0xff]
        %v1517 = vld [vmem:[#allocation2 + $0x1b0] sm:$0xff]
        %v1518 = vld [vmem:[#allocation2 + $0x1b8] sm:$0xff]
        %v1519 = vld [vmem:[#allocation2 + $0x1c0] sm:$0xff]
        %v1520 = vld [vmem:[#allocation2 + $0x1c8] sm:$0xff]
        %v1521 = vld [vmem:[#allocation2 + $0x1d0] sm:$0xff]
        %v1522 = vld [vmem:[#allocation2 + $0x1d8] sm:$0xff]
        %v1523 = vld [vmem:[#allocation2 + $0x1e0] sm:$0xff]
        %v1524 = vld [vmem:[#allocation2 + $0x1e8] sm:$0xff]
        %v1525 = vld [vmem:[#allocation2 + $0x1f0] sm:$0xff]
        %v1526 = vld [vmem:[#allocation2 + $0x1f8] sm:$0xff]
        %v1527 = vpack.c.bf16 %v1465, %v1463
        %v1528 = vpack.c.bf16 %v1466, %v1464
        %v1529 = vpack.c.bf16 %v1469, %v1467
        %v1530 = vpack.c.bf16 %v1470, %v1468
        %v1531 = vpack.c.bf16 %v1473, %v1471
        %v1532 = vpack.c.bf16 %v1474, %v1472
        %v1533 = vpack.c.bf16 %v1477, %v1475
        %v1534 = vpack.c.bf16 %v1478, %v1476
        %v1535 = vpack.c.bf16 %v1481, %v1479
        %v1536 = vpack.c.bf16 %v1482, %v1480
        %v1537 = vpack.c.bf16 %v1485, %v1483
        %v1538 = vpack.c.bf16 %v1486, %v1484
        %v1539 = vpack.c.bf16 %v1489, %v1487
        %v1540 = vpack.c.bf16 %v1490, %v1488
        %v1541 = vpack.c.bf16 %v1493, %v1491
        %v1542 = vpack.c.bf16 %v1494, %v1492
        %v1543 = vpack.c.bf16 %v1497, %v1495
        %v1544 = vpack.c.bf16 %v1498, %v1496
        %v1545 = vpack.c.bf16 %v1501, %v1499
        %v1546 = vpack.c.bf16 %v1502, %v1500
        %v1547 = vpack.c.bf16 %v1505, %v1503
        %v1548 = vpack.c.bf16 %v1506, %v1504
        %v1549 = vpack.c.bf16 %v1509, %v1507
        %v1550 = vpack.c.bf16 %v1510, %v1508
        %v1551 = vpack.c.bf16 %v1513, %v1511
        %v1552 = vpack.c.bf16 %v1514, %v1512
        %v1553 = vpack.c.bf16 %v1517, %v1515
        %v1554 = vpack.c.bf16 %v1518, %v1516
        %v1555 = vpack.c.bf16 %v1521, %v1519
        %v1556 = vpack.c.bf16 %v1522, %v1520
        %v1557 = vpack.c.bf16 %v1525, %v1523
        %v1558 = vpack.c.bf16 %v1526, %v1524
        %v1591 = vunpack.c.l.b16 %v1527
        %v1592 = vunpack.c.l.b16 %v1528
        %v1593 = vunpack.c.h.b16 %v1527
        %v1594 = vunpack.c.h.b16 %v1528
        %v1595 = vunpack.c.l.b16 %v1529
        %v1596 = vunpack.c.l.b16 %v1530
        %v1597 = vunpack.c.h.b16 %v1529
        %v1598 = vunpack.c.h.b16 %v1530
        %v1599 = vunpack.c.l.b16 %v1531
        %v1600 = vunpack.c.l.b16 %v1532
        %v1601 = vunpack.c.h.b16 %v1531
        %v1602 = vunpack.c.h.b16 %v1532
        %v1603 = vunpack.c.l.b16 %v1533
        %v1604 = vunpack.c.l.b16 %v1534
        %v1605 = vunpack.c.h.b16 %v1533
        %v1606 = vunpack.c.h.b16 %v1534
        %v1607 = vunpack.c.l.b16 %v1535
        %v1608 = vunpack.c.l.b16 %v1536
        %v1609 = vunpack.c.h.b16 %v1535
        %v1610 = vunpack.c.h.b16 %v1536
        %v1611 = vunpack.c.l.b16 %v1537
        %v1612 = vunpack.c.l.b16 %v1538
        %v1613 = vunpack.c.h.b16 %v1537
        %v1614 = vunpack.c.h.b16 %v1538
        %v1615 = vunpack.c.l.b16 %v1539
        %v1616 = vunpack.c.l.b16 %v1540
        %v1617 = vunpack.c.h.b16 %v1539
        %v1618 = vunpack.c.h.b16 %v1540
        %v1619 = vunpack.c.l.b16 %v1541
        %v1620 = vunpack.c.l.b16 %v1542
        %v1621 = vunpack.c.h.b16 %v1541
        %v1622 = vunpack.c.h.b16 %v1542
        %v1623 = vunpack.c.l.b16 %v1543
        %v1624 = vunpack.c.l.b16 %v1544
        %v1625 = vunpack.c.h.b16 %v1543
        %v1626 = vunpack.c.h.b16 %v1544
        %v1627 = vunpack.c.l.b16 %v1545
        %v1628 = vunpack.c.l.b16 %v1546
        %v1629 = vunpack.c.h.b16 %v1545
        %v1630 = vunpack.c.h.b16 %v1546
        %v1631 = vunpack.c.l.b16 %v1547
        %v1632 = vunpack.c.l.b16 %v1548
        %v1633 = vunpack.c.h.b16 %v1547
        %v1634 = vunpack.c.h.b16 %v1548
        %v1635 = vunpack.c.l.b16 %v1549
        %v1636 = vunpack.c.l.b16 %v1550
        %v1637 = vunpack.c.h.b16 %v1549
        %v1638 = vunpack.c.h.b16 %v1550
        %v1639 = vunpack.c.l.b16 %v1551
        %v1640 = vunpack.c.l.b16 %v1552
        %v1641 = vunpack.c.h.b16 %v1551
        %v1642 = vunpack.c.h.b16 %v1552
        %v1643 = vunpack.c.l.b16 %v1553
        %v1644 = vunpack.c.l.b16 %v1554
        %v1645 = vunpack.c.h.b16 %v1553
        %v1646 = vunpack.c.h.b16 %v1554
        %v1647 = vunpack.c.l.b16 %v1555
        %v1648 = vunpack.c.l.b16 %v1556
        %v1649 = vunpack.c.h.b16 %v1555
        %v1650 = vunpack.c.h.b16 %v1556
        %v1651 = vunpack.c.l.b16 %v1557
        %v1652 = vunpack.c.l.b16 %v1558
        %v1653 = vunpack.c.h.b16 %v1557
        %v1654 = vunpack.c.h.b16 %v1558
        %v1655 = vpack.c.b16 %v1592, %v1591
        %v1656 = vpack.c.b16 %v1594, %v1593
        %v1657 = vpack.c.b16 %v1596, %v1595
        %v1658 = vpack.c.b16 %v1598, %v1597
        %v1659 = vpack.c.b16 %v1600, %v1599
        %v1660 = vpack.c.b16 %v1602, %v1601
        %v1661 = vpack.c.b16 %v1604, %v1603
        %v1662 = vpack.c.b16 %v1606, %v1605
        %v1663 = vpack.c.b16 %v1608, %v1607
        %v1664 = vpack.c.b16 %v1610, %v1609
        %v1665 = vpack.c.b16 %v1612, %v1611
        %v1666 = vpack.c.b16 %v1614, %v1613
        %v1667 = vpack.c.b16 %v1616, %v1615
        %v1668 = vpack.c.b16 %v1618, %v1617
        %v1669 = vpack.c.b16 %v1620, %v1619
        %v1670 = vpack.c.b16 %v1622, %v1621
        %v1671 = vpack.c.b16 %v1624, %v1623
        %v1672 = vpack.c.b16 %v1626, %v1625
        %v1673 = vpack.c.b16 %v1628, %v1627
        %v1674 = vpack.c.b16 %v1630, %v1629
        %v1675 = vpack.c.b16 %v1632, %v1631
        %v1676 = vpack.c.b16 %v1634, %v1633
        %v1677 = vpack.c.b16 %v1636, %v1635
        %v1678 = vpack.c.b16 %v1638, %v1637
        %v1679 = vpack.c.b16 %v1640, %v1639
        %v1680 = vpack.c.b16 %v1642, %v1641
        %v1681 = vpack.c.b16 %v1644, %v1643
        %v1682 = vpack.c.b16 %v1646, %v1645
        %v1683 = vpack.c.b16 %v1648, %v1647
        %v1684 = vpack.c.b16 %v1650, %v1649
        %v1685 = vpack.c.b16 %v1652, %v1651
        %v1686 = vpack.c.b16 %v1654, %v1653
        %1719 = vst [vmem:[%s203] sm:$0xff] %v1655
        %1720 = vst [vmem:[%s203 + $0x8] sm:$0xff] %v1656
        %1721 = vst [vmem:[%s203 + $0x10] sm:$0xff] %v1657
        %1722 = vst [vmem:[%s203 + $0x18] sm:$0xff] %v1658
        %1723 = vst [vmem:[%s203 + $0x20] sm:$0xff] %v1659
        %1724 = vst [vmem:[%s203 + $0x28] sm:$0xff] %v1660
        %1725 = vst [vmem:[%s203 + $0x30] sm:$0xff] %v1661
        %1726 = vst [vmem:[%s203 + $0x38] sm:$0xff] %v1662
        %1727 = vst [vmem:[%s203 + $0x40] sm:$0xff] %v1663
        %1728 = vst [vmem:[%s203 + $0x48] sm:$0xff] %v1664
        %1729 = vst [vmem:[%s203 + $0x50] sm:$0xff] %v1665
        %1730 = vst [vmem:[%s203 + $0x58] sm:$0xff] %v1666
        %1731 = vst [vmem:[%s203 + $0x60] sm:$0xff] %v1667
        %1732 = vst [vmem:[%s203 + $0x68] sm:$0xff] %v1668
        %1733 = vst [vmem:[%s203 + $0x70] sm:$0xff] %v1669
        %1734 = vst [vmem:[%s203 + $0x78] sm:$0xff] %v1670
        %1735 = vst [vmem:[%s203 + $0x80] sm:$0xff] %v1671
        %1736 = vst [vmem:[%s203 + $0x88] sm:$0xff] %v1672
        %1737 = vst [vmem:[%s203 + $0x90] sm:$0xff] %v1673
        %1738 = vst [vmem:[%s203 + $0x98] sm:$0xff] %v1674
        %1739 = vst [vmem:[%s203 + $0xa0] sm:$0xff] %v1675
        %1740 = vst [vmem:[%s203 + $0xa8] sm:$0xff] %v1676
        %1741 = vst [vmem:[%s203 + $0xb0] sm:$0xff] %v1677
        %1742 = vst [vmem:[%s203 + $0xb8] sm:$0xff] %v1678
        %1743 = vst [vmem:[%s203 + $0xc0] sm:$0xff] %v1679
        %1744 = vst [vmem:[%s203 + $0xc8] sm:$0xff] %v1680
        %1745 = vst [vmem:[%s203 + $0xd0] sm:$0xff] %v1681
        %1746 = vst [vmem:[%s203 + $0xd8] sm:$0xff] %v1682
        %1747 = vst [vmem:[%s203 + $0xe0] sm:$0xff] %v1683
        %1748 = vst [vmem:[%s203 + $0xe8] sm:$0xff] %v1684
        %1749 = vst [vmem:[%s203 + $0xf0] sm:$0xff] %v1685
        %1750 = vst [vmem:[%s203 + $0xf8] sm:$0xff] %v1686
      $region36: #{graphsage_forward.3} parent=27 // pred_fallthru
        _
      %s1751 = smul.u32 32, %s17
      %p1752 = scmp.lt.s32.totalorder %s1751, 63
      %s1753 = scalar_select %p1752, %s1751, 63
      %s1754 = smul.addr %s1753, 2
      %s1755 = smul.addr %s1754, 4
      %s1756 = scalar_lea.vmem %s2, %s1755
      // Predicated region
      $region37: #{graphsage_forward.3} parent=27 // pred_check
        %p1757 = pneg %p97
      $region38: #{graphsage_forward.3} parent=27 // pred_check_branch
        %1759 = sbr.rel (%p1757) target = $region40
      $region39: #{graphsage_forward.3} parent=27 // pred_region
        %s1760 = smul.u32 32, %s17
      $region40: #{graphsage_forward.3} parent=27 // pred_fallthru
        _
    $region28: #{graphsage_forward.3} parent=5 // pred_fallthru
      _
    %p1761 = scmp.le.s32.totalorder 2, %s8
    // Predicated region
    $region41: #{graphsage_forward.3} parent=5 // pred_check
      %p1762 = pneg %p1761
    $region42: #{graphsage_forward.3} parent=5 // pred_check_branch
      %1764 = sbr.rel (%p1762) target = $region44
    $region43: #{graphsage_forward.3} parent=5 // pred_region
      %s1765 = ssub.s32 %s8, 2
      // Predicated region
      $region45: #{graphsage_forward.3} parent=43 // pred_check
        %p1766 = pneg %p103
      $region46: #{graphsage_forward.3} parent=43 // pred_check_branch
        %1768 = sbr.rel (%p1766) target = $region48
      $region47: #{graphsage_forward.3} parent=43 // pred_region
        %s1769 = smul.u32 32, %s19
        %p1770 = scmp.lt.s32.totalorder %s1769, 63
        %s1771 = scalar_select %p1770, %s1769, 63
        %s1772 = smul.addr %s1771, 2
        %s1773 = smul.addr %s1772, 4
        %s1774 = scalar_lea.vmem %s2, %s1773
      $region48: #{graphsage_forward.3} parent=43 // pred_fallthru
        _
    $region44: #{graphsage_forward.3} parent=5 // pred_fallthru
      _
  $region6: #{graphsage_forward.3} parent=0 // loop_footer
    %s12 = sadd.s32 1, %s8
  $region7: #{graphsage_forward.3} parent=0 // loop_footer_branch
    %7 = sbr.rel target = $region3
  $region8: #{graphsage_forward.3} parent=0 // loop_exit
    _

// kernel: graphsage_forward.5
$region0: #{graphsage_forward.5}
  #allocation0 [shape = 'u32[]', space=smem, size = 0x4, offset = 0x4, fixed_abs, tag = 'smem constant byte address 0x4 - core index']
  #allocation1 [shape = 'u32[144,128]{1,0:T(1,128)}', space=vmem, size = 0x12000, scoped, tag = 'internal scratch']
  #allocation2 [shape = 'f32[256,128]{1,0:T(8,128)}', space=vmem, size = 0x20000, scoped, tag = 'scratch operand']
  %s0 = inlined_call_operand.vmem [shape: bf16[512,512], index: 0, kind: input, shape index: {}]
  %s1 = inlined_call_operand.vmem [shape: bf16[512,256], index: 1, kind: input, shape index: {}, may-alias: {1,2}]
  %s2 = inlined_call_operand.vmem [shape: bf16[512,256], index: 2, kind: input, shape index: {}, may-alias: {1,2}]
  %s3 = inlined_call_operand.vmem [shape: f32[1,128], index: 3, kind: input, shape index: {}]
  %s4 = inlined_call_operand.vmem [shape: f32[512,128], index: 4, kind: output, shape index: {}]
  %s5 = sld [smem:[#allocation0]]
  $region177: #{graphsage_forward.5} parent=0
    _
  %s7 = ssub.s32 1, %s5
  %s8 = scalar_select 0, %s7, %s5
  $region1: #{graphsage_forward.5} parent=0
    #allocation3 [shape = 'u8[262144]{0}', space=vmem, size = 0x40000, scoped, tag = 'input window, operand 0']
    #allocation4 [shape = 'u8[131072]{0}', space=vmem, size = 0x20000, scoped, tag = 'input window, operand 1']
    #allocation5 [shape = 'u8[131072]{0}', space=vmem, size = 0x20000, scoped, tag = 'input window, operand 2']
    loop: start=0, step=1, limit=6
    $region2: #{graphsage_forward.5} parent=1 // loop_pre_header
      _
    $region3: #{graphsage_forward.5} parent=1 // loop_header
      %s10 = sphi 0, %s14
      %p11 = scmp.ge.s32.totalorder %s10, 6
      %s17 = sphi 0, %s29
      %s18 = sphi 0, %s25
      %s19 = sphi 0, %s17
      %s20 = sphi 0, %s18
      %s21 = sphi 0, %s19
      %s22 = sphi 0, %s20
      %s34 = sphi 0, %s36
      %s37 = sphi 0, %s34
      %s38 = sphi 0, %s37
      %s54 = sphi 0, %s38
      %s60 = sphi 0, %s62
      %s63 = sphi 0, %s60
      %s64 = sphi 0, %s63
      %s80 = sphi 0, %s64
      %s86 = sphi 0, %s88
      %s89 = sphi 0, %s86
      %s90 = sphi 0, %s89
      %s106 = sphi 0, %s90
      %s110 = sphi 0, %s110
      %s112 = sphi 0, %s110
      %s113 = sphi 0, %s112
      %s127 = sphi 0, %s113
      %s133 = sphi 0, %s135
      %s136 = sphi 0, %s133
      %s137 = sphi 0, %s136
      %s153 = sphi 0, %s137
    $region4: #{graphsage_forward.5} parent=1 // loop_header_branch
      %13 = sbr.rel (%p11) target = $region8
    $region5: #{graphsage_forward.5} parent=1 // loop_body
      %s15 = ssub.s32 %s10, 1
      %s16 = ssub.s32 %s10, 2
      %s23 = sadd.s32 1, %s18
      %p24 = scmp.ge.s32.totalorder %s23, 2
      %s25 = scalar_select %p24, 0, %s23
      %s26 = sadd.s32 1, %s17
      %s27 = scalar_select %p24, %s26, %s17
      %p28 = scmp.ge.s32.totalorder %s27, 2
      %s29 = scalar_select %p28, 0, %s27
      %s30 = ssub.s32 %s17, %s29
      %s31 = ssub.s32 %s18, %s25
      %s32 = sor.u32 %s30, %s31
      %p33 = scmp.eq.s32.totalorder %s32, 0
      %s35 = sadd.s32 %s34, 1
      %s36 = scalar_select %p33, %s34, %s35
      %p39 = pneg %p33
      %p40 = scmp.eq.s32.totalorder %s10, 3
      %p41 = por %p39, %p40
      %p42 = scmp.ne.s32.totalorder %s34, %s37
      %p43 = scmp.eq.s32.totalorder %s10, 0
      %p44 = por %p42, %p43
      %p45 = scmp.ne.s32.totalorder %s34, %s37
      %p46 = scmp.eq.s32.totalorder %s15, 3
      %p47 = por %p45, %p46
      %p48 = scmp.ne.s32.totalorder %s37, %s38
      %p49 = scmp.eq.s32.totalorder %s15, 0
      %p50 = por %p48, %p49
      %p51 = scmp.ne.s32.totalorder %s37, %s38
      %p52 = scmp.eq.s32.totalorder %s16, 3
      %p53 = por %p51, %p52
      %p55 = scmp.ne.s32.totalorder %s38, %s54
      %p56 = scmp.eq.s32.totalorder %s16, 0
      %p57 = por %p55, %p56
      %s58 = ssub.s32 %s18, %s25
      %p59 = scmp.eq.s32.totalorder %s58, 0
      %s61 = sadd.s32 %s60, 1
      %s62 = scalar_select %p59, %s60, %s61
      %p65 = pneg %p59
      %p66 = scmp.eq.s32.totalorder %s10, 3
      %p67 = por %p65, %p66
      %p68 = scmp.ne.s32.totalorder %s60, %s63
      %p69 = scmp.eq.s32.totalorder %s10, 0
      %p70 = por %p68, %p69
      %p71 = scmp.ne.s32.totalorder %s60, %s63
      %p72 = scmp.eq.s32.totalorder %s15, 3
      %p73 = por %p71, %p72
      %p74 = scmp.ne.s32.totalorder %s63, %s64
      %p75 = scmp.eq.s32.totalorder %s15, 0
      %p76 = por %p74, %p75
      %p77 = scmp.ne.s32.totalorder %s63, %s64
      %p78 = scmp.eq.s32.totalorder %s16, 3
      %p79 = por %p77, %p78
      %p81 = scmp.ne.s32.totalorder %s64, %s80
      %p82 = scmp.eq.s32.totalorder %s16, 0
      %p83 = por %p81, %p82
      %s84 = ssub.s32 %s17, %s29
      %p85 = scmp.eq.s32.totalorder %s84, 0
      %s87 = sadd.s32 %s86, 1
      %s88 = scalar_select %p85, %s86, %s87
      %p91 = pneg %p85
      %p92 = scmp.eq.s32.totalorder %s10, 3
      %p93 = por %p91, %p92
      %p94 = scmp.ne.s32.totalorder %s86, %s89
      %p95 = scmp.eq.s32.totalorder %s10, 0
      %p96 = por %p94, %p95
      %p97 = scmp.ne.s32.totalorder %s86, %s89
      %p98 = scmp.eq.s32.totalorder %s15, 3
      %p99 = por %p97, %p98
      %p100 = scmp.ne.s32.totalorder %s89, %s90
      %p101 = scmp.eq.s32.totalorder %s15, 0
      %p102 = por %p100, %p101
      %p103 = scmp.ne.s32.totalorder %s89, %s90
      %p104 = scmp.eq.s32.totalorder %s16, 3
      %p105 = por %p103, %p104
      %p107 = scmp.ne.s32.totalorder %s90, %s106
      %p108 = scmp.eq.s32.totalorder %s16, 0
      %p109 = por %p107, %p108
      %s111 = sadd.s32 %s110, 1
      %p114 = scmp.eq.s32.totalorder %s10, 3
      %p115 = scmp.ne.s32.totalorder %s110, %s112
      %p116 = scmp.eq.s32.totalorder %s10, 0
      %p117 = por %p115, %p116
      %p118 = scmp.ne.s32.totalorder %s110, %s112
      %p119 = scmp.eq.s32.totalorder %s15, 3
      %p120 = por %p118, %p119
      %p121 = scmp.ne.s32.totalorder %s112, %s113
      %p122 = scmp.eq.s32.totalorder %s15, 0
      %p123 = por %p121, %p122
      %p124 = scmp.ne.s32.totalorder %s112, %s113
      %p125 = scmp.eq.s32.totalorder %s16, 3
      %p126 = por %p124, %p125
      %p128 = scmp.ne.s32.totalorder %s113, %s127
      %p129 = scmp.eq.s32.totalorder %s16, 0
      %p130 = por %p128, %p129
      %s131 = ssub.s32 %s17, %s29
      %p132 = scmp.eq.s32.totalorder %s131, 0
      %s134 = sadd.s32 %s133, 1
      %s135 = scalar_select %p132, %s133, %s134
      %p138 = pneg %p132
      %p139 = scmp.eq.s32.totalorder %s10, 3
      %p140 = por %p138, %p139
      %p141 = scmp.ne.s32.totalorder %s133, %s136
      %p142 = scmp.eq.s32.totalorder %s10, 0
      %p143 = por %p141, %p142
      %p144 = scmp.ne.s32.totalorder %s133, %s136
      %p145 = scmp.eq.s32.totalorder %s15, 3
      %p146 = por %p144, %p145
      %p147 = scmp.ne.s32.totalorder %s136, %s137
      %p148 = scmp.eq.s32.totalorder %s15, 0
      %p149 = por %p147, %p148
      %p150 = scmp.ne.s32.totalorder %s136, %s137
      %p151 = scmp.eq.s32.totalorder %s16, 3
      %p152 = por %p150, %p151
      %p154 = scmp.ne.s32.totalorder %s137, %s153
      %p155 = scmp.eq.s32.totalorder %s16, 0
      %p156 = por %p154, %p155
      %p157 = scmp.le.s32.totalorder 1, %s10
      %p158 = scmp.lt.s32.totalorder %s10, 5
      %p159 = pnand %p157, %p158
      %p160 = pneg %p159
      // Predicated region
      $region9: #{graphsage_forward.5} parent=5 // pred_check
        _
      $region10: #{graphsage_forward.5} parent=5 // pred_check_branch
        %162 = sbr.rel (%p159) target = $region12
      $region11: #{graphsage_forward.5} parent=5 // pred_region
        %s163 = ssub.s32 %s10, 1
        // Predicated region
        $region13: #{graphsage_forward.5} parent=11 // pred_check
          %p164 = pneg %p123
        $region14: #{graphsage_forward.5} parent=11 // pred_check_branch
          %166 = sbr.rel (%p164) target = $region16
        $region15: #{graphsage_forward.5} parent=11 // pred_region
          _
        $region16: #{graphsage_forward.5} parent=11 // pred_fallthru
          _
      $region12: #{graphsage_forward.5} parent=5 // pred_fallthru
        _
      %p167 = scmp.lt.s32.totalorder %s10, 4
      // Predicated region
      $region17: #{graphsage_forward.5} parent=5 // pred_check
        %p168 = pneg %p167
      $region18: #{graphsage_forward.5} parent=5 // pred_check_branch
        %170 = sbr.rel (%p168) target = $region20
      $region19: #{graphsage_forward.5} parent=5 // pred_region
        // Predicated region
        $region21: #{graphsage_forward.5} parent=19 // pred_check
          %p171 = pneg %p44
        $region22: #{graphsage_forward.5} parent=19 // pred_check_branch
          %173 = sbr.rel (%p171) target = $region24
        $region23: #{graphsage_forward.5} parent=19 // pred_region
          %s174 = sand.u32 %s34, 1
          %s175 = sand.u32 %s34, 1
          %s176 = smul.addr %s175, 256
          %s177 = scalar_lea.vmem [#allocation3], %s176
          %s178 = smul.u32 32, %s17
          %s179 = smul.u32 2, %s18
          %s180 = smul.addr %s178, 4
          %s181 = sadd.s32 %s179, %s180
          %s182 = smul.addr %s181, 4
          %s183 = scalar_lea.vmem %s0, %s182
          // Predicated region
          $region25: #{graphsage_forward.5} parent=23 // pred_check
            _
          $region26: #{graphsage_forward.5} parent=23 // pred_check_branch
            %185 = sbr.rel (0) target = $region28
          $region27: #{graphsage_forward.5} parent=23 // pred_region
            // Predicated region
            $region29: #{graphsage_forward.5} parent=27 // pred_check
              _
            $region30: #{graphsage_forward.5} parent=27 // pred_check_branch
              %187 = sbr.rel (0) target = $region32
            $region31: #{graphsage_forward.5} parent=27 // pred_region
              // Predicated region
              $region44: #{graphsage_forward.5} parent=31 // pred_check
                _
              $region45: #{graphsage_forward.5} parent=31 // pred_check_branch
                %265 = sbr.rel (0) target = $region47
              $region46: #{graphsage_forward.5} parent=31 // pred_region
                loop: start=0, step=1, limit=1
                $region48: #{graphsage_forward.5} parent=46 // loop_pre_header
                  _
                $region49: #{graphsage_forward.5} parent=46 // loop_header
                  %s267 = sphi 0, %s271
                  %p268 = scmp.ge.s32.totalorder %s267, 1
                  %s272 = sphi %s183, %s183
                  %s273 = sphi %s177, %s177
                $region50: #{graphsage_forward.5} parent=46 // loop_header_branch
                  %270 = sbr.rel (%p268) target = $region54
                $region51: #{graphsage_forward.5} parent=46 // loop_body
                  %v274 = vld [vmem:[%s272] sm:$0xff]
                  %275 = vst [vmem:[%s273] sm:$0xff] %v274
                  %v276 = vld [vmem:[%s272 + $0x10] sm:$0xff]
                  %277 = vst [vmem:[%s273 + $0x8] sm:$0xff] %v276
                  %v278 = vld [vmem:[%s272 + $0x20] sm:$0xff]
                  %279 = vst [vmem:[%s273 + $0x10] sm:$0xff] %v278
                  %v280 = vld [vmem:[%s272 + $0x30] sm:$0xff]
                  %281 = vst [vmem:[%s273 + $0x18] sm:$0xff] %v280
                  %v282 = vld [vmem:[%s272 + $0x40] sm:$0xff]
                  %283 = vst [vmem:[%s273 + $0x20] sm:$0xff] %v282
                  %v284 = vld [vmem:[%s272 + $0x50] sm:$0xff]
                  %285 = vst [vmem:[%s273 + $0x28] sm:$0xff] %v284
                  %v286 = vld [vmem:[%s272 + $0x60] sm:$0xff]
                  %287 = vst [vmem:[%s273 + $0x30] sm:$0xff] %v286
                  %v288 = vld [vmem:[%s272 + $0x70] sm:$0xff]
                  %289 = vst [vmem:[%s273 + $0x38] sm:$0xff] %v288
                  %v290 = vld [vmem:[%s272 + $0x80] sm:$0xff]
                  %291 = vst [vmem:[%s273 + $0x40] sm:$0xff] %v290
                  %v292 = vld [vmem:[%s272 + $0x90] sm:$0xff]
                  %293 = vst [vmem:[%s273 + $0x48] sm:$0xff] %v292
                  %v294 = vld [vmem:[%s272 + $0xa0] sm:$0xff]
                  %295 = vst [vmem:[%s273 + $0x50] sm:$0xff] %v294
                  %v296 = vld [vmem:[%s272 + $0xb0] sm:$0xff]
                  %297 = vst [vmem:[%s273 + $0x58] sm:$0xff] %v296
                  %v298 = vld [vmem:[%s272 + $0xc0] sm:$0xff]
                  %299 = vst [vmem:[%s273 + $0x60] sm:$0xff] %v298
                  %v300 = vld [vmem:[%s272 + $0xd0] sm:$0xff]
                  %301 = vst [vmem:[%s273 + $0x68] sm:$0xff] %v300
                  %v302 = vld [vmem:[%s272 + $0xe0] sm:$0xff]
                  %303 = vst [vmem:[%s273 + $0x70] sm:$0xff] %v302
                  %v304 = vld [vmem:[%s272 + $0xf0] sm:$0xff]
                  %305 = vst [vmem:[%s273 + $0x78] sm:$0xff] %v304
                  %v306 = vld [vmem:[%s272 + $0x100] sm:$0xff]
                  %307 = vst [vmem:[%s273 + $0x80] sm:$0xff] %v306
                  %v308 = vld [vmem:[%s272 + $0x110] sm:$0xff]
                  %309 = vst [vmem:[%s273 + $0x88] sm:$0xff] %v308
                  %v310 = vld [vmem:[%s272 + $0x120] sm:$0xff]
                  %311 = vst [vmem:[%s273 + $0x90] sm:$0xff] %v310
                  %v312 = vld [vmem:[%s272 + $0x130] sm:$0xff]
                  %313 = vst [vmem:[%s273 + $0x98] sm:$0xff] %v312
                  %v314 = vld [vmem:[%s272 + $0x140] sm:$0xff]
                  %315 = vst [vmem:[%s273 + $0xa0] sm:$0xff] %v314
                  %v316 = vld [vmem:[%s272 + $0x150] sm:$0xff]
                  %317 = vst [vmem:[%s273 + $0xa8] sm:$0xff] %v316
                  %v318 = vld [vmem:[%s272 + $0x160] sm:$0xff]
                  %319 = vst [vmem:[%s273 + $0xb0] sm:$0xff] %v318
                  %v320 = vld [vmem:[%s272 + $0x170] sm:$0xff]
                  %321 = vst [vmem:[%s273 + $0xb8] sm:$0xff] %v320
                  %v322 = vld [vmem:[%s272 + $0x180] sm:$0xff]
                  %323 = vst [vmem:[%s273 + $0xc0] sm:$0xff] %v322
                  %v324 = vld [vmem:[%s272 + $0x190] sm:$0xff]
                  %325 = vst [vmem:[%s273 + $0xc8] sm:$0xff] %v324
                  %v326 = vld [vmem:[%s272 + $0x1a0] sm:$0xff]
                  %327 = vst [vmem:[%s273 + $0xd0] sm:$0xff] %v326
                  %v328 = vld [vmem:[%s272 + $0x1b0] sm:$0xff]
                  %329 = vst [vmem:[%s273 + $0xd8] sm:$0xff] %v328
                  %v330 = vld [vmem:[%s272 + $0x1c0] sm:$0xff]
                  %331 = vst [vmem:[%s273 + $0xe0] sm:$0xff] %v330
                  %v332 = vld [vmem:[%s272 + $0x1d0] sm:$0xff]
                  %333 = vst [vmem:[%s273 + $0xe8] sm:$0xff] %v332
                  %v334 = vld [vmem:[%s272 + $0x1e0] sm:$0xff]
                  %335 = vst [vmem:[%s273 + $0xf0] sm:$0xff] %v334
                  %v336 = vld [vmem:[%s272 + $0x1f0] sm:$0xff]
                  %337 = vst [vmem:[%s273 + $0xf8] sm:$0xff] %v336
                $region52: #{graphsage_forward.5} parent=46 // loop_footer
                  %s271 = sadd.s32 1, %s267
                $region53: #{graphsage_forward.5} parent=46 // loop_footer_branch
                  %266 = sbr.rel target = $region49
                $region54: #{graphsage_forward.5} parent=46 // loop_exit
                  _
              $region47: #{graphsage_forward.5} parent=31 // pred_fallthru
                _
              // Predicated region
              $region55: #{graphsage_forward.5} parent=31 // pred_check
                _
              $region56: #{graphsage_forward.5} parent=31 // pred_check_branch
                %339 = sbr.rel target = $region58
              $region57: #{graphsage_forward.5} parent=31 // pred_region
                _
              $region58: #{graphsage_forward.5} parent=31 // pred_fallthru
                _
            $region32: #{graphsage_forward.5} parent=27 // pred_fallthru
              _
            // Predicated region
            $region33: #{graphsage_forward.5} parent=27 // pred_check
              _
            $region34: #{graphsage_forward.5} parent=27 // pred_check_branch
              %189 = sbr.rel target = $region36
            $region35: #{graphsage_forward.5} parent=27 // pred_region
              %s191 = ssub.s32 256, 1
              loop: start=0, step=1, limit=1
              $region37: #{graphsage_forward.5} parent=35 // loop_pre_header
                _
              $region38: #{graphsage_forward.5} parent=35 // loop_header
                %s193 = sphi 0, %s197
                %p194 = scmp.ge.s32.totalorder %s193, 1
                %s198 = sphi %s183, %s183
                %s199 = sphi %s177, %s177
              $region39: #{graphsage_forward.5} parent=35 // loop_header_branch
                %196 = sbr.rel (%p194) target = $region43
              $region40: #{graphsage_forward.5} parent=35 // loop_body
                %v200 = vld [vmem:[%s198] sm:%s191]
                %201 = vst [vmem:[%s199] sm:%s191] %v200
                %v202 = vld [vmem:[%s198 + $0x10] sm:%s191]
                %203 = vst [vmem:[%s199 + $0x8] sm:%s191] %v202
                %v204 = vld [vmem:[%s198 + $0x20] sm:%s191]
                %205 = vst [vmem:[%s199 + $0x10] sm:%s191] %v204
                %v206 = vld [vmem:[%s198 + $0x30] sm:%s191]
                %207 = vst [vmem:[%s199 + $0x18] sm:%s191] %v206
                %v208 = vld [vmem:[%s198 + $0x40] sm:%s191]
                %209 = vst [vmem:[%s199 + $0x20] sm:%s191] %v208
                %v210 = vld [vmem:[%s198 + $0x50] sm:%s191]
                %211 = vst [vmem:[%s199 + $0x28] sm:%s191] %v210
                %v212 = vld [vmem:[%s198 + $0x60] sm:%s191]
                %213 = vst [vmem:[%s199 + $0x30] sm:%s191] %v212
                %v214 = vld [vmem:[%s198 + $0x70] sm:%s191]
                %215 = vst [vmem:[%s199 + $0x38] sm:%s191] %v214
                %v216 = vld [vmem:[%s198 + $0x80] sm:%s191]
                %217 = vst [vmem:[%s199 + $0x40] sm:%s191] %v216
                %v218 = vld [vmem:[%s198 + $0x90] sm:%s191]
                %219 = vst [vmem:[%s199 + $0x48] sm:%s191] %v218
                %v220 = vld [vmem:[%s198 + $0xa0] sm:%s191]
                %221 = vst [vmem:[%s199 + $0x50] sm:%s191] %v220
                %v222 = vld [vmem:[%s198 + $0xb0] sm:%s191]
                %223 = vst [vmem:[%s199 + $0x58] sm:%s191] %v222
                %v224 = vld [vmem:[%s198 + $0xc0] sm:%s191]
                %225 = vst [vmem:[%s199 + $0x60] sm:%s191] %v224
                %v226 = vld [vmem:[%s198 + $0xd0] sm:%s191]
                %227 = vst [vmem:[%s199 + $0x68] sm:%s191] %v226
                %v228 = vld [vmem:[%s198 + $0xe0] sm:%s191]
                %229 = vst [vmem:[%s199 + $0x70] sm:%s191] %v228
                %v230 = vld [vmem:[%s198 + $0xf0] sm:%s191]
                %231 = vst [vmem:[%s199 + $0x78] sm:%s191] %v230
                %v232 = vld [vmem:[%s198 + $0x100] sm:%s191]
                %233 = vst [vmem:[%s199 + $0x80] sm:%s191] %v232
                %v234 = vld [vmem:[%s198 + $0x110] sm:%s191]
                %235 = vst [vmem:[%s199 + $0x88] sm:%s191] %v234
                %v236 = vld [vmem:[%s198 + $0x120] sm:%s191]
                %237 = vst [vmem:[%s199 + $0x90] sm:%s191] %v236
                %v238 = vld [vmem:[%s198 + $0x130] sm:%s191]
                %239 = vst [vmem:[%s199 + $0x98] sm:%s191] %v238
                %v240 = vld [vmem:[%s198 + $0x140] sm:%s191]
                %241 = vst [vmem:[%s199 + $0xa0] sm:%s191] %v240
                %v242 = vld [vmem:[%s198 + $0x150] sm:%s191]
                %243 = vst [vmem:[%s199 + $0xa8] sm:%s191] %v242
                %v244 = vld [vmem:[%s198 + $0x160] sm:%s191]
                %245 = vst [vmem:[%s199 + $0xb0] sm:%s191] %v244
                %v246 = vld [vmem:[%s198 + $0x170] sm:%s191]
                %247 = vst [vmem:[%s199 + $0xb8] sm:%s191] %v246
                %v248 = vld [vmem:[%s198 + $0x180] sm:%s191]
                %249 = vst [vmem:[%s199 + $0xc0] sm:%s191] %v248
                %v250 = vld [vmem:[%s198 + $0x190] sm:%s191]
                %251 = vst [vmem:[%s199 + $0xc8] sm:%s191] %v250
                %v252 = vld [vmem:[%s198 + $0x1a0] sm:%s191]
                %253 = vst [vmem:[%s199 + $0xd0] sm:%s191] %v252
                %v254 = vld [vmem:[%s198 + $0x1b0] sm:%s191]
                %255 = vst [vmem:[%s199 + $0xd8] sm:%s191] %v254
                %v256 = vld [vmem:[%s198 + $0x1c0] sm:%s191]
                %257 = vst [vmem:[%s199 + $0xe0] sm:%s191] %v256
                %v258 = vld [vmem:[%s198 + $0x1d0] sm:%s191]
                %259 = vst [vmem:[%s199 + $0xe8] sm:%s191] %v258
                %v260 = vld [vmem:[%s198 + $0x1e0] sm:%s191]
                %261 = vst [vmem:[%s199 + $0xf0] sm:%s191] %v260
                %v262 = vld [vmem:[%s198 + $0x1f0] sm:%s191]
                %263 = vst [vmem:[%s199 + $0xf8] sm:%s191] %v262
              $region41: #{graphsage_forward.5} parent=35 // loop_footer
                %s197 = sadd.s32 1, %s193
              $region42: #{graphsage_forward.5} parent=35 // loop_footer_branch
                %192 = sbr.rel target = $region38
              $region43: #{graphsage_forward.5} parent=35 // loop_exit
                _
            $region36: #{graphsage_forward.5} parent=27 // pred_fallthru
              _
          $region28: #{graphsage_forward.5} parent=23 // pred_fallthru
            _
          %340 = vnop
        $region24: #{graphsage_forward.5} parent=19 // pred_fallthru
          _
        // Predicated region
        $region59: #{graphsage_forward.5} parent=19 // pred_check
          %p341 = pneg %p70
        $region60: #{graphsage_forward.5} parent=19 // pred_check_branch
          %343 = sbr.rel (%p341) target = $region62
        $region61: #{graphsage_forward.5} parent=19 // pred_region
          %s344 = sand.u32 %s60, 1
          %s345 = sand.u32 %s60, 1
          %s346 = smul.addr %s345, 128
          %s347 = scalar_lea.vmem [#allocation4], %s346
          %s348 = smul.u32 32, %s18
          %s349 = smul.addr %s348, 2
          %s350 = smul.addr %s349, 4
          %s351 = scalar_lea.vmem %s1, %s350
          // Predicated region
          $region63: #{graphsage_forward.5} parent=61 // pred_check
            _
          $region64: #{graphsage_forward.5} parent=61 // pred_check_branch
            %353 = sbr.rel (0) target = $region66
          $region65: #{graphsage_forward.5} parent=61 // pred_region
            // Predicated region
            $region67: #{graphsage_forward.5} parent=65 // pred_check
              _
            $region68: #{graphsage_forward.5} parent=65 // pred_check_branch
              %355 = sbr.rel target = $region70
            $region69: #{graphsage_forward.5} parent=65 // pred_region
              // Predicated region
              $region82: #{graphsage_forward.5} parent=69 // pred_check
                _
              $region83: #{graphsage_forward.5} parent=69 // pred_check_branch
                %433 = sbr.rel (0) target = $region85
              $region84: #{graphsage_forward.5} parent=69 // pred_region
                loop: start=0, step=1, limit=1
                $region86: #{graphsage_forward.5} parent=84 // loop_pre_header
                  _
                $region87: #{graphsage_forward.5} parent=84 // loop_header
                  %s435 = sphi 0, %s439
                  %p436 = scmp.ge.s32.totalorder %s435, 1
                  %s440 = sphi %s351, %s351
                  %s441 = sphi %s347, %s347
                $region88: #{graphsage_forward.5} parent=84 // loop_header_branch
                  %438 = sbr.rel (%p436) target = $region92
                $region89: #{graphsage_forward.5} parent=84 // loop_body
                  _
                $region90: #{graphsage_forward.5} parent=84 // loop_footer
                  %s439 = sadd.s32 1, %s435
                $region91: #{graphsage_forward.5} parent=84 // loop_footer_branch
                  %434 = sbr.rel target = $region87
                $region92: #{graphsage_forward.5} parent=84 // loop_exit
                  _
                %s443 = ssub.s32 16, 1
                loop: start=0, step=1, limit=1
                $region93: #{graphsage_forward.5} parent=84 // loop_pre_header
                  _
                $region94: #{graphsage_forward.5} parent=84 // loop_header
                  %s445 = sphi 0, %s449
                  %p446 = scmp.ge.s32.totalorder %s445, 1
                  %s450 = sphi %s351, %s351
                  %s451 = sphi %s347, %s347
                $region95: #{graphsage_forward.5} parent=84 // loop_header_branch
                  %448 = sbr.rel (%p446) target = $region99
                $region96: #{graphsage_forward.5} parent=84 // loop_body
                  %v452 = vld [vmem:[%s450] sm:%s443]
                  %453 = vst [vmem:[%s451] sm:%s443] %v452
                  %v454 = vld [vmem:[%s450 + $0x8] sm:%s443]
                  %455 = vst [vmem:[%s451 + $0x4] sm:%s443] %v454
                  %v456 = vld [vmem:[%s450 + $0x10] sm:%s443]
                  %457 = vst [vmem:[%s451 + $0x8] sm:%s443] %v456
                  %v458 = vld [vmem:[%s450 + $0x18] sm:%s443]
                  %459 = vst [vmem:[%s451 + $0xc] sm:%s443] %v458
                  %v460 = vld [vmem:[%s450 + $0x20] sm:%s443]
                  %461 = vst [vmem:[%s451 + $0x10] sm:%s443] %v460
                  %v462 = vld [vmem:[%s450 + $0x28] sm:%s443]
                  %463 = vst [vmem:[%s451 + $0x14] sm:%s443] %v462
                  %v464 = vld [vmem:[%s450 + $0x30] sm:%s443]
                  %465 = vst [vmem:[%s451 + $0x18] sm:%s443] %v464
                  %v466 = vld [vmem:[%s450 + $0x38] sm:%s443]
                  %467 = vst [vmem:[%s451 + $0x1c] sm:%s443] %v466
                  %v468 = vld [vmem:[%s450 + $0x40] sm:%s443]
                  %469 = vst [vmem:[%s451 + $0x20] sm:%s443] %v468
                  %v470 = vld [vmem:[%s450 + $0x48] sm:%s443]
                  %471 = vst [vmem:[%s451 + $0x24] sm:%s443] %v470
                  %v472 = vld [vmem:[%s450 + $0x50] sm:%s443]
                  %473 = vst [vmem:[%s451 + $0x28] sm:%s443] %v472
                  %v474 = vld [vmem:[%s450 + $0x58] sm:%s443]
                  %475 = vst [vmem:[%s451 + $0x2c] sm:%s443] %v474
                  %v476 = vld [vmem:[%s450 + $0x60] sm:%s443]
                  %477 = vst [vmem:[%s451 + $0x30] sm:%s443] %v476
                  %v478 = vld [vmem:[%s450 + $0x68] sm:%s443]
                  %479 = vst [vmem:[%s451 + $0x34] sm:%s443] %v478
                  %v480 = vld [vmem:[%s450 + $0x70] sm:%s443]
                  %481 = vst [vmem:[%s451 + $0x38] sm:%s443] %v480
                  %v482 = vld [vmem:[%s450 + $0x78] sm:%s443]
                  %483 = vst [vmem:[%s451 + $0x3c] sm:%s443] %v482
                  %v484 = vld [vmem:[%s450 + $0x80] sm:%s443]
                  %485 = vst [vmem:[%s451 + $0x40] sm:%s443] %v484
                  %v486 = vld [vmem:[%s450 + $0x88] sm:%s443]
                  %487 = vst [vmem:[%s451 + $0x44] sm:%s443] %v486
                  %v488 = vld [vmem:[%s450 + $0x90] sm:%s443]
                  %489 = vst [vmem:[%s451 + $0x48] sm:%s443] %v488
                  %v490 = vld [vmem:[%s450 + $0x98] sm:%s443]
                  %491 = vst [vmem:[%s451 + $0x4c] sm:%s443] %v490
                  %v492 = vld [vmem:[%s450 + $0xa0] sm:%s443]
                  %493 = vst [vmem:[%s451 + $0x50] sm:%s443] %v492
                  %v494 = vld [vmem:[%s450 + $0xa8] sm:%s443]
                  %495 = vst [vmem:[%s451 + $0x54] sm:%s443] %v494
                  %v496 = vld [vmem:[%s450 + $0xb0] sm:%s443]
                  %497 = vst [vmem:[%s451 + $0x58] sm:%s443] %v496
                  %v498 = vld [vmem:[%s450 + $0xb8] sm:%s443]
                  %499 = vst [vmem:[%s451 + $0x5c] sm:%s443] %v498
                  %v500 = vld [vmem:[%s450 + $0xc0] sm:%s443]
                  %501 = vst [vmem:[%s451 + $0x60] sm:%s443] %v500
                  %v502 = vld [vmem:[%s450 + $0xc8] sm:%s443]
                  %503 = vst [vmem:[%s451 + $0x64] sm:%s443] %v502
                  %v504 = vld [vmem:[%s450 + $0xd0] sm:%s443]
                  %505 = vst [vmem:[%s451 + $0x68] sm:%s443] %v504
                  %v506 = vld [vmem:[%s450 + $0xd8] sm:%s443]
                  %507 = vst [vmem:[%s451 + $0x6c] sm:%s443] %v506
                  %v508 = vld [vmem:[%s450 + $0xe0] sm:%s443]
                  %509 = vst [vmem:[%s451 + $0x70] sm:%s443] %v508
                  %v510 = vld [vmem:[%s450 + $0xe8] sm:%s443]
                  %511 = vst [vmem:[%s451 + $0x74] sm:%s443] %v510
                  %v512 = vld [vmem:[%s450 + $0xf0] sm:%s443]
                  %513 = vst [vmem:[%s451 + $0x78] sm:%s443] %v512
                  %v514 = vld [vmem:[%s450 + $0xf8] sm:%s443]
                  %515 = vst [vmem:[%s451 + $0x7c] sm:%s443] %v514
                $region97: #{graphsage_forward.5} parent=84 // loop_footer
                  %s449 = sadd.s32 1, %s445
                $region98: #{graphsage_forward.5} parent=84 // loop_footer_branch
                  %444 = sbr.rel target = $region94
                $region99: #{graphsage_forward.5} parent=84 // loop_exit
                  _
              $region85: #{graphsage_forward.5} parent=69 // pred_fallthru
                _
            $region70: #{graphsage_forward.5} parent=65 // pred_fallthru
              _
            // Predicated region
            $region71: #{graphsage_forward.5} parent=65 // pred_check
              _
            $region72: #{graphsage_forward.5} parent=65 // pred_check_branch
              %357 = sbr.rel (0) target = $region74
            $region73: #{graphsage_forward.5} parent=65 // pred_region
              %s359 = ssub.s32 16, 1
              loop: start=0, step=1, limit=1
              $region75: #{graphsage_forward.5} parent=73 // loop_pre_header
                _
              $region76: #{graphsage_forward.5} parent=73 // loop_header
                %s361 = sphi 0, %s365
                %p362 = scmp.ge.s32.totalorder %s361, 1
                %s366 = sphi %s351, %s351
                %s367 = sphi %s347, %s347
              $region77: #{graphsage_forward.5} parent=73 // loop_header_branch
                %364 = sbr.rel (%p362) target = $region81
              $region78: #{graphsage_forward.5} parent=73 // loop_body
                %v368 = vld [vmem:[%s366] sm:%s359]
                %369 = vst [vmem:[%s367] sm:%s359] %v368
                %v370 = vld [vmem:[%s366 + $0x8] sm:%s359]
                %371 = vst [vmem:[%s367 + $0x4] sm:%s359] %v370
                %v372 = vld [vmem:[%s366 + $0x10] sm:%s359]
                %373 = vst [vmem:[%s367 + $0x8] sm:%s359] %v372
                %v374 = vld [vmem:[%s366 + $0x18] sm:%s359]
                %375 = vst [vmem:[%s367 + $0xc] sm:%s359] %v374
                %v376 = vld [vmem:[%s366 + $0x20] sm:%s359]
                %377 = vst [vmem:[%s367 + $0x10] sm:%s359] %v376
                %v378 = vld [vmem:[%s366 + $0x28] sm:%s359]
                %379 = vst [vmem:[%s367 + $0x14] sm:%s359] %v378
                %v380 = vld [vmem:[%s366 + $0x30] sm:%s359]
                %381 = vst [vmem:[%s367 + $0x18] sm:%s359] %v380
                %v382 = vld [vmem:[%s366 + $0x38] sm:%s359]
                %383 = vst [vmem:[%s367 + $0x1c] sm:%s359] %v382
                %v384 = vld [vmem:[%s366 + $0x40] sm:%s359]
                %385 = vst [vmem:[%s367 + $0x20] sm:%s359] %v384
                %v386 = vld [vmem:[%s366 + $0x48] sm:%s359]
                %387 = vst [vmem:[%s367 + $0x24] sm:%s359] %v386
                %v388 = vld [vmem:[%s366 + $0x50] sm:%s359]
                %389 = vst [vmem:[%s367 + $0x28] sm:%s359] %v388
                %v390 = vld [vmem:[%s366 + $0x58] sm:%s359]
                %391 = vst [vmem:[%s367 + $0x2c] sm:%s359] %v390
                %v392 = vld [vmem:[%s366 + $0x60] sm:%s359]
                %393 = vst [vmem:[%s367 + $0x30] sm:%s359] %v392
                %v394 = vld [vmem:[%s366 + $0x68] sm:%s359]
                %395 = vst [vmem:[%s367 + $0x34] sm:%s359] %v394
                %v396 = vld [vmem:[%s366 + $0x70] sm:%s359]
                %397 = vst [vmem:[%s367 + $0x38] sm:%s359] %v396
                %v398 = vld [vmem:[%s366 + $0x78] sm:%s359]
                %399 = vst [vmem:[%s367 + $0x3c] sm:%s359] %v398
                %v400 = vld [vmem:[%s366 + $0x80] sm:%s359]
                %401 = vst [vmem:[%s367 + $0x40] sm:%s359] %v400
                %v402 = vld [vmem:[%s366 + $0x88] sm:%s359]
                %403 = vst [vmem:[%s367 + $0x44] sm:%s359] %v402
                %v404 = vld [vmem:[%s366 + $0x90] sm:%s359]
                %405 = vst [vmem:[%s367 + $0x48] sm:%s359] %v404
                %v406 = vld [vmem:[%s366 + $0x98] sm:%s359]
                %407 = vst [vmem:[%s367 + $0x4c] sm:%s359] %v406
                %v408 = vld [vmem:[%s366 + $0xa0] sm:%s359]
                %409 = vst [vmem:[%s367 + $0x50] sm:%s359] %v408
                %v410 = vld [vmem:[%s366 + $0xa8] sm:%s359]
                %411 = vst [vmem:[%s367 + $0x54] sm:%s359] %v410
                %v412 = vld [vmem:[%s366 + $0xb0] sm:%s359]
                %413 = vst [vmem:[%s367 + $0x58] sm:%s359] %v412
                %v414 = vld [vmem:[%s366 + $0xb8] sm:%s359]
                %415 = vst [vmem:[%s367 + $0x5c] sm:%s359] %v414
                %v416 = vld [vmem:[%s366 + $0xc0] sm:%s359]
                %417 = vst [vmem:[%s367 + $0x60] sm:%s359] %v416
                %v418 = vld [vmem:[%s366 + $0xc8] sm:%s359]
                %419 = vst [vmem:[%s367 + $0x64] sm:%s359] %v418
                %v420 = vld [vmem:[%s366 + $0xd0] sm:%s359]
                %421 = vst [vmem:[%s367 + $0x68] sm:%s359] %v420
                %v422 = vld [vmem:[%s366 + $0xd8] sm:%s359]
                %423 = vst [vmem:[%s367 + $0x6c] sm:%s359] %v422
                %v424 = vld [vmem:[%s366 + $0xe0] sm:%s359]
                %425 = vst [vmem:[%s367 + $0x70] sm:%s359] %v424
                %v426 = vld [vmem:[%s366 + $0xe8] sm:%s359]
                %427 = vst [vmem:[%s367 + $0x74] sm:%s359] %v426
                %v428 = vld [vmem:[%s366 + $0xf0] sm:%s359]
                %429 = vst [vmem:[%s367 + $0x78] sm:%s359] %v428
                %v430 = vld [vmem:[%s366 + $0xf8] sm:%s359]
                %431 = vst [vmem:[%s367 + $0x7c] sm:%s359] %v430
              $region79: #{graphsage_forward.5} parent=73 // loop_footer
                %s365 = sadd.s32 1, %s361
              $region80: #{graphsage_forward.5} parent=73 // loop_footer_branch
                %360 = sbr.rel target = $region76
              $region81: #{graphsage_forward.5} parent=73 // loop_exit
                _
            $region74: #{graphsage_forward.5} parent=65 // pred_fallthru
              _
          $region66: #{graphsage_forward.5} parent=61 // pred_fallthru
            _
          %516 = vnop
        $region62: #{graphsage_forward.5} parent=19 // pred_fallthru
          _
        // Predicated region
        $region100: #{graphsage_forward.5} parent=19 // pred_check
          %p517 = pneg %p96
        $region101: #{graphsage_forward.5} parent=19 // pred_check_branch
          %519 = sbr.rel (%p517) target = $region103
        $region102: #{graphsage_forward.5} parent=19 // pred_region
          %s520 = sand.u32 %s86, 1
          %s521 = sand.u32 %s86, 1
          %s522 = smul.addr %s521, 128
          %s523 = scalar_lea.vmem [#allocation5], %s522
          %s524 = smul.u32 32, %s17
          %s525 = smul.addr %s524, 2
          %s526 = sadd.s32 1, %s525
          %s527 = smul.addr %s526, 4
          %s528 = scalar_lea.vmem %s2, %s527
          // Predicated region
          $region104: #{graphsage_forward.5} parent=102 // pred_check
            _
          $region105: #{graphsage_forward.5} parent=102 // pred_check_branch
            %530 = sbr.rel (0) target = $region107
          $region106: #{graphsage_forward.5} parent=102 // pred_region
            // Predicated region
            $region108: #{graphsage_forward.5} parent=106 // pred_check
              _
            $region109: #{graphsage_forward.5} parent=106 // pred_check_branch
              %532 = sbr.rel target = $region111
            $region110: #{graphsage_forward.5} parent=106 // pred_region
              // Predicated region
              $region123: #{graphsage_forward.5} parent=110 // pred_check
                _
              $region124: #{graphsage_forward.5} parent=110 // pred_check_branch
                %610 = sbr.rel (0) target = $region126
              $region125: #{graphsage_forward.5} parent=110 // pred_region
                loop: start=0, step=1, limit=1
                $region127: #{graphsage_forward.5} parent=125 // loop_pre_header
                  _
                $region128: #{graphsage_forward.5} parent=125 // loop_header
                  %s612 = sphi 0, %s616
                  %p613 = scmp.ge.s32.totalorder %s612, 1
                  %s617 = sphi %s528, %s528
                  %s618 = sphi %s523, %s523
                $region129: #{graphsage_forward.5} parent=125 // loop_header_branch
                  %615 = sbr.rel (%p613) target = $region133
                $region130: #{graphsage_forward.5} parent=125 // loop_body
                  _
                $region131: #{graphsage_forward.5} parent=125 // loop_footer
                  %s616 = sadd.s32 1, %s612
                $region132: #{graphsage_forward.5} parent=125 // loop_footer_branch
                  %611 = sbr.rel target = $region128
                $region133: #{graphsage_forward.5} parent=125 // loop_exit
                  _
                %s620 = ssub.s32 16, 1
                loop: start=0, step=1, limit=1
                $region134: #{graphsage_forward.5} parent=125 // loop_pre_header
                  _
                $region135: #{graphsage_forward.5} parent=125 // loop_header
                  %s622 = sphi 0, %s626
                  %p623 = scmp.ge.s32.totalorder %s622, 1
                  %s627 = sphi %s528, %s528
                  %s628 = sphi %s523, %s523
                $region136: #{graphsage_forward.5} parent=125 // loop_header_branch
                  %625 = sbr.rel (%p623) target = $region140
                $region137: #{graphsage_forward.5} parent=125 // loop_body
                  %v629 = vld [vmem:[%s627] sm:%s620]
                  %630 = vst [vmem:[%s628] sm:%s620] %v629
                  %v631 = vld [vmem:[%s627 + $0x8] sm:%s620]
                  %632 = vst [vmem:[%s628 + $0x4] sm:%s620] %v631
                  %v633 = vld [vmem:[%s627 + $0x10] sm:%s620]
                  %634 = vst [vmem:[%s628 + $0x8] sm:%s620] %v633
                  %v635 = vld [vmem:[%s627 + $0x18] sm:%s620]
                  %636 = vst [vmem:[%s628 + $0xc] sm:%s620] %v635
                  %v637 = vld [vmem:[%s627 + $0x20] sm:%s620]
                  %638 = vst [vmem:[%s628 + $0x10] sm:%s620] %v637
                  %v639 = vld [vmem:[%s627 + $0x28] sm:%s620]
                  %640 = vst [vmem:[%s628 + $0x14] sm:%s620] %v639
                  %v641 = vld [vmem:[%s627 + $0x30] sm:%s620]
                  %642 = vst [vmem:[%s628 + $0x18] sm:%s620] %v641
                  %v643 = vld [vmem:[%s627 + $0x38] sm:%s620]
                  %644 = vst [vmem:[%s628 + $0x1c] sm:%s620] %v643
                  %v645 = vld [vmem:[%s627 + $0x40] sm:%s620]
                  %646 = vst [vmem:[%s628 + $0x20] sm:%s620] %v645
                  %v647 = vld [vmem:[%s627 + $0x48] sm:%s620]
                  %648 = vst [vmem:[%s628 + $0x24] sm:%s620] %v647
                  %v649 = vld [vmem:[%s627 + $0x50] sm:%s620]
                  %650 = vst [vmem:[%s628 + $0x28] sm:%s620] %v649
                  %v651 = vld [vmem:[%s627 + $0x58] sm:%s620]
                  %652 = vst [vmem:[%s628 + $0x2c] sm:%s620] %v651
                  %v653 = vld [vmem:[%s627 + $0x60] sm:%s620]
                  %654 = vst [vmem:[%s628 + $0x30] sm:%s620] %v653
                  %v655 = vld [vmem:[%s627 + $0x68] sm:%s620]
                  %656 = vst [vmem:[%s628 + $0x34] sm:%s620] %v655
                  %v657 = vld [vmem:[%s627 + $0x70] sm:%s620]
                  %658 = vst [vmem:[%s628 + $0x38] sm:%s620] %v657
                  %v659 = vld [vmem:[%s627 + $0x78] sm:%s620]
                  %660 = vst [vmem:[%s628 + $0x3c] sm:%s620] %v659
                  %v661 = vld [vmem:[%s627 + $0x80] sm:%s620]
                  %662 = vst [vmem:[%s628 + $0x40] sm:%s620] %v661
                  %v663 = vld [vmem:[%s627 + $0x88] sm:%s620]
                  %664 = vst [vmem:[%s628 + $0x44] sm:%s620] %v663
                  %v665 = vld [vmem:[%s627 + $0x90] sm:%s620]
                  %666 = vst [vmem:[%s628 + $0x48] sm:%s620] %v665
                  %v667 = vld [vmem:[%s627 + $0x98] sm:%s620]
                  %668 = vst [vmem:[%s628 + $0x4c] sm:%s620] %v667
                  %v669 = vld [vmem:[%s627 + $0xa0] sm:%s620]
                  %670 = vst [vmem:[%s628 + $0x50] sm:%s620] %v669
                  %v671 = vld [vmem:[%s627 + $0xa8] sm:%s620]
                  %672 = vst [vmem:[%s628 + $0x54] sm:%s620] %v671
                  %v673 = vld [vmem:[%s627 + $0xb0] sm:%s620]
                  %674 = vst [vmem:[%s628 + $0x58] sm:%s620] %v673
                  %v675 = vld [vmem:[%s627 + $0xb8] sm:%s620]
                  %676 = vst [vmem:[%s628 + $0x5c] sm:%s620] %v675
                  %v677 = vld [vmem:[%s627 + $0xc0] sm:%s620]
                  %678 = vst [vmem:[%s628 + $0x60] sm:%s620] %v677
                  %v679 = vld [vmem:[%s627 + $0xc8] sm:%s620]
                  %680 = vst [vmem:[%s628 + $0x64] sm:%s620] %v679
                  %v681 = vld [vmem:[%s627 + $0xd0] sm:%s620]
                  %682 = vst [vmem:[%s628 + $0x68] sm:%s620] %v681
                  %v683 = vld [vmem:[%s627 + $0xd8] sm:%s620]
                  %684 = vst [vmem:[%s628 + $0x6c] sm:%s620] %v683
                  %v685 = vld [vmem:[%s627 + $0xe0] sm:%s620]
                  %686 = vst [vmem:[%s628 + $0x70] sm:%s620] %v685
                  %v687 = vld [vmem:[%s627 + $0xe8] sm:%s620]
                  %688 = vst [vmem:[%s628 + $0x74] sm:%s620] %v687
                  %v689 = vld [vmem:[%s627 + $0xf0] sm:%s620]
                  %690 = vst [vmem:[%s628 + $0x78] sm:%s620] %v689
                  %v691 = vld [vmem:[%s627 + $0xf8] sm:%s620]
                  %692 = vst [vmem:[%s628 + $0x7c] sm:%s620] %v691
                $region138: #{graphsage_forward.5} parent=125 // loop_footer
                  %s626 = sadd.s32 1, %s622
                $region139: #{graphsage_forward.5} parent=125 // loop_footer_branch
                  %621 = sbr.rel target = $region135
                $region140: #{graphsage_forward.5} parent=125 // loop_exit
                  _
              $region126: #{graphsage_forward.5} parent=110 // pred_fallthru
                _
            $region111: #{graphsage_forward.5} parent=106 // pred_fallthru
              _
            // Predicated region
            $region112: #{graphsage_forward.5} parent=106 // pred_check
              _
            $region113: #{graphsage_forward.5} parent=106 // pred_check_branch
              %534 = sbr.rel (0) target = $region115
            $region114: #{graphsage_forward.5} parent=106 // pred_region
              %s536 = ssub.s32 16, 1
              loop: start=0, step=1, limit=1
              $region116: #{graphsage_forward.5} parent=114 // loop_pre_header
                _
              $region117: #{graphsage_forward.5} parent=114 // loop_header
                %s538 = sphi 0, %s542
                %p539 = scmp.ge.s32.totalorder %s538, 1
                %s543 = sphi %s528, %s528
                %s544 = sphi %s523, %s523
              $region118: #{graphsage_forward.5} parent=114 // loop_header_branch
                %541 = sbr.rel (%p539) target = $region122
              $region119: #{graphsage_forward.5} parent=114 // loop_body
                %v545 = vld [vmem:[%s543] sm:%s536]
                %546 = vst [vmem:[%s544] sm:%s536] %v545
                %v547 = vld [vmem:[%s543 + $0x8] sm:%s536]
                %548 = vst [vmem:[%s544 + $0x4] sm:%s536] %v547
                %v549 = vld [vmem:[%s543 + $0x10] sm:%s536]
                %550 = vst [vmem:[%s544 + $0x8] sm:%s536] %v549
                %v551 = vld [vmem:[%s543 + $0x18] sm:%s536]
                %552 = vst [vmem:[%s544 + $0xc] sm:%s536] %v551
                %v553 = vld [vmem:[%s543 + $0x20] sm:%s536]
                %554 = vst [vmem:[%s544 + $0x10] sm:%s536] %v553
                %v555 = vld [vmem:[%s543 + $0x28] sm:%s536]
                %556 = vst [vmem:[%s544 + $0x14] sm:%s536] %v555
                %v557 = vld [vmem:[%s543 + $0x30] sm:%s536]
                %558 = vst [vmem:[%s544 + $0x18] sm:%s536] %v557
                %v559 = vld [vmem:[%s543 + $0x38] sm:%s536]
                %560 = vst [vmem:[%s544 + $0x1c] sm:%s536] %v559
                %v561 = vld [vmem:[%s543 + $0x40] sm:%s536]
                %562 = vst [vmem:[%s544 + $0x20] sm:%s536] %v561
                %v563 = vld [vmem:[%s543 + $0x48] sm:%s536]
                %564 = vst [vmem:[%s544 + $0x24] sm:%s536] %v563
                %v565 = vld [vmem:[%s543 + $0x50] sm:%s536]
                %566 = vst [vmem:[%s544 + $0x28] sm:%s536] %v565
                %v567 = vld [vmem:[%s543 + $0x58] sm:%s536]
                %568 = vst [vmem:[%s544 + $0x2c] sm:%s536] %v567
                %v569 = vld [vmem:[%s543 + $0x60] sm:%s536]
                %570 = vst [vmem:[%s544 + $0x30] sm:%s536] %v569
                %v571 = vld [vmem:[%s543 + $0x68] sm:%s536]
                %572 = vst [vmem:[%s544 + $0x34] sm:%s536] %v571
                %v573 = vld [vmem:[%s543 + $0x70] sm:%s536]
                %574 = vst [vmem:[%s544 + $0x38] sm:%s536] %v573
                %v575 = vld [vmem:[%s543 + $0x78] sm:%s536]
                %576 = vst [vmem:[%s544 + $0x3c] sm:%s536] %v575
                %v577 = vld [vmem:[%s543 + $0x80] sm:%s536]
                %578 = vst [vmem:[%s544 + $0x40] sm:%s536] %v577
                %v579 = vld [vmem:[%s543 + $0x88] sm:%s536]
                %580 = vst [vmem:[%s544 + $0x44] sm:%s536] %v579
                %v581 = vld [vmem:[%s543 + $0x90] sm:%s536]
                %582 = vst [vmem:[%s544 + $0x48] sm:%s536] %v581
                %v583 = vld [vmem:[%s543 + $0x98] sm:%s536]
                %584 = vst [vmem:[%s544 + $0x4c] sm:%s536] %v583
                %v585 = vld [vmem:[%s543 + $0xa0] sm:%s536]
                %586 = vst [vmem:[%s544 + $0x50] sm:%s536] %v585
                %v587 = vld [vmem:[%s543 + $0xa8] sm:%s536]
                %588 = vst [vmem:[%s544 + $0x54] sm:%s536] %v587
                %v589 = vld [vmem:[%s543 + $0xb0] sm:%s536]
                %590 = vst [vmem:[%s544 + $0x58] sm:%s536] %v589
                %v591 = vld [vmem:[%s543 + $0xb8] sm:%s536]
                %592 = vst [vmem:[%s544 + $0x5c] sm:%s536] %v591
                %v593 = vld [vmem:[%s543 + $0xc0] sm:%s536]
                %594 = vst [vmem:[%s544 + $0x60] sm:%s536] %v593
                %v595 = vld [vmem:[%s543 + $0xc8] sm:%s536]
                %596 = vst [vmem:[%s544 + $0x64] sm:%s536] %v595
                %v597 = vld [vmem:[%s543 + $0xd0] sm:%s536]
                %598 = vst [vmem:[%s544 + $0x68] sm:%s536] %v597
                %v599 = vld [vmem:[%s543 + $0xd8] sm:%s536]
                %600 = vst [vmem:[%s544 + $0x6c] sm:%s536] %v599
                %v601 = vld [vmem:[%s543 + $0xe0] sm:%s536]
                %602 = vst [vmem:[%s544 + $0x70] sm:%s536] %v601
                %v603 = vld [vmem:[%s543 + $0xe8] sm:%s536]
                %604 = vst [vmem:[%s544 + $0x74] sm:%s536] %v603
                %v605 = vld [vmem:[%s543 + $0xf0] sm:%s536]
                %606 = vst [vmem:[%s544 + $0x78] sm:%s536] %v605
                %v607 = vld [vmem:[%s543 + $0xf8] sm:%s536]
                %608 = vst [vmem:[%s544 + $0x7c] sm:%s536] %v607
              $region120: #{graphsage_forward.5} parent=114 // loop_footer
                %s542 = sadd.s32 1, %s538
              $region121: #{graphsage_forward.5} parent=114 // loop_footer_branch
                %537 = sbr.rel target = $region117
              $region122: #{graphsage_forward.5} parent=114 // loop_exit
                _
            $region115: #{graphsage_forward.5} parent=106 // pred_fallthru
              _
          $region107: #{graphsage_forward.5} parent=102 // pred_fallthru
            _
          %693 = vnop
        $region103: #{graphsage_forward.5} parent=19 // pred_fallthru
          _
      $region20: #{graphsage_forward.5} parent=5 // pred_fallthru
        _
      %p694 = scmp.le.s32.totalorder 1, %s10
      %p695 = scmp.lt.s32.totalorder %s10, 5
      %p696 = pnand %p694, %p695
      %p697 = pneg %p696
      // Predicated region
      $region141: #{graphsage_forward.5} parent=5 // pred_check
        _
      $region142: #{graphsage_forward.5} parent=5 // pred_check_branch
        %699 = sbr.rel (%p696) target = $region144
      $region143: #{graphsage_forward.5} parent=5 // pred_region
        %s700 = ssub.s32 %s10, 1
        %s701 = sand.u32 %s37, 1
        %s702 = sand.u32 %s37, 1
        %s703 = smul.addr %s702, 256
        %s704 = scalar_lea.vmem [#allocation3], %s703
        // Predicated region
        $region145: #{graphsage_forward.5} parent=143 // pred_check
          %p705 = pneg %p50
        $region146: #{graphsage_forward.5} parent=143 // pred_check_branch
          %707 = sbr.rel (%p705) target = $region148
        $region147: #{graphsage_forward.5} parent=143 // pred_region
          _
        $region148: #{graphsage_forward.5} parent=143 // pred_fallthru
          _
        %s708 = sand.u32 %s63, 1
        %s709 = sand.u32 %s63, 1
        %s710 = smul.addr %s709, 128
        %s711 = scalar_lea.vmem [#allocation4], %s710
        // Predicated region
        $region149: #{graphsage_forward.5} parent=143 // pred_check
          %p712 = pneg %p76
        $region150: #{graphsage_forward.5} parent=143 // pred_check_branch
          %714 = sbr.rel (%p712) target = $region152
        $region151: #{graphsage_forward.5} parent=143 // pred_region
          _
        $region152: #{graphsage_forward.5} parent=143 // pred_fallthru
          _
        %s715 = sand.u32 %s89, 1
        %s716 = sand.u32 %s89, 1
        %s717 = smul.addr %s716, 128
        %s718 = scalar_lea.vmem [#allocation5], %s717
        // Predicated region
        $region153: #{graphsage_forward.5} parent=143 // pred_check
          %p719 = pneg %p102
        $region154: #{graphsage_forward.5} parent=143 // pred_check_branch
          %721 = sbr.rel (%p719) target = $region156
        $region155: #{graphsage_forward.5} parent=143 // pred_region
          _
        $region156: #{graphsage_forward.5} parent=143 // pred_fallthru
          _
        %s722 = sand.u32 %s37, 1
        %s723 = sand.u32 %s37, 1
        %s724 = smul.addr %s723, 256
        %s725 = scalar_lea.vmem [#allocation3], %s724
        %p726 = pneg %p50
        %p727 = pneg %p47
        %s728 = sand.u32 %s63, 1
        %s729 = sand.u32 %s63, 1
        %s730 = smul.addr %s729, 128
        %s731 = scalar_lea.vmem [#allocation4], %s730
        %p732 = pneg %p76
        %p733 = pneg %p73
        %s734 = sand.u32 %s89, 1
        %s735 = sand.u32 %s89, 1
        %s736 = smul.addr %s735, 128
        %s737 = scalar_lea.vmem [#allocation5], %s736
        %p738 = pneg %p102
        %p739 = pneg %p99
        %p740 = pneg %p123
        %p741 = pneg %p120
        %p742 = pneg %p149
        %p743 = pneg %p146
        %s744 = smul.u32 32, %s19
        %p745 = scmp.lt.s32.totalorder %s744, 63
        %s746 = scalar_select %p745, %s744, 63
        %s747 = smul.addr %s746, 8
        %s748 = scalar_lea.vmem %s4, %s747
        %s749 = smul.u32 32, %s19
        %s750 = smul.u32 2, %s20
        %s751 = smul.u32 32, %s20
        %s752 = smul.u32 32, %s19
        %s753 = smul.u32 32, %s19
        %p754 = scmp.lt.s32.totalorder %s753, 63
        %s755 = scalar_select %p754, %s753, 63
        %s756 = smul.addr %s755, 8
        %s757 = scalar_lea.vmem %s4, %s756
        %s758 = smul.u32 32, %s19
        %p760 = scmp.eq.s32.totalorder %s20, 0
        // Predicated region
        $region157: #{graphsage_forward.5} parent=143 // pred_check
          %p761 = pneg %p760
        $region158: #{graphsage_forward.5} parent=143 // pred_check_branch
          %763 = sbr.rel (%p761) target = $region160
        $region159: #{graphsage_forward.5} parent=143 // pred_region
          %764 = vst [vmem:[#allocation2] sm:$0xff] 0.0
          %765 = vst [vmem:[#allocation2 + $0x8] sm:$0xff] 0.0
          %766 = vst [vmem:[#allocation2 + $0x10] sm:$0xff] 0.0
          %767 = vst [vmem:[#allocation2 + $0x18] sm:$0xff] 0.0
          %768 = vst [vmem:[#allocation2 + $0x20] sm:$0xff] 0.0
          %769 = vst [vmem:[#allocation2 + $0x28] sm:$0xff] 0.0
          %770 = vst [vmem:[#allocation2 + $0x30] sm:$0xff] 0.0
          %771 = vst [vmem:[#allocation2 + $0x38] sm:$0xff] 0.0
          %772 = vst [vmem:[#allocation2 + $0x40] sm:$0xff] 0.0
          %773 = vst [vmem:[#allocation2 + $0x48] sm:$0xff] 0.0
          %774 = vst [vmem:[#allocation2 + $0x50] sm:$0xff] 0.0
          %775 = vst [vmem:[#allocation2 + $0x58] sm:$0xff] 0.0
          %776 = vst [vmem:[#allocation2 + $0x60] sm:$0xff] 0.0
          %777 = vst [vmem:[#allocation2 + $0x68] sm:$0xff] 0.0
          %778 = vst [vmem:[#allocation2 + $0x70] sm:$0xff] 0.0
          %779 = vst [vmem:[#allocation2 + $0x78] sm:$0xff] 0.0
          %780 = vst [vmem:[#allocation2 + $0x80] sm:$0xff] 0.0
          %781 = vst [vmem:[#allocation2 + $0x88] sm:$0xff] 0.0
          %782 = vst [vmem:[#allocation2 + $0x90] sm:$0xff] 0.0
          %783 = vst [vmem:[#allocation2 + $0x98] sm:$0xff] 0.0
          %784 = vst [vmem:[#allocation2 + $0xa0] sm:$0xff] 0.0
          %785 = vst [vmem:[#allocation2 + $0xa8] sm:$0xff] 0.0
          %786 = vst [vmem:[#allocation2 + $0xb0] sm:$0xff] 0.0
          %787 = vst [vmem:[#allocation2 + $0xb8] sm:$0xff] 0.0
          %788 = vst [vmem:[#allocation2 + $0xc0] sm:$0xff] 0.0
          %789 = vst [vmem:[#allocation2 + $0xc8] sm:$0xff] 0.0
          %790 = vst [vmem:[#allocation2 + $0xd0] sm:$0xff] 0.0
          %791 = vst [vmem:[#allocation2 + $0xd8] sm:$0xff] 0.0
          %792 = vst [vmem:[#allocation2 + $0xe0] sm:$0xff] 0.0
          %793 = vst [vmem:[#allocation2 + $0xe8] sm:$0xff] 0.0
          %794 = vst [vmem:[#allocation2 + $0xf0] sm:$0xff] 0.0
          %795 = vst [vmem:[#allocation2 + $0xf8] sm:$0xff] 0.0
        $region160: #{graphsage_forward.5} parent=143 // pred_fallthru
          _
        %v796 = vld [vmem:[#allocation2] sm:$0xff]
        %v797 = vld [vmem:[#allocation2 + $0x8] sm:$0xff]
        %v798 = vld [vmem:[#allocation2 + $0x10] sm:$0xff]
        %v799 = vld [vmem:[#allocation2 + $0x18] sm:$0xff]
        %v800 = vld [vmem:[#allocation2 + $0x20] sm:$0xff]
        %v801 = vld [vmem:[#allocation2 + $0x28] sm:$0xff]
        %v802 = vld [vmem:[#allocation2 + $0x30] sm:$0xff]
        %v803 = vld [vmem:[#allocation2 + $0x38] sm:$0xff]
        %v804 = vld [vmem:[#allocation2 + $0x40] sm:$0xff]
        %v805 = vld [vmem:[#allocation2 + $0x48] sm:$0xff]
        %v806 = vld [vmem:[#allocation2 + $0x50] sm:$0xff]
        %v807 = vld [vmem:[#allocation2 + $0x58] sm:$0xff]
        %v808 = vld [vmem:[#allocation2 + $0x60] sm:$0xff]
        %v809 = vld [vmem:[#allocation2 + $0x68] sm:$0xff]
        %v810 = vld [vmem:[#allocation2 + $0x70] sm:$0xff]
        %v811 = vld [vmem:[#allocation2 + $0x78] sm:$0xff]
        %v812 = vld [vmem:[#allocation2 + $0x80] sm:$0xff]
        %v813 = vld [vmem:[#allocation2 + $0x88] sm:$0xff]
        %v814 = vld [vmem:[#allocation2 + $0x90] sm:$0xff]
        %v815 = vld [vmem:[#allocation2 + $0x98] sm:$0xff]
        %v816 = vld [vmem:[#allocation2 + $0xa0] sm:$0xff]
        %v817 = vld [vmem:[#allocation2 + $0xa8] sm:$0xff]
        %v818 = vld [vmem:[#allocation2 + $0xb0] sm:$0xff]
        %v819 = vld [vmem:[#allocation2 + $0xb8] sm:$0xff]
        %v820 = vld [vmem:[#allocation2 + $0xc0] sm:$0xff]
        %v821 = vld [vmem:[#allocation2 + $0xc8] sm:$0xff]
        %v822 = vld [vmem:[#allocation2 + $0xd0] sm:$0xff]
        %v823 = vld [vmem:[#allocation2 + $0xd8] sm:$0xff]
        %v824 = vld [vmem:[#allocation2 + $0xe0] sm:$0xff]
        %v825 = vld [vmem:[#allocation2 + $0xe8] sm:$0xff]
        %v826 = vld [vmem:[#allocation2 + $0xf0] sm:$0xff]
        %v827 = vld [vmem:[#allocation2 + $0xf8] sm:$0xff]
        %v828 = vld [vmem:[%s704] sm:$0xff]
        %v829 = vld [vmem:[%s704 + $0x8] sm:$0xff]
        %v830 = vld [vmem:[%s704 + $0x10] sm:$0xff]
        %v831 = vld [vmem:[%s704 + $0x18] sm:$0xff]
        %v832 = vld [vmem:[%s704 + $0x20] sm:$0xff]
        %v833 = vld [vmem:[%s704 + $0x28] sm:$0xff]
        %v834 = vld [vmem:[%s704 + $0x30] sm:$0xff]
        %v835 = vld [vmem:[%s704 + $0x38] sm:$0xff]
        %v836 = vld [vmem:[%s704 + $0x40] sm:$0xff]
        %v837 = vld [vmem:[%s704 + $0x48] sm:$0xff]
        %v838 = vld [vmem:[%s704 + $0x50] sm:$0xff]
        %v839 = vld [vmem:[%s704 + $0x58] sm:$0xff]
        %v840 = vld [vmem:[%s704 + $0x60] sm:$0xff]
        %v841 = vld [vmem:[%s704 + $0x68] sm:$0xff]
        %v842 = vld [vmem:[%s704 + $0x70] sm:$0xff]
        %v843 = vld [vmem:[%s704 + $0x78] sm:$0xff]
        %v844 = vld [vmem:[%s704 + $0x80] sm:$0xff]
        %v845 = vld [vmem:[%s704 + $0x88] sm:$0xff]
        %v846 = vld [vmem:[%s704 + $0x90] sm:$0xff]
        %v847 = vld [vmem:[%s704 + $0x98] sm:$0xff]
        %v848 = vld [vmem:[%s704 + $0xa0] sm:$0xff]
        %v849 = vld [vmem:[%s704 + $0xa8] sm:$0xff]
        %v850 = vld [vmem:[%s704 + $0xb0] sm:$0xff]
        %v851 = vld [vmem:[%s704 + $0xb8] sm:$0xff]
        %v852 = vld [vmem:[%s704 + $0xc0] sm:$0xff]
        %v853 = vld [vmem:[%s704 + $0xc8] sm:$0xff]
        %v854 = vld [vmem:[%s704 + $0xd0] sm:$0xff]
        %v855 = vld [vmem:[%s704 + $0xd8] sm:$0xff]
        %v856 = vld [vmem:[%s704 + $0xe0] sm:$0xff]
        %v857 = vld [vmem:[%s704 + $0xe8] sm:$0xff]
        %v858 = vld [vmem:[%s704 + $0xf0] sm:$0xff]
        %v859 = vld [vmem:[%s704 + $0xf8] sm:$0xff]
        %v860 = vld [vmem:[%s711] sm:$0xf]
        %v861 = vld [vmem:[%s711 + $0x4] sm:$0xf]
        %v862 = vld [vmem:[%s711 + $0x8] sm:$0xf]
        %v863 = vld [vmem:[%s711 + $0xc] sm:$0xf]
        %v864 = vld [vmem:[%s711 + $0x10] sm:$0xf]
        %v865 = vld [vmem:[%s711 + $0x14] sm:$0xf]
        %v866 = vld [vmem:[%s711 + $0x18] sm:$0xf]
        %v867 = vld [vmem:[%s711 + $0x1c] sm:$0xf]
        %v868 = vld [vmem:[%s711 + $0x20] sm:$0xf]
        %v869 = vld [vmem:[%s711 + $0x24] sm:$0xf]
        %v870 = vld [vmem:[%s711 + $0x28] sm:$0xf]
        %v871 = vld [vmem:[%s711 + $0x2c] sm:$0xf]
        %v872 = vld [vmem:[%s711 + $0x30] sm:$0xf]
        %v873 = vld [vmem:[%s711 + $0x34] sm:$0xf]
        %v874 = vld [vmem:[%s711 + $0x38] sm:$0xf]
        %v875 = vld [vmem:[%s711 + $0x3c] sm:$0xf]
        %v876 = vld [vmem:[%s711 + $0x40] sm:$0xf]
        %v877 = vld [vmem:[%s711 + $0x44] sm:$0xf]
        %v878 = vld [vmem:[%s711 + $0x48] sm:$0xf]
        %v879 = vld [vmem:[%s711 + $0x4c] sm:$0xf]
        %v880 = vld [vmem:[%s711 + $0x50] sm:$0xf]
        %v881 = vld [vmem:[%s711 + $0x54] sm:$0xf]
        %v882 = vld [vmem:[%s711 + $0x58] sm:$0xf]
        %v883 = vld [vmem:[%s711 + $0x5c] sm:$0xf]
        %v884 = vld [vmem:[%s711 + $0x60] sm:$0xf]
        %v885 = vld [vmem:[%s711 + $0x64] sm:$0xf]
        %v886 = vld [vmem:[%s711 + $0x68] sm:$0xf]
        %v887 = vld [vmem:[%s711 + $0x6c] sm:$0xf]
        %v888 = vld [vmem:[%s711 + $0x70] sm:$0xf]
        %v889 = vld [vmem:[%s711 + $0x74] sm:$0xf]
        %v890 = vld [vmem:[%s711 + $0x78] sm:$0xf]
        %v891 = vld [vmem:[%s711 + $0x7c] sm:$0xf]
        %v924 = vunpack.c.l.b16 %v828
        %v925 = vunpack.c.h.b16 %v828
        %v926 = vunpack.c.l.b16 %v829
        %v927 = vunpack.c.h.b16 %v829
        %v928 = vunpack.c.l.b16 %v830
        %v929 = vunpack.c.h.b16 %v830
        %v930 = vunpack.c.l.b16 %v831
        %v931 = vunpack.c.h.b16 %v831
        %v932 = vunpack.c.l.b16 %v832
        %v933 = vunpack.c.h.b16 %v832
        %v934 = vunpack.c.l.b16 %v833
        %v935 = vunpack.c.h.b16 %v833
        %v936 = vunpack.c.l.b16 %v834
        %v937 = vunpack.c.h.b16 %v834
        %v938 = vunpack.c.l.b16 %v835
        %v939 = vunpack.c.h.b16 %v835
        %v940 = vunpack.c.l.b16 %v836
        %v941 = vunpack.c.h.b16 %v836
        %v942 = vunpack.c.l.b16 %v837
        %v943 = vunpack.c.h.b16 %v837
        %v944 = vunpack.c.l.b16 %v838
        %v945 = vunpack.c.h.b16 %v838
        %v946 = vunpack.c.l.b16 %v839
        %v947 = vunpack.c.h.b16 %v839
        %v948 = vunpack.c.l.b16 %v840
        %v949 = vunpack.c.h.b16 %v840
        %v950 = vunpack.c.l.b16 %v841
        %v951 = vunpack.c.h.b16 %v841
        %v952 = vunpack.c.l.b16 %v842
        %v953 = vunpack.c.h.b16 %v842
        %v954 = vunpack.c.l.b16 %v843
        %v955 = vunpack.c.h.b16 %v843
        %v956 = vunpack.c.l.b16 %v844
        %v957 = vunpack.c.h.b16 %v844
        %v958 = vunpack.c.l.b16 %v845
        %v959 = vunpack.c.h.b16 %v845
        %v960 = vunpack.c.l.b16 %v846
        %v961 = vunpack.c.h.b16 %v846
        %v962 = vunpack.c.l.b16 %v847
        %v963 = vunpack.c.h.b16 %v847
        %v964 = vunpack.c.l.b16 %v848
        %v965 = vunpack.c.h.b16 %v848
        %v966 = vunpack.c.l.b16 %v849
        %v967 = vunpack.c.h.b16 %v849
        %v968 = vunpack.c.l.b16 %v850
        %v969 = vunpack.c.h.b16 %v850
        %v970 = vunpack.c.l.b16 %v851
        %v971 = vunpack.c.h.b16 %v851
        %v972 = vunpack.c.l.b16 %v852
        %v973 = vunpack.c.h.b16 %v852
        %v974 = vunpack.c.l.b16 %v853
        %v975 = vunpack.c.h.b16 %v853
        %v976 = vunpack.c.l.b16 %v854
        %v977 = vunpack.c.h.b16 %v854
        %v978 = vunpack.c.l.b16 %v855
        %v979 = vunpack.c.h.b16 %v855
        %v980 = vunpack.c.l.b16 %v856
        %v981 = vunpack.c.h.b16 %v856
        %v982 = vunpack.c.l.b16 %v857
        %v983 = vunpack.c.h.b16 %v857
        %v984 = vunpack.c.l.b16 %v858
        %v985 = vunpack.c.h.b16 %v858
        %v986 = vunpack.c.l.b16 %v859
        %v987 = vunpack.c.h.b16 %v859
        %v988 = vpack.c.b16 %v926, %v924
        %v989 = vpack.c.b16 %v927, %v925
        %v990 = vpack.c.b16 %v930, %v928
        %v991 = vpack.c.b16 %v931, %v929
        %v992 = vpack.c.b16 %v934, %v932
        %v993 = vpack.c.b16 %v935, %v933
        %v994 = vpack.c.b16 %v938, %v936
        %v995 = vpack.c.b16 %v939, %v937
        %v996 = vpack.c.b16 %v942, %v940
        %v997 = vpack.c.b16 %v943, %v941
        %v998 = vpack.c.b16 %v946, %v944
        %v999 = vpack.c.b16 %v947, %v945
        %v1000 = vpack.c.b16 %v950, %v948
        %v1001 = vpack.c.b16 %v951, %v949
        %v1002 = vpack.c.b16 %v954, %v952
        %v1003 = vpack.c.b16 %v955, %v953
        %v1004 = vpack.c.b16 %v958, %v956
        %v1005 = vpack.c.b16 %v959, %v957
        %v1006 = vpack.c.b16 %v962, %v960
        %v1007 = vpack.c.b16 %v963, %v961
        %v1008 = vpack.c.b16 %v966, %v964
        %v1009 = vpack.c.b16 %v967, %v965
        %v1010 = vpack.c.b16 %v970, %v968
        %v1011 = vpack.c.b16 %v971, %v969
        %v1012 = vpack.c.b16 %v974, %v972
        %v1013 = vpack.c.b16 %v975, %v973
        %v1014 = vpack.c.b16 %v978, %v976
        %v1015 = vpack.c.b16 %v979, %v977
        %v1016 = vpack.c.b16 %v982, %v980
        %v1017 = vpack.c.b16 %v983, %v981
        %v1018 = vpack.c.b16 %v986, %v984
        %v1019 = vpack.c.b16 %v987, %v985
        %v1084 = vunpack.c.l.b16 %v860
        %v1085 = vunpack.c.l.b16 %v861
        %v1086 = vunpack.c.l.b16 %v862
        %v1087 = vunpack.c.l.b16 %v863
        %v1088 = vunpack.c.l.b16 %v864
        %v1089 = vunpack.c.l.b16 %v865
        %v1090 = vunpack.c.l.b16 %v866
        %v1091 = vunpack.c.l.b16 %v867
        %v1092 = vunpack.c.l.b16 %v868
        %v1093 = vunpack.c.l.b16 %v869
        %v1094 = vunpack.c.l.b16 %v870
        %v1095 = vunpack.c.l.b16 %v871
        %v1096 = vunpack.c.l.b16 %v872
        %v1097 = vunpack.c.l.b16 %v873
        %v1098 = vunpack.c.l.b16 %v874
        %v1099 = vunpack.c.l.b16 %v875
        %v1100 = vunpack.c.l.b16 %v876
        %v1101 = vunpack.c.l.b16 %v877
        %v1102 = vunpack.c.l.b16 %v878
        %v1103 = vunpack.c.l.b16 %v879
        %v1104 = vunpack.c.l.b16 %v880
        %v1105 = vunpack.c.l.b16 %v881
        %v1106 = vunpack.c.l.b16 %v882
        %v1107 = vunpack.c.l.b16 %v883
        %v1108 = vunpack.c.l.b16 %v884
        %v1109 = vunpack.c.l.b16 %v885
        %v1110 = vunpack.c.l.b16 %v886
        %v1111 = vunpack.c.l.b16 %v887
        %v1112 = vunpack.c.l.b16 %v888
        %v1113 = vunpack.c.l.b16 %v889
        %v1114 = vunpack.c.l.b16 %v890
        %v1115 = vunpack.c.l.b16 %v891
        %v1116 = vpack.c.b16 %v1085, %v1084
        %v1117 = vpack.c.b16 %v1087, %v1086
        %v1118 = vpack.c.b16 %v1089, %v1088
        %v1119 = vpack.c.b16 %v1091, %v1090
        %v1120 = vpack.c.b16 %v1093, %v1092
        %v1121 = vpack.c.b16 %v1095, %v1094
        %v1122 = vpack.c.b16 %v1097, %v1096
        %v1123 = vpack.c.b16 %v1099, %v1098
        %v1124 = vpack.c.b16 %v1101, %v1100
        %v1125 = vpack.c.b16 %v1103, %v1102
        %v1126 = vpack.c.b16 %v1105, %v1104
        %v1127 = vpack.c.b16 %v1107, %v1106
        %v1128 = vpack.c.b16 %v1109, %v1108
        %v1129 = vpack.c.b16 %v1111, %v1110
        %v1130 = vpack.c.b16 %v1113, %v1112
        %v1131 = vpack.c.b16 %v1115, %v1114
        %1148 = vmatprep.subr.bf16.mxu0 0
        %1149 = vmatpush1.bf16.msra.mxu0 %v1123
        %1150 = vmatprep.subr.bf16.mxu0 0
        %1151 = vmatpush1.bf16.msra.mxu0 %v1122
        %1152 = vmatprep.subr.bf16.mxu0 0
        %1153 = vmatpush1.bf16.msra.mxu0 %v1121
        %1154 = vmatprep.subr.bf16.mxu0 0
        %1155 = vmatpush1.bf16.msra.mxu0 %v1120
        %1156 = vmatprep.subr.bf16.mxu0 0
        %1157 = vmatpush1.bf16.msra.mxu0 %v1119
        %1158 = vmatprep.subr.bf16.mxu0 0
        %1159 = vmatpush1.bf16.msra.mxu0 %v1118
        %1160 = vmatprep.subr.bf16.mxu0 0
        %1161 = vmatpush1.bf16.msra.mxu0 %v1117
        %1162 = vmatprep.subr.bf16.mxu0 0
        %1163 = vmatpush1.bf16.msra.mxu0 %v1116
        %1164 = vmatprep.subr.bf16.mxu0 0
        %1165 = vmatpush2.bf16.msra.mxu0 %v1131
        %1166 = vmatprep.subr.bf16.mxu0 0
        %1167 = vmatpush2.bf16.msra.mxu0 %v1130
        %1168 = vmatprep.subr.bf16.mxu0 0
        %1169 = vmatpush2.bf16.msra.mxu0 %v1129
        %1170 = vmatprep.subr.bf16.mxu0 0
        %1171 = vmatpush2.bf16.msra.mxu0 %v1128
        %1172 = vmatprep.subr.bf16.mxu0 0
        %1173 = vmatpush2.bf16.msra.mxu0 %v1127
        %1174 = vmatprep.subr.bf16.mxu0 0
        %1175 = vmatpush2.bf16.msra.mxu0 %v1126
        %1176 = vmatprep.subr.bf16.mxu0 0
        %1177 = vmatpush2.bf16.msra.mxu0 %v1125
        %1178 = vmatprep.subr.bf16.mxu0 0
        %1179 = vmatpush2.bf16.msra.mxu0 %v1124
        %1180 = vmatprep.mubr.bf16.mxu0 %v989
        %1181 = vmatmul.mubr.bf16.gmra.mxu0 %v988
        %v1182 = vpop.f32.mrf.mxu0
        %v1183 = vadd.f32 0.0, %v1182
        %v1184 = vpop.f32.mrf.mxu0
        %v1185 = vpop.f32.mrf.mxu0
        %v1186 = vadd.f32 0.0, %v1185
        %v1187 = vpop.f32.mrf.mxu0
        %1188 = vmatprep.mubr.bf16.mxu0 %v991
        %1189 = vmatmul.mubr.bf16.gmra.mxu0 %v990
        %v1190 = vpop.f32.mrf.mxu0
        %v1191 = vadd.f32 0.0, %v1190
        %v1192 = vpop.f32.mrf.mxu0
        %v1193 = vpop.f32.mrf.mxu0
        %v1194 = vadd.f32 0.0, %v1193
        %v1195 = vpop.f32.mrf.mxu0
        %1196 = vmatprep.mubr.bf16.mxu0 %v993
        %1197 = vmatmul.mubr.bf16.gmra.mxu0 %v992
        %v1198 = vpop.f32.mrf.mxu0
        %v1199 = vadd.f32 0.0, %v1198
        %v1200 = vpop.f32.mrf.mxu0
        %v1201 = vpop.f32.mrf.mxu0
        %v1202 = vadd.f32 0.0, %v1201
        %v1203 = vpop.f32.mrf.mxu0
        %1204 = vmatprep.mubr.bf16.mxu0 %v995
        %1205 = vmatmul.mubr.bf16.gmra.mxu0 %v994
        %v1206 = vpop.f32.mrf.mxu0
        %v1207 = vadd.f32 0.0, %v1206
        %v1208 = vpop.f32.mrf.mxu0
        %v1209 = vpop.f32.mrf.mxu0
        %v1210 = vadd.f32 0.0, %v1209
        %v1211 = vpop.f32.mrf.mxu0
        %1212 = vmatprep.mubr.bf16.mxu0 %v997
        %1213 = vmatmul.mubr.bf16.gmra.mxu0 %v996
        %v1214 = vpop.f32.mrf.mxu0
        %v1215 = vadd.f32 0.0, %v1214
        %v1216 = vpop.f32.mrf.mxu0
        %v1217 = vpop.f32.mrf.mxu0
        %v1218 = vadd.f32 0.0, %v1217
        %v1219 = vpop.f32.mrf.mxu0
        %1220 = vmatprep.mubr.bf16.mxu0 %v999
        %1221 = vmatmul.mubr.bf16.gmra.mxu0 %v998
        %v1222 = vpop.f32.mrf.mxu0
        %v1223 = vadd.f32 0.0, %v1222
        %v1224 = vpop.f32.mrf.mxu0
        %v1225 = vpop.f32.mrf.mxu0
        %v1226 = vadd.f32 0.0, %v1225
        %v1227 = vpop.f32.mrf.mxu0
        %1228 = vmatprep.mubr.bf16.mxu0 %v1001
        %1229 = vmatmul.mubr.bf16.gmra.mxu0 %v1000
        %v1230 = vpop.f32.mrf.mxu0
        %v1231 = vadd.f32 0.0, %v1230
        %v1232 = vpop.f32.mrf.mxu0
        %v1233 = vpop.f32.mrf.mxu0
        %v1234 = vadd.f32 0.0, %v1233
        %v1235 = vpop.f32.mrf.mxu0
        %1236 = vmatprep.mubr.bf16.mxu0 %v1003
        %1237 = vmatmul.mubr.bf16.gmra.mxu0 %v1002
        %v1238 = vpop.f32.mrf.mxu0
        %v1239 = vadd.f32 0.0, %v1238
        %v1240 = vpop.f32.mrf.mxu0
        %v1241 = vpop.f32.mrf.mxu0
        %v1242 = vadd.f32 0.0, %v1241
        %v1243 = vpop.f32.mrf.mxu0
        %1244 = vmatprep.mubr.bf16.mxu0 %v1005
        %1245 = vmatmul.mubr.bf16.gmra.mxu0 %v1004
        %v1246 = vpop.f32.mrf.mxu0
        %v1247 = vadd.f32 0.0, %v1246
        %v1248 = vpop.f32.mrf.mxu0
        %v1249 = vpop.f32.mrf.mxu0
        %v1250 = vadd.f32 0.0, %v1249
        %v1251 = vpop.f32.mrf.mxu0
        %1252 = vmatprep.mubr.bf16.mxu0 %v1007
        %1253 = vmatmul.mubr.bf16.gmra.mxu0 %v1006
        %v1254 = vpop.f32.mrf.mxu0
        %v1255 = vadd.f32 0.0, %v1254
        %v1256 = vpop.f32.mrf.mxu0
        %v1257 = vpop.f32.mrf.mxu0
        %v1258 = vadd.f32 0.0, %v1257
        %v1259 = vpop.f32.mrf.mxu0
        %1260 = vmatprep.mubr.bf16.mxu0 %v1009
        %1261 = vmatmul.mubr.bf16.gmra.mxu0 %v1008
        %v1262 = vpop.f32.mrf.mxu0
        %v1263 = vadd.f32 0.0, %v1262
        %v1264 = vpop.f32.mrf.mxu0
        %v1265 = vpop.f32.mrf.mxu0
        %v1266 = vadd.f32 0.0, %v1265
        %v1267 = vpop.f32.mrf.mxu0
        %1268 = vmatprep.mubr.bf16.mxu0 %v1011
        %1269 = vmatmul.mubr.bf16.gmra.mxu0 %v1010
        %v1270 = vpop.f32.mrf.mxu0
        %v1271 = vadd.f32 0.0, %v1270
        %v1272 = vpop.f32.mrf.mxu0
        %v1273 = vpop.f32.mrf.mxu0
        %v1274 = vadd.f32 0.0, %v1273
        %v1275 = vpop.f32.mrf.mxu0
        %1276 = vmatprep.mubr.bf16.mxu0 %v1013
        %1277 = vmatmul.mubr.bf16.gmra.mxu0 %v1012
        %v1278 = vpop.f32.mrf.mxu0
        %v1279 = vadd.f32 0.0, %v1278
        %v1280 = vpop.f32.mrf.mxu0
        %v1281 = vpop.f32.mrf.mxu0
        %v1282 = vadd.f32 0.0, %v1281
        %v1283 = vpop.f32.mrf.mxu0
        %1284 = vmatprep.mubr.bf16.mxu0 %v1015
        %1285 = vmatmul.mubr.bf16.gmra.mxu0 %v1014
        %v1286 = vpop.f32.mrf.mxu0
        %v1287 = vadd.f32 0.0, %v1286
        %v1288 = vpop.f32.mrf.mxu0
        %v1289 = vpop.f32.mrf.mxu0
        %v1290 = vadd.f32 0.0, %v1289
        %v1291 = vpop.f32.mrf.mxu0
        %1292 = vmatprep.mubr.bf16.mxu0 %v1017
        %1293 = vmatmul.mubr.bf16.gmra.mxu0 %v1016
        %v1294 = vpop.f32.mrf.mxu0
        %v1295 = vadd.f32 0.0, %v1294
        %v1296 = vpop.f32.mrf.mxu0
        %v1297 = vpop.f32.mrf.mxu0
        %v1298 = vadd.f32 0.0, %v1297
        %v1299 = vpop.f32.mrf.mxu0
        %1300 = vmatprep.mubr.bf16.mxu0 %v1019
        %1301 = vmatmul.mubr.bf16.gmra.mxu0 %v1018
        %v1302 = vpop.f32.mrf.mxu0
        %v1303 = vadd.f32 0.0, %v1302
        %v1304 = vpop.f32.mrf.mxu0
        %v1305 = vpop.f32.mrf.mxu0
        %v1306 = vadd.f32 0.0, %v1305
        %v1307 = vpop.f32.mrf.mxu0
        %1308 = vdwg.mxu0
        %v1309 = vadd.f32 %v796, %v1183
        %v1310 = vadd.f32 %v797, %v1186
        %v1311 = vadd.f32 %v798, %v1191
        %v1312 = vadd.f32 %v799, %v1194
        %v1313 = vadd.f32 %v800, %v1199
        %v1314 = vadd.f32 %v801, %v1202
        %v1315 = vadd.f32 %v802, %v1207
        %v1316 = vadd.f32 %v803, %v1210
        %v1317 = vadd.f32 %v804, %v1215
        %v1318 = vadd.f32 %v805, %v1218
        %v1319 = vadd.f32 %v806, %v1223
        %v1320 = vadd.f32 %v807, %v1226
        %v1321 = vadd.f32 %v808, %v1231
        %v1322 = vadd.f32 %v809, %v1234
        %v1323 = vadd.f32 %v810, %v1239
        %v1324 = vadd.f32 %v811, %v1242
        %v1325 = vadd.f32 %v812, %v1247
        %v1326 = vadd.f32 %v813, %v1250
        %v1327 = vadd.f32 %v814, %v1255
        %v1328 = vadd.f32 %v815, %v1258
        %v1329 = vadd.f32 %v816, %v1263
        %v1330 = vadd.f32 %v817, %v1266
        %v1331 = vadd.f32 %v818, %v1271
        %v1332 = vadd.f32 %v819, %v1274
        %v1333 = vadd.f32 %v820, %v1279
        %v1334 = vadd.f32 %v821, %v1282
        %v1335 = vadd.f32 %v822, %v1287
        %v1336 = vadd.f32 %v823, %v1290
        %v1337 = vadd.f32 %v824, %v1295
        %v1338 = vadd.f32 %v825, %v1298
        %v1339 = vadd.f32 %v826, %v1303
        %v1340 = vadd.f32 %v827, %v1306
        %1341 = vst [vmem:[#allocation2] sm:$0xff] %v1309
        %1342 = vst [vmem:[#allocation2 + $0x8] sm:$0xff] %v1310
        %1343 = vst [vmem:[#allocation2 + $0x10] sm:$0xff] %v1311
        %1344 = vst [vmem:[#allocation2 + $0x18] sm:$0xff] %v1312
        %1345 = vst [vmem:[#allocation2 + $0x20] sm:$0xff] %v1313
        %1346 = vst [vmem:[#allocation2 + $0x28] sm:$0xff] %v1314
        %1347 = vst [vmem:[#allocation2 + $0x30] sm:$0xff] %v1315
        %1348 = vst [vmem:[#allocation2 + $0x38] sm:$0xff] %v1316
        %1349 = vst [vmem:[#allocation2 + $0x40] sm:$0xff] %v1317
        %1350 = vst [vmem:[#allocation2 + $0x48] sm:$0xff] %v1318
        %1351 = vst [vmem:[#allocation2 + $0x50] sm:$0xff] %v1319
        %1352 = vst [vmem:[#allocation2 + $0x58] sm:$0xff] %v1320
        %1353 = vst [vmem:[#allocation2 + $0x60] sm:$0xff] %v1321
        %1354 = vst [vmem:[#allocation2 + $0x68] sm:$0xff] %v1322
        %1355 = vst [vmem:[#allocation2 + $0x70] sm:$0xff] %v1323
        %1356 = vst [vmem:[#allocation2 + $0x78] sm:$0xff] %v1324
        %1357 = vst [vmem:[#allocation2 + $0x80] sm:$0xff] %v1325
        %1358 = vst [vmem:[#allocation2 + $0x88] sm:$0xff] %v1326
        %1359 = vst [vmem:[#allocation2 + $0x90] sm:$0xff] %v1327
        %1360 = vst [vmem:[#allocation2 + $0x98] sm:$0xff] %v1328
        %1361 = vst [vmem:[#allocation2 + $0xa0] sm:$0xff] %v1329
        %1362 = vst [vmem:[#allocation2 + $0xa8] sm:$0xff] %v1330
        %1363 = vst [vmem:[#allocation2 + $0xb0] sm:$0xff] %v1331
        %1364 = vst [vmem:[#allocation2 + $0xb8] sm:$0xff] %v1332
        %1365 = vst [vmem:[#allocation2 + $0xc0] sm:$0xff] %v1333
        %1366 = vst [vmem:[#allocation2 + $0xc8] sm:$0xff] %v1334
        %1367 = vst [vmem:[#allocation2 + $0xd0] sm:$0xff] %v1335
        %1368 = vst [vmem:[#allocation2 + $0xd8] sm:$0xff] %v1336
        %1369 = vst [vmem:[#allocation2 + $0xe0] sm:$0xff] %v1337
        %1370 = vst [vmem:[#allocation2 + $0xe8] sm:$0xff] %v1338
        %1371 = vst [vmem:[#allocation2 + $0xf0] sm:$0xff] %v1339
        %1372 = vst [vmem:[#allocation2 + $0xf8] sm:$0xff] %v1340
        %p1373 = scmp.eq.s32.totalorder %s20, 1
        // Predicated region
        $region161: #{graphsage_forward.5} parent=143 // pred_check
          %p1374 = pneg %p1373
        $region162: #{graphsage_forward.5} parent=143 // pred_check_branch
          %1376 = sbr.rel (%p1374) target = $region164
        $region163: #{graphsage_forward.5} parent=143 // pred_region
          %v1377 = vld [vmem:[#allocation2] sm:$0xff]
          %v1378 = vld [vmem:[#allocation2 + $0x8] sm:$0xff]
          %v1379 = vld [vmem:[#allocation2 + $0x10] sm:$0xff]
          %v1380 = vld [vmem:[#allocation2 + $0x18] sm:$0xff]
          %v1381 = vld [vmem:[#allocation2 + $0x20] sm:$0xff]
          %v1382 = vld [vmem:[#allocation2 + $0x28] sm:$0xff]
          %v1383 = vld [vmem:[#allocation2 + $0x30] sm:$0xff]
          %v1384 = vld [vmem:[#allocation2 + $0x38] sm:$0xff]
          %v1385 = vld [vmem:[#allocation2 + $0x40] sm:$0xff]
          %v1386 = vld [vmem:[#allocation2 + $0x48] sm:$0xff]
          %v1387 = vld [vmem:[#allocation2 + $0x50] sm:$0xff]
          %v1388 = vld [vmem:[#allocation2 + $0x58] sm:$0xff]
          %v1389 = vld [vmem:[#allocation2 + $0x60] sm:$0xff]
          %v1390 = vld [vmem:[#allocation2 + $0x68] sm:$0xff]
          %v1391 = vld [vmem:[#allocation2 + $0x70] sm:$0xff]
          %v1392 = vld [vmem:[#allocation2 + $0x78] sm:$0xff]
          %v1393 = vld [vmem:[#allocation2 + $0x80] sm:$0xff]
          %v1394 = vld [vmem:[#allocation2 + $0x88] sm:$0xff]
          %v1395 = vld [vmem:[#allocation2 + $0x90] sm:$0xff]
          %v1396 = vld [vmem:[#allocation2 + $0x98] sm:$0xff]
          %v1397 = vld [vmem:[#allocation2 + $0xa0] sm:$0xff]
          %v1398 = vld [vmem:[#allocation2 + $0xa8] sm:$0xff]
          %v1399 = vld [vmem:[#allocation2 + $0xb0] sm:$0xff]
          %v1400 = vld [vmem:[#allocation2 + $0xb8] sm:$0xff]
          %v1401 = vld [vmem:[#allocation2 + $0xc0] sm:$0xff]
          %v1402 = vld [vmem:[#allocation2 + $0xc8] sm:$0xff]
          %v1403 = vld [vmem:[#allocation2 + $0xd0] sm:$0xff]
          %v1404 = vld [vmem:[#allocation2 + $0xd8] sm:$0xff]
          %v1405 = vld [vmem:[#allocation2 + $0xe0] sm:$0xff]
          %v1406 = vld [vmem:[#allocation2 + $0xe8] sm:$0xff]
          %v1407 = vld [vmem:[#allocation2 + $0xf0] sm:$0xff]
          %v1408 = vld [vmem:[#allocation2 + $0xf8] sm:$0xff]
          %v1409 = vld [vmem:[%s718] sm:$0xf]
          %v1410 = vld [vmem:[%s718 + $0x4] sm:$0xf]
          %v1411 = vld [vmem:[%s718 + $0x8] sm:$0xf]
          %v1412 = vld [vmem:[%s718 + $0xc] sm:$0xf]
          %v1413 = vld [vmem:[%s718 + $0x10] sm:$0xf]
          %v1414 = vld [vmem:[%s718 + $0x14] sm:$0xf]
          %v1415 = vld [vmem:[%s718 + $0x18] sm:$0xf]
          %v1416 = vld [vmem:[%s718 + $0x1c] sm:$0xf]
          %v1417 = vld [vmem:[%s718 + $0x20] sm:$0xf]
          %v1418 = vld [vmem:[%s718 + $0x24] sm:$0xf]
          %v1419 = vld [vmem:[%s718 + $0x28] sm:$0xf]
          %v1420 = vld [vmem:[%s718 + $0x2c] sm:$0xf]
          %v1421 = vld [vmem:[%s718 + $0x30] sm:$0xf]
          %v1422 = vld [vmem:[%s718 + $0x34] sm:$0xf]
          %v1423 = vld [vmem:[%s718 + $0x38] sm:$0xf]
          %v1424 = vld [vmem:[%s718 + $0x3c] sm:$0xf]
          %v1425 = vld [vmem:[%s718 + $0x40] sm:$0xf]
          %v1426 = vld [vmem:[%s718 + $0x44] sm:$0xf]
          %v1427 = vld [vmem:[%s718 + $0x48] sm:$0xf]
          %v1428 = vld [vmem:[%s718 + $0x4c] sm:$0xf]
          %v1429 = vld [vmem:[%s718 + $0x50] sm:$0xf]
          %v1430 = vld [vmem:[%s718 + $0x54] sm:$0xf]
          %v1431 = vld [vmem:[%s718 + $0x58] sm:$0xf]
          %v1432 = vld [vmem:[%s718 + $0x5c] sm:$0xf]
          %v1433 = vld [vmem:[%s718 + $0x60] sm:$0xf]
          %v1434 = vld [vmem:[%s718 + $0x64] sm:$0xf]
          %v1435 = vld [vmem:[%s718 + $0x68] sm:$0xf]
          %v1436 = vld [vmem:[%s718 + $0x6c] sm:$0xf]
          %v1437 = vld [vmem:[%s718 + $0x70] sm:$0xf]
          %v1438 = vld [vmem:[%s718 + $0x74] sm:$0xf]
          %v1439 = vld [vmem:[%s718 + $0x78] sm:$0xf]
          %v1440 = vld [vmem:[%s718 + $0x7c] sm:$0xf]
          %v1441 = vunpack.c.l.bf16 %v1409
          %v1442 = vunpack.c.l.bf16 %v1410
          %v1443 = vunpack.c.l.bf16 %v1411
          %v1444 = vunpack.c.l.bf16 %v1412
          %v1445 = vunpack.c.l.bf16 %v1413
          %v1446 = vunpack.c.l.bf16 %v1414
          %v1447 = vunpack.c.l.bf16 %v1415
          %v1448 = vunpack.c.l.bf16 %v1416
          %v1449 = vunpack.c.l.bf16 %v1417
          %v1450 = vunpack.c.l.bf16 %v1418
          %v1451 = vunpack.c.l.bf16 %v1419
          %v1452 = vunpack.c.l.bf16 %v1420
          %v1453 = vunpack.c.l.bf16 %v1421
          %v1454 = vunpack.c.l.bf16 %v1422
          %v1455 = vunpack.c.l.bf16 %v1423
          %v1456 = vunpack.c.l.bf16 %v1424
          %v1457 = vunpack.c.l.bf16 %v1425
          %v1458 = vunpack.c.l.bf16 %v1426
          %v1459 = vunpack.c.l.bf16 %v1427
          %v1460 = vunpack.c.l.bf16 %v1428
          %v1461 = vunpack.c.l.bf16 %v1429
          %v1462 = vunpack.c.l.bf16 %v1430
          %v1463 = vunpack.c.l.bf16 %v1431
          %v1464 = vunpack.c.l.bf16 %v1432
          %v1465 = vunpack.c.l.bf16 %v1433
          %v1466 = vunpack.c.l.bf16 %v1434
          %v1467 = vunpack.c.l.bf16 %v1435
          %v1468 = vunpack.c.l.bf16 %v1436
          %v1469 = vunpack.c.l.bf16 %v1437
          %v1470 = vunpack.c.l.bf16 %v1438
          %v1471 = vunpack.c.l.bf16 %v1439
          %v1472 = vunpack.c.l.bf16 %v1440
          %v1473 = vadd.f32 %v1377, %v1441
          %v1474 = vadd.f32 %v1378, %v1442
          %v1475 = vadd.f32 %v1379, %v1443
          %v1476 = vadd.f32 %v1380, %v1444
          %v1477 = vadd.f32 %v1381, %v1445
          %v1478 = vadd.f32 %v1382, %v1446
          %v1479 = vadd.f32 %v1383, %v1447
          %v1480 = vadd.f32 %v1384, %v1448
          %v1481 = vadd.f32 %v1385, %v1449
          %v1482 = vadd.f32 %v1386, %v1450
          %v1483 = vadd.f32 %v1387, %v1451
          %v1484 = vadd.f32 %v1388, %v1452
          %v1485 = vadd.f32 %v1389, %v1453
          %v1486 = vadd.f32 %v1390, %v1454
          %v1487 = vadd.f32 %v1391, %v1455
          %v1488 = vadd.f32 %v1392, %v1456
          %v1489 = vadd.f32 %v1393, %v1457
          %v1490 = vadd.f32 %v1394, %v1458
          %v1491 = vadd.f32 %v1395, %v1459
          %v1492 = vadd.f32 %v1396, %v1460
          %v1493 = vadd.f32 %v1397, %v1461
          %v1494 = vadd.f32 %v1398, %v1462
          %v1495 = vadd.f32 %v1399, %v1463
          %v1496 = vadd.f32 %v1400, %v1464
          %v1497 = vadd.f32 %v1401, %v1465
          %v1498 = vadd.f32 %v1402, %v1466
          %v1499 = vadd.f32 %v1403, %v1467
          %v1500 = vadd.f32 %v1404, %v1468
          %v1501 = vadd.f32 %v1405, %v1469
          %v1502 = vadd.f32 %v1406, %v1470
          %v1503 = vadd.f32 %v1407, %v1471
          %v1504 = vadd.f32 %v1408, %v1472
          %v1505 = vld [vmem:[%s3] sm:$0x1]
          %v1507 = vlaneseq
          %v1508 = vshrl.u32 %v1507, 7
          %v1509 = vsub.s32 0, %v1508
          %v1510 = vrot.slane %v1505, %v1509
          %v1512 = vadd.f32 %v1473, %v1510
          %v1513 = vadd.f32 %v1474, %v1510
          %v1514 = vadd.f32 %v1475, %v1510
          %v1515 = vadd.f32 %v1476, %v1510
          %v1516 = vadd.f32 %v1477, %v1510
          %v1517 = vadd.f32 %v1478, %v1510
          %v1518 = vadd.f32 %v1479, %v1510
          %v1519 = vadd.f32 %v1480, %v1510
          %v1520 = vadd.f32 %v1481, %v1510
          %v1521 = vadd.f32 %v1482, %v1510
          %v1522 = vadd.f32 %v1483, %v1510
          %v1523 = vadd.f32 %v1484, %v1510
          %v1524 = vadd.f32 %v1485, %v1510
          %v1525 = vadd.f32 %v1486, %v1510
          %v1526 = vadd.f32 %v1487, %v1510
          %v1527 = vadd.f32 %v1488, %v1510
          %v1528 = vadd.f32 %v1489, %v1510
          %v1529 = vadd.f32 %v1490, %v1510
          %v1530 = vadd.f32 %v1491, %v1510
          %v1531 = vadd.f32 %v1492, %v1510
          %v1532 = vadd.f32 %v1493, %v1510
          %v1533 = vadd.f32 %v1494, %v1510
          %v1534 = vadd.f32 %v1495, %v1510
          %v1535 = vadd.f32 %v1496, %v1510
          %v1536 = vadd.f32 %v1497, %v1510
          %v1537 = vadd.f32 %v1498, %v1510
          %v1538 = vadd.f32 %v1499, %v1510
          %v1539 = vadd.f32 %v1500, %v1510
          %v1540 = vadd.f32 %v1501, %v1510
          %v1541 = vadd.f32 %v1502, %v1510
          %v1542 = vadd.f32 %v1503, %v1510
          %v1543 = vadd.f32 %v1504, %v1510
          %1544 = vst [vmem:[%s757] sm:$0xff] %v1512
          %1545 = vst [vmem:[%s757 + $0x8] sm:$0xff] %v1513
          %1546 = vst [vmem:[%s757 + $0x10] sm:$0xff] %v1514
          %1547 = vst [vmem:[%s757 + $0x18] sm:$0xff] %v1515
          %1548 = vst [vmem:[%s757 + $0x20] sm:$0xff] %v1516
          %1549 = vst [vmem:[%s757 + $0x28] sm:$0xff] %v1517
          %1550 = vst [vmem:[%s757 + $0x30] sm:$0xff] %v1518
          %1551 = vst [vmem:[%s757 + $0x38] sm:$0xff] %v1519
          %1552 = vst [vmem:[%s757 + $0x40] sm:$0xff] %v1520
          %1553 = vst [vmem:[%s757 + $0x48] sm:$0xff] %v1521
          %1554 = vst [vmem:[%s757 + $0x50] sm:$0xff] %v1522
          %1555 = vst [vmem:[%s757 + $0x58] sm:$0xff] %v1523
          %1556 = vst [vmem:[%s757 + $0x60] sm:$0xff] %v1524
          %1557 = vst [vmem:[%s757 + $0x68] sm:$0xff] %v1525
          %1558 = vst [vmem:[%s757 + $0x70] sm:$0xff] %v1526
          %1559 = vst [vmem:[%s757 + $0x78] sm:$0xff] %v1527
          %1560 = vst [vmem:[%s757 + $0x80] sm:$0xff] %v1528
          %1561 = vst [vmem:[%s757 + $0x88] sm:$0xff] %v1529
          %1562 = vst [vmem:[%s757 + $0x90] sm:$0xff] %v1530
          %1563 = vst [vmem:[%s757 + $0x98] sm:$0xff] %v1531
          %1564 = vst [vmem:[%s757 + $0xa0] sm:$0xff] %v1532
          %1565 = vst [vmem:[%s757 + $0xa8] sm:$0xff] %v1533
          %1566 = vst [vmem:[%s757 + $0xb0] sm:$0xff] %v1534
          %1567 = vst [vmem:[%s757 + $0xb8] sm:$0xff] %v1535
          %1568 = vst [vmem:[%s757 + $0xc0] sm:$0xff] %v1536
          %1569 = vst [vmem:[%s757 + $0xc8] sm:$0xff] %v1537
          %1570 = vst [vmem:[%s757 + $0xd0] sm:$0xff] %v1538
          %1571 = vst [vmem:[%s757 + $0xd8] sm:$0xff] %v1539
          %1572 = vst [vmem:[%s757 + $0xe0] sm:$0xff] %v1540
          %1573 = vst [vmem:[%s757 + $0xe8] sm:$0xff] %v1541
          %1574 = vst [vmem:[%s757 + $0xf0] sm:$0xff] %v1542
          %1575 = vst [vmem:[%s757 + $0xf8] sm:$0xff] %v1543
        $region164: #{graphsage_forward.5} parent=143 // pred_fallthru
          _
        %s1576 = smul.u32 32, %s19
        %p1577 = scmp.lt.s32.totalorder %s1576, 63
        %s1578 = scalar_select %p1577, %s1576, 63
        %s1579 = smul.addr %s1578, 8
        %s1580 = scalar_lea.vmem %s4, %s1579
        // Predicated region
        $region165: #{graphsage_forward.5} parent=143 // pred_check
          %p1581 = pneg %p146
        $region166: #{graphsage_forward.5} parent=143 // pred_check_branch
          %1583 = sbr.rel (%p1581) target = $region168
        $region167: #{graphsage_forward.5} parent=143 // pred_region
          %s1584 = smul.u32 32, %s19
        $region168: #{graphsage_forward.5} parent=143 // pred_fallthru
          _
      $region144: #{graphsage_forward.5} parent=5 // pred_fallthru
        _
      %p1585 = scmp.le.s32.totalorder 2, %s10
      // Predicated region
      $region169: #{graphsage_forward.5} parent=5 // pred_check
        %p1586 = pneg %p1585
      $region170: #{graphsage_forward.5} parent=5 // pred_check_branch
        %1588 = sbr.rel (%p1586) target = $region172
      $region171: #{graphsage_forward.5} parent=5 // pred_region
        %s1589 = ssub.s32 %s10, 2
        // Predicated region
        $region173: #{graphsage_forward.5} parent=171 // pred_check
          %p1590 = pneg %p152
        $region174: #{graphsage_forward.5} parent=171 // pred_check_branch
          %1592 = sbr.rel (%p1590) target = $region176
        $region175: #{graphsage_forward.5} parent=171 // pred_region
          %s1593 = smul.u32 32, %s21
          %p1594 = scmp.lt.s32.totalorder %s1593, 63
          %s1595 = scalar_select %p1594, %s1593, 63
          %s1596 = smul.addr %s1595, 8
          %s1597 = scalar_lea.vmem %s4, %s1596
        $region176: #{graphsage_forward.5} parent=171 // pred_fallthru
          _
      $region172: #{graphsage_forward.5} parent=5 // pred_fallthru
        _
    $region6: #{graphsage_forward.5} parent=1 // loop_footer
      %s14 = sadd.s32 1, %s10
    $region7: #{graphsage_forward.5} parent=1 // loop_footer_branch
      %9 = sbr.rel target = $region3
    $region8: #{graphsage_forward.5} parent=1 // loop_exit
      _

// kernel: graphsage_forward.4
$region0: #{graphsage_forward.4}
  #allocation0 [shape = 'u32[]', space=smem, size = 0x4, offset = 0x4, fixed_abs, tag = 'smem constant byte address 0x4 - core index']
  #allocation1 [shape = 'u32[144,128]{1,0:T(1,128)}', space=vmem, size = 0x12000, scoped, tag = 'internal scratch']
  #allocation2 [shape = 'f32[256,128]{1,0:T(8,128)}', space=vmem, size = 0x20000, scoped, tag = 'scratch operand']
  %s0 = inlined_call_operand.vmem [shape: bf16[512,512], index: 0, kind: input, shape index: {}]
  %s1 = inlined_call_operand.vmem [shape: bf16[512,256], index: 1, kind: input, shape index: {}, may-alias: {1,2}]
  %s2 = inlined_call_operand.vmem [shape: bf16[512,256], index: 2, kind: input, shape index: {}, may-alias: {1,2}]
  %s3 = inlined_call_operand.vmem [shape: f32[1,128], index: 3, kind: input, shape index: {}]
  %s4 = inlined_call_operand.vmem [shape: bf16[128,256], index: 4, kind: input, shape index: {}]
  %s5 = inlined_call_operand.vmem [shape: bf16[512,256], index: 5, kind: output, shape index: {}]
  %s6 = sld [smem:[#allocation0]]
  $region181: #{graphsage_forward.4} parent=0
    _
  %s8 = ssub.s32 1, %s6
  %s9 = scalar_select 0, %s8, %s6
  $region1: #{graphsage_forward.4} parent=0
    #allocation3 [shape = 'u8[262144]{0}', space=vmem, size = 0x40000, scoped, tag = 'input window, operand 0']
    #allocation4 [shape = 'u8[131072]{0}', space=vmem, size = 0x20000, scoped, tag = 'input window, operand 1']
    #allocation5 [shape = 'u8[131072]{0}', space=vmem, size = 0x20000, scoped, tag = 'input window, operand 2']
    loop: start=0, step=1, limit=6
    $region2: #{graphsage_forward.4} parent=1 // loop_pre_header
      _
    $region3: #{graphsage_forward.4} parent=1 // loop_header
      %s11 = sphi 0, %s15
      %p12 = scmp.ge.s32.totalorder %s11, 6
      %s18 = sphi 0, %s30
      %s19 = sphi 0, %s26
      %s20 = sphi 0, %s18
      %s21 = sphi 0, %s19
      %s22 = sphi 0, %s20
      %s23 = sphi 0, %s21
      %s35 = sphi 0, %s37
      %s38 = sphi 0, %s35
      %s39 = sphi 0, %s38
      %s55 = sphi 0, %s39
      %s61 = sphi 0, %s63
      %s64 = sphi 0, %s61
      %s65 = sphi 0, %s64
      %s81 = sphi 0, %s65
      %s87 = sphi 0, %s89
      %s90 = sphi 0, %s87
      %s91 = sphi 0, %s90
      %s107 = sphi 0, %s91
      %s111 = sphi 0, %s111
      %s113 = sphi 0, %s111
      %s114 = sphi 0, %s113
      %s128 = sphi 0, %s114
      %s132 = sphi 0, %s132
      %s134 = sphi 0, %s132
      %s135 = sphi 0, %s134
      %s149 = sphi 0, %s135
      %s155 = sphi 0, %s157
      %s158 = sphi 0, %s155
      %s159 = sphi 0, %s158
      %s175 = sphi 0, %s159
    $region4: #{graphsage_forward.4} parent=1 // loop_header_branch
      %14 = sbr.rel (%p12) target = $region8
    $region5: #{graphsage_forward.4} parent=1 // loop_body
      %s16 = ssub.s32 %s11, 1
      %s17 = ssub.s32 %s11, 2
      %s24 = sadd.s32 1, %s19
      %p25 = scmp.ge.s32.totalorder %s24, 2
      %s26 = scalar_select %p25, 0, %s24
      %s27 = sadd.s32 1, %s18
      %s28 = scalar_select %p25, %s27, %s18
      %p29 = scmp.ge.s32.totalorder %s28, 2
      %s30 = scalar_select %p29, 0, %s28
      %s31 = ssub.s32 %s18, %s30
      %s32 = ssub.s32 %s19, %s26
      %s33 = sor.u32 %s31, %s32
      %p34 = scmp.eq.s32.totalorder %s33, 0
      %s36 = sadd.s32 %s35, 1
      %s37 = scalar_select %p34, %s35, %s36
      %p40 = pneg %p34
      %p41 = scmp.eq.s32.totalorder %s11, 3
      %p42 = por %p40, %p41
      %p43 = scmp.ne.s32.totalorder %s35, %s38
      %p44 = scmp.eq.s32.totalorder %s11, 0
      %p45 = por %p43, %p44
      %p46 = scmp.ne.s32.totalorder %s35, %s38
      %p47 = scmp.eq.s32.totalorder %s16, 3
      %p48 = por %p46, %p47
      %p49 = scmp.ne.s32.totalorder %s38, %s39
      %p50 = scmp.eq.s32.totalorder %s16, 0
      %p51 = por %p49, %p50
      %p52 = scmp.ne.s32.totalorder %s38, %s39
      %p53 = scmp.eq.s32.totalorder %s17, 3
      %p54 = por %p52, %p53
      %p56 = scmp.ne.s32.totalorder %s39, %s55
      %p57 = scmp.eq.s32.totalorder %s17, 0
      %p58 = por %p56, %p57
      %s59 = ssub.s32 %s19, %s26
      %p60 = scmp.eq.s32.totalorder %s59, 0
      %s62 = sadd.s32 %s61, 1
      %s63 = scalar_select %p60, %s61, %s62
      %p66 = pneg %p60
      %p67 = scmp.eq.s32.totalorder %s11, 3
      %p68 = por %p66, %p67
      %p69 = scmp.ne.s32.totalorder %s61, %s64
      %p70 = scmp.eq.s32.totalorder %s11, 0
      %p71 = por %p69, %p70
      %p72 = scmp.ne.s32.totalorder %s61, %s64
      %p73 = scmp.eq.s32.totalorder %s16, 3
      %p74 = por %p72, %p73
      %p75 = scmp.ne.s32.totalorder %s64, %s65
      %p76 = scmp.eq.s32.totalorder %s16, 0
      %p77 = por %p75, %p76
      %p78 = scmp.ne.s32.totalorder %s64, %s65
      %p79 = scmp.eq.s32.totalorder %s17, 3
      %p80 = por %p78, %p79
      %p82 = scmp.ne.s32.totalorder %s65, %s81
      %p83 = scmp.eq.s32.totalorder %s17, 0
      %p84 = por %p82, %p83
      %s85 = ssub.s32 %s18, %s30
      %p86 = scmp.eq.s32.totalorder %s85, 0
      %s88 = sadd.s32 %s87, 1
      %s89 = scalar_select %p86, %s87, %s88
      %p92 = pneg %p86
      %p93 = scmp.eq.s32.totalorder %s11, 3
      %p94 = por %p92, %p93
      %p95 = scmp.ne.s32.totalorder %s87, %s90
      %p96 = scmp.eq.s32.totalorder %s11, 0
      %p97 = por %p95, %p96
      %p98 = scmp.ne.s32.totalorder %s87, %s90
      %p99 = scmp.eq.s32.totalorder %s16, 3
      %p100 = por %p98, %p99
      %p101 = scmp.ne.s32.totalorder %s90, %s91
      %p102 = scmp.eq.s32.totalorder %s16, 0
      %p103 = por %p101, %p102
      %p104 = scmp.ne.s32.totalorder %s90, %s91
      %p105 = scmp.eq.s32.totalorder %s17, 3
      %p106 = por %p104, %p105
      %p108 = scmp.ne.s32.totalorder %s91, %s107
      %p109 = scmp.eq.s32.totalorder %s17, 0
      %p110 = por %p108, %p109
      %s112 = sadd.s32 %s111, 1
      %p115 = scmp.eq.s32.totalorder %s11, 3
      %p116 = scmp.ne.s32.totalorder %s111, %s113
      %p117 = scmp.eq.s32.totalorder %s11, 0
      %p118 = por %p116, %p117
      %p119 = scmp.ne.s32.totalorder %s111, %s113
      %p120 = scmp.eq.s32.totalorder %s16, 3
      %p121 = por %p119, %p120
      %p122 = scmp.ne.s32.totalorder %s113, %s114
      %p123 = scmp.eq.s32.totalorder %s16, 0
      %p124 = por %p122, %p123
      %p125 = scmp.ne.s32.totalorder %s113, %s114
      %p126 = scmp.eq.s32.totalorder %s17, 3
      %p127 = por %p125, %p126
      %p129 = scmp.ne.s32.totalorder %s114, %s128
      %p130 = scmp.eq.s32.totalorder %s17, 0
      %p131 = por %p129, %p130
      %s133 = sadd.s32 %s132, 1
      %p136 = scmp.eq.s32.totalorder %s11, 3
      %p137 = scmp.ne.s32.totalorder %s132, %s134
      %p138 = scmp.eq.s32.totalorder %s11, 0
      %p139 = por %p137, %p138
      %p140 = scmp.ne.s32.totalorder %s132, %s134
      %p141 = scmp.eq.s32.totalorder %s16, 3
      %p142 = por %p140, %p141
      %p143 = scmp.ne.s32.totalorder %s134, %s135
      %p144 = scmp.eq.s32.totalorder %s16, 0
      %p145 = por %p143, %p144
      %p146 = scmp.ne.s32.totalorder %s134, %s135
      %p147 = scmp.eq.s32.totalorder %s17, 3
      %p148 = por %p146, %p147
      %p150 = scmp.ne.s32.totalorder %s135, %s149
      %p151 = scmp.eq.s32.totalorder %s17, 0
      %p152 = por %p150, %p151
      %s153 = ssub.s32 %s18, %s30
      %p154 = scmp.eq.s32.totalorder %s153, 0
      %s156 = sadd.s32 %s155, 1
      %s157 = scalar_select %p154, %s155, %s156
      %p160 = pneg %p154
      %p161 = scmp.eq.s32.totalorder %s11, 3
      %p162 = por %p160, %p161
      %p163 = scmp.ne.s32.totalorder %s155, %s158
      %p164 = scmp.eq.s32.totalorder %s11, 0
      %p165 = por %p163, %p164
      %p166 = scmp.ne.s32.totalorder %s155, %s158
      %p167 = scmp.eq.s32.totalorder %s16, 3
      %p168 = por %p166, %p167
      %p169 = scmp.ne.s32.totalorder %s158, %s159
      %p170 = scmp.eq.s32.totalorder %s16, 0
      %p171 = por %p169, %p170
      %p172 = scmp.ne.s32.totalorder %s158, %s159
      %p173 = scmp.eq.s32.totalorder %s17, 3
      %p174 = por %p172, %p173
      %p176 = scmp.ne.s32.totalorder %s159, %s175
      %p177 = scmp.eq.s32.totalorder %s17, 0
      %p178 = por %p176, %p177
      %p179 = scmp.le.s32.totalorder 1, %s11
      %p180 = scmp.lt.s32.totalorder %s11, 5
      %p181 = pnand %p179, %p180
      %p182 = pneg %p181
      // Predicated region
      $region9: #{graphsage_forward.4} parent=5 // pred_check
        _
      $region10: #{graphsage_forward.4} parent=5 // pred_check_branch
        %184 = sbr.rel (%p181) target = $region12
      $region11: #{graphsage_forward.4} parent=5 // pred_region
        %s185 = ssub.s32 %s11, 1
        // Predicated region
        $region13: #{graphsage_forward.4} parent=11 // pred_check
          %p186 = pneg %p124
        $region14: #{graphsage_forward.4} parent=11 // pred_check_branch
          %188 = sbr.rel (%p186) target = $region16
        $region15: #{graphsage_forward.4} parent=11 // pred_region
          _
        $region16: #{graphsage_forward.4} parent=11 // pred_fallthru
          _
        // Predicated region
        $region17: #{graphsage_forward.4} parent=11 // pred_check
          %p189 = pneg %p145
        $region18: #{graphsage_forward.4} parent=11 // pred_check_branch
          %191 = sbr.rel (%p189) target = $region20
        $region19: #{graphsage_forward.4} parent=11 // pred_region
          _
        $region20: #{graphsage_forward.4} parent=11 // pred_fallthru
          _
      $region12: #{graphsage_forward.4} parent=5 // pred_fallthru
        _
      %p192 = scmp.lt.s32.totalorder %s11, 4
      // Predicated region
      $region21: #{graphsage_forward.4} parent=5 // pred_check
        %p193 = pneg %p192
      $region22: #{graphsage_forward.4} parent=5 // pred_check_branch
        %195 = sbr.rel (%p193) target = $region24
      $region23: #{graphsage_forward.4} parent=5 // pred_region
        // Predicated region
        $region25: #{graphsage_forward.4} parent=23 // pred_check
          %p196 = pneg %p45
        $region26: #{graphsage_forward.4} parent=23 // pred_check_branch
          %198 = sbr.rel (%p196) target = $region28
        $region27: #{graphsage_forward.4} parent=23 // pred_region
          %s199 = sand.u32 %s35, 1
          %s200 = sand.u32 %s35, 1
          %s201 = smul.addr %s200, 256
          %s202 = scalar_lea.vmem [#allocation3], %s201
          %s203 = smul.u32 32, %s18
          %s204 = smul.u32 2, %s19
          %s205 = smul.addr %s203, 4
          %s206 = sadd.s32 %s204, %s205
          %s207 = smul.addr %s206, 4
          %s208 = scalar_lea.vmem %s0, %s207
          // Predicated region
          $region29: #{graphsage_forward.4} parent=27 // pred_check
            _
          $region30: #{graphsage_forward.4} parent=27 // pred_check_branch
            %210 = sbr.rel (0) target = $region32
          $region31: #{graphsage_forward.4} parent=27 // pred_region
            // Predicated region
            $region33: #{graphsage_forward.4} parent=31 // pred_check
              _
            $region34: #{graphsage_forward.4} parent=31 // pred_check_branch
              %212 = sbr.rel (0) target = $region36
            $region35: #{graphsage_forward.4} parent=31 // pred_region
              // Predicated region
              $region48: #{graphsage_forward.4} parent=35 // pred_check
                _
              $region49: #{graphsage_forward.4} parent=35 // pred_check_branch
                %290 = sbr.rel (0) target = $region51
              $region50: #{graphsage_forward.4} parent=35 // pred_region
                loop: start=0, step=1, limit=1
                $region52: #{graphsage_forward.4} parent=50 // loop_pre_header
                  _
                $region53: #{graphsage_forward.4} parent=50 // loop_header
                  %s292 = sphi 0, %s296
                  %p293 = scmp.ge.s32.totalorder %s292, 1
                  %s297 = sphi %s208, %s208
                  %s298 = sphi %s202, %s202
                $region54: #{graphsage_forward.4} parent=50 // loop_header_branch
                  %295 = sbr.rel (%p293) target = $region58
                $region55: #{graphsage_forward.4} parent=50 // loop_body
                  %v299 = vld [vmem:[%s297] sm:$0xff]
                  %300 = vst [vmem:[%s298] sm:$0xff] %v299
                  %v301 = vld [vmem:[%s297 + $0x10] sm:$0xff]
                  %302 = vst [vmem:[%s298 + $0x8] sm:$0xff] %v301
                  %v303 = vld [vmem:[%s297 + $0x20] sm:$0xff]
                  %304 = vst [vmem:[%s298 + $0x10] sm:$0xff] %v303
                  %v305 = vld [vmem:[%s297 + $0x30] sm:$0xff]
                  %306 = vst [vmem:[%s298 + $0x18] sm:$0xff] %v305
                  %v307 = vld [vmem:[%s297 + $0x40] sm:$0xff]
                  %308 = vst [vmem:[%s298 + $0x20] sm:$0xff] %v307
                  %v309 = vld [vmem:[%s297 + $0x50] sm:$0xff]
                  %310 = vst [vmem:[%s298 + $0x28] sm:$0xff] %v309
                  %v311 = vld [vmem:[%s297 + $0x60] sm:$0xff]
                  %312 = vst [vmem:[%s298 + $0x30] sm:$0xff] %v311
                  %v313 = vld [vmem:[%s297 + $0x70] sm:$0xff]
                  %314 = vst [vmem:[%s298 + $0x38] sm:$0xff] %v313
                  %v315 = vld [vmem:[%s297 + $0x80] sm:$0xff]
                  %316 = vst [vmem:[%s298 + $0x40] sm:$0xff] %v315
                  %v317 = vld [vmem:[%s297 + $0x90] sm:$0xff]
                  %318 = vst [vmem:[%s298 + $0x48] sm:$0xff] %v317
                  %v319 = vld [vmem:[%s297 + $0xa0] sm:$0xff]
                  %320 = vst [vmem:[%s298 + $0x50] sm:$0xff] %v319
                  %v321 = vld [vmem:[%s297 + $0xb0] sm:$0xff]
                  %322 = vst [vmem:[%s298 + $0x58] sm:$0xff] %v321
                  %v323 = vld [vmem:[%s297 + $0xc0] sm:$0xff]
                  %324 = vst [vmem:[%s298 + $0x60] sm:$0xff] %v323
                  %v325 = vld [vmem:[%s297 + $0xd0] sm:$0xff]
                  %326 = vst [vmem:[%s298 + $0x68] sm:$0xff] %v325
                  %v327 = vld [vmem:[%s297 + $0xe0] sm:$0xff]
                  %328 = vst [vmem:[%s298 + $0x70] sm:$0xff] %v327
                  %v329 = vld [vmem:[%s297 + $0xf0] sm:$0xff]
                  %330 = vst [vmem:[%s298 + $0x78] sm:$0xff] %v329
                  %v331 = vld [vmem:[%s297 + $0x100] sm:$0xff]
                  %332 = vst [vmem:[%s298 + $0x80] sm:$0xff] %v331
                  %v333 = vld [vmem:[%s297 + $0x110] sm:$0xff]
                  %334 = vst [vmem:[%s298 + $0x88] sm:$0xff] %v333
                  %v335 = vld [vmem:[%s297 + $0x120] sm:$0xff]
                  %336 = vst [vmem:[%s298 + $0x90] sm:$0xff] %v335
                  %v337 = vld [vmem:[%s297 + $0x130] sm:$0xff]
                  %338 = vst [vmem:[%s298 + $0x98] sm:$0xff] %v337
                  %v339 = vld [vmem:[%s297 + $0x140] sm:$0xff]
                  %340 = vst [vmem:[%s298 + $0xa0] sm:$0xff] %v339
                  %v341 = vld [vmem:[%s297 + $0x150] sm:$0xff]
                  %342 = vst [vmem:[%s298 + $0xa8] sm:$0xff] %v341
                  %v343 = vld [vmem:[%s297 + $0x160] sm:$0xff]
                  %344 = vst [vmem:[%s298 + $0xb0] sm:$0xff] %v343
                  %v345 = vld [vmem:[%s297 + $0x170] sm:$0xff]
                  %346 = vst [vmem:[%s298 + $0xb8] sm:$0xff] %v345
                  %v347 = vld [vmem:[%s297 + $0x180] sm:$0xff]
                  %348 = vst [vmem:[%s298 + $0xc0] sm:$0xff] %v347
                  %v349 = vld [vmem:[%s297 + $0x190] sm:$0xff]
                  %350 = vst [vmem:[%s298 + $0xc8] sm:$0xff] %v349
                  %v351 = vld [vmem:[%s297 + $0x1a0] sm:$0xff]
                  %352 = vst [vmem:[%s298 + $0xd0] sm:$0xff] %v351
                  %v353 = vld [vmem:[%s297 + $0x1b0] sm:$0xff]
                  %354 = vst [vmem:[%s298 + $0xd8] sm:$0xff] %v353
                  %v355 = vld [vmem:[%s297 + $0x1c0] sm:$0xff]
                  %356 = vst [vmem:[%s298 + $0xe0] sm:$0xff] %v355
                  %v357 = vld [vmem:[%s297 + $0x1d0] sm:$0xff]
                  %358 = vst [vmem:[%s298 + $0xe8] sm:$0xff] %v357
                  %v359 = vld [vmem:[%s297 + $0x1e0] sm:$0xff]
                  %360 = vst [vmem:[%s298 + $0xf0] sm:$0xff] %v359
                  %v361 = vld [vmem:[%s297 + $0x1f0] sm:$0xff]
                  %362 = vst [vmem:[%s298 + $0xf8] sm:$0xff] %v361
                $region56: #{graphsage_forward.4} parent=50 // loop_footer
                  %s296 = sadd.s32 1, %s292
                $region57: #{graphsage_forward.4} parent=50 // loop_footer_branch
                  %291 = sbr.rel target = $region53
                $region58: #{graphsage_forward.4} parent=50 // loop_exit
                  _
              $region51: #{graphsage_forward.4} parent=35 // pred_fallthru
                _
              // Predicated region
              $region59: #{graphsage_forward.4} parent=35 // pred_check
                _
              $region60: #{graphsage_forward.4} parent=35 // pred_check_branch
                %364 = sbr.rel target = $region62
              $region61: #{graphsage_forward.4} parent=35 // pred_region
                _
              $region62: #{graphsage_forward.4} parent=35 // pred_fallthru
                _
            $region36: #{graphsage_forward.4} parent=31 // pred_fallthru
              _
            // Predicated region
            $region37: #{graphsage_forward.4} parent=31 // pred_check
              _
            $region38: #{graphsage_forward.4} parent=31 // pred_check_branch
              %214 = sbr.rel target = $region40
            $region39: #{graphsage_forward.4} parent=31 // pred_region
              %s216 = ssub.s32 256, 1
              loop: start=0, step=1, limit=1
              $region41: #{graphsage_forward.4} parent=39 // loop_pre_header
                _
              $region42: #{graphsage_forward.4} parent=39 // loop_header
                %s218 = sphi 0, %s222
                %p219 = scmp.ge.s32.totalorder %s218, 1
                %s223 = sphi %s208, %s208
                %s224 = sphi %s202, %s202
              $region43: #{graphsage_forward.4} parent=39 // loop_header_branch
                %221 = sbr.rel (%p219) target = $region47
              $region44: #{graphsage_forward.4} parent=39 // loop_body
                %v225 = vld [vmem:[%s223] sm:%s216]
                %226 = vst [vmem:[%s224] sm:%s216] %v225
                %v227 = vld [vmem:[%s223 + $0x10] sm:%s216]
                %228 = vst [vmem:[%s224 + $0x8] sm:%s216] %v227
                %v229 = vld [vmem:[%s223 + $0x20] sm:%s216]
                %230 = vst [vmem:[%s224 + $0x10] sm:%s216] %v229
                %v231 = vld [vmem:[%s223 + $0x30] sm:%s216]
                %232 = vst [vmem:[%s224 + $0x18] sm:%s216] %v231
                %v233 = vld [vmem:[%s223 + $0x40] sm:%s216]
                %234 = vst [vmem:[%s224 + $0x20] sm:%s216] %v233
                %v235 = vld [vmem:[%s223 + $0x50] sm:%s216]
                %236 = vst [vmem:[%s224 + $0x28] sm:%s216] %v235
                %v237 = vld [vmem:[%s223 + $0x60] sm:%s216]
                %238 = vst [vmem:[%s224 + $0x30] sm:%s216] %v237
                %v239 = vld [vmem:[%s223 + $0x70] sm:%s216]
                %240 = vst [vmem:[%s224 + $0x38] sm:%s216] %v239
                %v241 = vld [vmem:[%s223 + $0x80] sm:%s216]
                %242 = vst [vmem:[%s224 + $0x40] sm:%s216] %v241
                %v243 = vld [vmem:[%s223 + $0x90] sm:%s216]
                %244 = vst [vmem:[%s224 + $0x48] sm:%s216] %v243
                %v245 = vld [vmem:[%s223 + $0xa0] sm:%s216]
                %246 = vst [vmem:[%s224 + $0x50] sm:%s216] %v245
                %v247 = vld [vmem:[%s223 + $0xb0] sm:%s216]
                %248 = vst [vmem:[%s224 + $0x58] sm:%s216] %v247
                %v249 = vld [vmem:[%s223 + $0xc0] sm:%s216]
                %250 = vst [vmem:[%s224 + $0x60] sm:%s216] %v249
                %v251 = vld [vmem:[%s223 + $0xd0] sm:%s216]
                %252 = vst [vmem:[%s224 + $0x68] sm:%s216] %v251
                %v253 = vld [vmem:[%s223 + $0xe0] sm:%s216]
                %254 = vst [vmem:[%s224 + $0x70] sm:%s216] %v253
                %v255 = vld [vmem:[%s223 + $0xf0] sm:%s216]
                %256 = vst [vmem:[%s224 + $0x78] sm:%s216] %v255
                %v257 = vld [vmem:[%s223 + $0x100] sm:%s216]
                %258 = vst [vmem:[%s224 + $0x80] sm:%s216] %v257
                %v259 = vld [vmem:[%s223 + $0x110] sm:%s216]
                %260 = vst [vmem:[%s224 + $0x88] sm:%s216] %v259
                %v261 = vld [vmem:[%s223 + $0x120] sm:%s216]
                %262 = vst [vmem:[%s224 + $0x90] sm:%s216] %v261
                %v263 = vld [vmem:[%s223 + $0x130] sm:%s216]
                %264 = vst [vmem:[%s224 + $0x98] sm:%s216] %v263
                %v265 = vld [vmem:[%s223 + $0x140] sm:%s216]
                %266 = vst [vmem:[%s224 + $0xa0] sm:%s216] %v265
                %v267 = vld [vmem:[%s223 + $0x150] sm:%s216]
                %268 = vst [vmem:[%s224 + $0xa8] sm:%s216] %v267
                %v269 = vld [vmem:[%s223 + $0x160] sm:%s216]
                %270 = vst [vmem:[%s224 + $0xb0] sm:%s216] %v269
                %v271 = vld [vmem:[%s223 + $0x170] sm:%s216]
                %272 = vst [vmem:[%s224 + $0xb8] sm:%s216] %v271
                %v273 = vld [vmem:[%s223 + $0x180] sm:%s216]
                %274 = vst [vmem:[%s224 + $0xc0] sm:%s216] %v273
                %v275 = vld [vmem:[%s223 + $0x190] sm:%s216]
                %276 = vst [vmem:[%s224 + $0xc8] sm:%s216] %v275
                %v277 = vld [vmem:[%s223 + $0x1a0] sm:%s216]
                %278 = vst [vmem:[%s224 + $0xd0] sm:%s216] %v277
                %v279 = vld [vmem:[%s223 + $0x1b0] sm:%s216]
                %280 = vst [vmem:[%s224 + $0xd8] sm:%s216] %v279
                %v281 = vld [vmem:[%s223 + $0x1c0] sm:%s216]
                %282 = vst [vmem:[%s224 + $0xe0] sm:%s216] %v281
                %v283 = vld [vmem:[%s223 + $0x1d0] sm:%s216]
                %284 = vst [vmem:[%s224 + $0xe8] sm:%s216] %v283
                %v285 = vld [vmem:[%s223 + $0x1e0] sm:%s216]
                %286 = vst [vmem:[%s224 + $0xf0] sm:%s216] %v285
                %v287 = vld [vmem:[%s223 + $0x1f0] sm:%s216]
                %288 = vst [vmem:[%s224 + $0xf8] sm:%s216] %v287
              $region45: #{graphsage_forward.4} parent=39 // loop_footer
                %s222 = sadd.s32 1, %s218
              $region46: #{graphsage_forward.4} parent=39 // loop_footer_branch
                %217 = sbr.rel target = $region42
              $region47: #{graphsage_forward.4} parent=39 // loop_exit
                _
            $region40: #{graphsage_forward.4} parent=31 // pred_fallthru
              _
          $region32: #{graphsage_forward.4} parent=27 // pred_fallthru
            _
          %365 = vnop
        $region28: #{graphsage_forward.4} parent=23 // pred_fallthru
          _
        // Predicated region
        $region63: #{graphsage_forward.4} parent=23 // pred_check
          %p366 = pneg %p71
        $region64: #{graphsage_forward.4} parent=23 // pred_check_branch
          %368 = sbr.rel (%p366) target = $region66
        $region65: #{graphsage_forward.4} parent=23 // pred_region
          %s369 = sand.u32 %s61, 1
          %s370 = sand.u32 %s61, 1
          %s371 = smul.addr %s370, 128
          %s372 = scalar_lea.vmem [#allocation4], %s371
          %s373 = smul.u32 32, %s19
          %s374 = smul.addr %s373, 2
          %s375 = smul.addr %s374, 4
          %s376 = scalar_lea.vmem %s1, %s375
          // Predicated region
          $region67: #{graphsage_forward.4} parent=65 // pred_check
            _
          $region68: #{graphsage_forward.4} parent=65 // pred_check_branch
            %378 = sbr.rel (0) target = $region70
          $region69: #{graphsage_forward.4} parent=65 // pred_region
            // Predicated region
            $region71: #{graphsage_forward.4} parent=69 // pred_check
              _
            $region72: #{graphsage_forward.4} parent=69 // pred_check_branch
              %380 = sbr.rel target = $region74
            $region73: #{graphsage_forward.4} parent=69 // pred_region
              // Predicated region
              $region86: #{graphsage_forward.4} parent=73 // pred_check
                _
              $region87: #{graphsage_forward.4} parent=73 // pred_check_branch
                %458 = sbr.rel (0) target = $region89
              $region88: #{graphsage_forward.4} parent=73 // pred_region
                loop: start=0, step=1, limit=1
                $region90: #{graphsage_forward.4} parent=88 // loop_pre_header
                  _
                $region91: #{graphsage_forward.4} parent=88 // loop_header
                  %s460 = sphi 0, %s464
                  %p461 = scmp.ge.s32.totalorder %s460, 1
                  %s465 = sphi %s376, %s376
                  %s466 = sphi %s372, %s372
                $region92: #{graphsage_forward.4} parent=88 // loop_header_branch
                  %463 = sbr.rel (%p461) target = $region96
                $region93: #{graphsage_forward.4} parent=88 // loop_body
                  _
                $region94: #{graphsage_forward.4} parent=88 // loop_footer
                  %s464 = sadd.s32 1, %s460
                $region95: #{graphsage_forward.4} parent=88 // loop_footer_branch
                  %459 = sbr.rel target = $region91
                $region96: #{graphsage_forward.4} parent=88 // loop_exit
                  _
                %s468 = ssub.s32 16, 1
                loop: start=0, step=1, limit=1
                $region97: #{graphsage_forward.4} parent=88 // loop_pre_header
                  _
                $region98: #{graphsage_forward.4} parent=88 // loop_header
                  %s470 = sphi 0, %s474
                  %p471 = scmp.ge.s32.totalorder %s470, 1
                  %s475 = sphi %s376, %s376
                  %s476 = sphi %s372, %s372
                $region99: #{graphsage_forward.4} parent=88 // loop_header_branch
                  %473 = sbr.rel (%p471) target = $region103
                $region100: #{graphsage_forward.4} parent=88 // loop_body
                  %v477 = vld [vmem:[%s475] sm:%s468]
                  %478 = vst [vmem:[%s476] sm:%s468] %v477
                  %v479 = vld [vmem:[%s475 + $0x8] sm:%s468]
                  %480 = vst [vmem:[%s476 + $0x4] sm:%s468] %v479
                  %v481 = vld [vmem:[%s475 + $0x10] sm:%s468]
                  %482 = vst [vmem:[%s476 + $0x8] sm:%s468] %v481
                  %v483 = vld [vmem:[%s475 + $0x18] sm:%s468]
                  %484 = vst [vmem:[%s476 + $0xc] sm:%s468] %v483
                  %v485 = vld [vmem:[%s475 + $0x20] sm:%s468]
                  %486 = vst [vmem:[%s476 + $0x10] sm:%s468] %v485
                  %v487 = vld [vmem:[%s475 + $0x28] sm:%s468]
                  %488 = vst [vmem:[%s476 + $0x14] sm:%s468] %v487
                  %v489 = vld [vmem:[%s475 + $0x30] sm:%s468]
                  %490 = vst [vmem:[%s476 + $0x18] sm:%s468] %v489
                  %v491 = vld [vmem:[%s475 + $0x38] sm:%s468]
                  %492 = vst [vmem:[%s476 + $0x1c] sm:%s468] %v491
                  %v493 = vld [vmem:[%s475 + $0x40] sm:%s468]
                  %494 = vst [vmem:[%s476 + $0x20] sm:%s468] %v493
                  %v495 = vld [vmem:[%s475 + $0x48] sm:%s468]
                  %496 = vst [vmem:[%s476 + $0x24] sm:%s468] %v495
                  %v497 = vld [vmem:[%s475 + $0x50] sm:%s468]
                  %498 = vst [vmem:[%s476 + $0x28] sm:%s468] %v497
                  %v499 = vld [vmem:[%s475 + $0x58] sm:%s468]
                  %500 = vst [vmem:[%s476 + $0x2c] sm:%s468] %v499
                  %v501 = vld [vmem:[%s475 + $0x60] sm:%s468]
                  %502 = vst [vmem:[%s476 + $0x30] sm:%s468] %v501
                  %v503 = vld [vmem:[%s475 + $0x68] sm:%s468]
                  %504 = vst [vmem:[%s476 + $0x34] sm:%s468] %v503
                  %v505 = vld [vmem:[%s475 + $0x70] sm:%s468]
                  %506 = vst [vmem:[%s476 + $0x38] sm:%s468] %v505
                  %v507 = vld [vmem:[%s475 + $0x78] sm:%s468]
                  %508 = vst [vmem:[%s476 + $0x3c] sm:%s468] %v507
                  %v509 = vld [vmem:[%s475 + $0x80] sm:%s468]
                  %510 = vst [vmem:[%s476 + $0x40] sm:%s468] %v509
                  %v511 = vld [vmem:[%s475 + $0x88] sm:%s468]
                  %512 = vst [vmem:[%s476 + $0x44] sm:%s468] %v511
                  %v513 = vld [vmem:[%s475 + $0x90] sm:%s468]
                  %514 = vst [vmem:[%s476 + $0x48] sm:%s468] %v513
                  %v515 = vld [vmem:[%s475 + $0x98] sm:%s468]
                  %516 = vst [vmem:[%s476 + $0x4c] sm:%s468] %v515
                  %v517 = vld [vmem:[%s475 + $0xa0] sm:%s468]
                  %518 = vst [vmem:[%s476 + $0x50] sm:%s468] %v517
                  %v519 = vld [vmem:[%s475 + $0xa8] sm:%s468]
                  %520 = vst [vmem:[%s476 + $0x54] sm:%s468] %v519
                  %v521 = vld [vmem:[%s475 + $0xb0] sm:%s468]
                  %522 = vst [vmem:[%s476 + $0x58] sm:%s468] %v521
                  %v523 = vld [vmem:[%s475 + $0xb8] sm:%s468]
                  %524 = vst [vmem:[%s476 + $0x5c] sm:%s468] %v523
                  %v525 = vld [vmem:[%s475 + $0xc0] sm:%s468]
                  %526 = vst [vmem:[%s476 + $0x60] sm:%s468] %v525
                  %v527 = vld [vmem:[%s475 + $0xc8] sm:%s468]
                  %528 = vst [vmem:[%s476 + $0x64] sm:%s468] %v527
                  %v529 = vld [vmem:[%s475 + $0xd0] sm:%s468]
                  %530 = vst [vmem:[%s476 + $0x68] sm:%s468] %v529
                  %v531 = vld [vmem:[%s475 + $0xd8] sm:%s468]
                  %532 = vst [vmem:[%s476 + $0x6c] sm:%s468] %v531
                  %v533 = vld [vmem:[%s475 + $0xe0] sm:%s468]
                  %534 = vst [vmem:[%s476 + $0x70] sm:%s468] %v533
                  %v535 = vld [vmem:[%s475 + $0xe8] sm:%s468]
                  %536 = vst [vmem:[%s476 + $0x74] sm:%s468] %v535
                  %v537 = vld [vmem:[%s475 + $0xf0] sm:%s468]
                  %538 = vst [vmem:[%s476 + $0x78] sm:%s468] %v537
                  %v539 = vld [vmem:[%s475 + $0xf8] sm:%s468]
                  %540 = vst [vmem:[%s476 + $0x7c] sm:%s468] %v539
                $region101: #{graphsage_forward.4} parent=88 // loop_footer
                  %s474 = sadd.s32 1, %s470
                $region102: #{graphsage_forward.4} parent=88 // loop_footer_branch
                  %469 = sbr.rel target = $region98
                $region103: #{graphsage_forward.4} parent=88 // loop_exit
                  _
              $region89: #{graphsage_forward.4} parent=73 // pred_fallthru
                _
            $region74: #{graphsage_forward.4} parent=69 // pred_fallthru
              _
            // Predicated region
            $region75: #{graphsage_forward.4} parent=69 // pred_check
              _
            $region76: #{graphsage_forward.4} parent=69 // pred_check_branch
              %382 = sbr.rel (0) target = $region78
            $region77: #{graphsage_forward.4} parent=69 // pred_region
              %s384 = ssub.s32 16, 1
              loop: start=0, step=1, limit=1
              $region79: #{graphsage_forward.4} parent=77 // loop_pre_header
                _
              $region80: #{graphsage_forward.4} parent=77 // loop_header
                %s386 = sphi 0, %s390
                %p387 = scmp.ge.s32.totalorder %s386, 1
                %s391 = sphi %s376, %s376
                %s392 = sphi %s372, %s372
              $region81: #{graphsage_forward.4} parent=77 // loop_header_branch
                %389 = sbr.rel (%p387) target = $region85
              $region82: #{graphsage_forward.4} parent=77 // loop_body
                %v393 = vld [vmem:[%s391] sm:%s384]
                %394 = vst [vmem:[%s392] sm:%s384] %v393
                %v395 = vld [vmem:[%s391 + $0x8] sm:%s384]
                %396 = vst [vmem:[%s392 + $0x4] sm:%s384] %v395
                %v397 = vld [vmem:[%s391 + $0x10] sm:%s384]
                %398 = vst [vmem:[%s392 + $0x8] sm:%s384] %v397
                %v399 = vld [vmem:[%s391 + $0x18] sm:%s384]
                %400 = vst [vmem:[%s392 + $0xc] sm:%s384] %v399
                %v401 = vld [vmem:[%s391 + $0x20] sm:%s384]
                %402 = vst [vmem:[%s392 + $0x10] sm:%s384] %v401
                %v403 = vld [vmem:[%s391 + $0x28] sm:%s384]
                %404 = vst [vmem:[%s392 + $0x14] sm:%s384] %v403
                %v405 = vld [vmem:[%s391 + $0x30] sm:%s384]
                %406 = vst [vmem:[%s392 + $0x18] sm:%s384] %v405
                %v407 = vld [vmem:[%s391 + $0x38] sm:%s384]
                %408 = vst [vmem:[%s392 + $0x1c] sm:%s384] %v407
                %v409 = vld [vmem:[%s391 + $0x40] sm:%s384]
                %410 = vst [vmem:[%s392 + $0x20] sm:%s384] %v409
                %v411 = vld [vmem:[%s391 + $0x48] sm:%s384]
                %412 = vst [vmem:[%s392 + $0x24] sm:%s384] %v411
                %v413 = vld [vmem:[%s391 + $0x50] sm:%s384]
                %414 = vst [vmem:[%s392 + $0x28] sm:%s384] %v413
                %v415 = vld [vmem:[%s391 + $0x58] sm:%s384]
                %416 = vst [vmem:[%s392 + $0x2c] sm:%s384] %v415
                %v417 = vld [vmem:[%s391 + $0x60] sm:%s384]
                %418 = vst [vmem:[%s392 + $0x30] sm:%s384] %v417
                %v419 = vld [vmem:[%s391 + $0x68] sm:%s384]
                %420 = vst [vmem:[%s392 + $0x34] sm:%s384] %v419
                %v421 = vld [vmem:[%s391 + $0x70] sm:%s384]
                %422 = vst [vmem:[%s392 + $0x38] sm:%s384] %v421
                %v423 = vld [vmem:[%s391 + $0x78] sm:%s384]
                %424 = vst [vmem:[%s392 + $0x3c] sm:%s384] %v423
                %v425 = vld [vmem:[%s391 + $0x80] sm:%s384]
                %426 = vst [vmem:[%s392 + $0x40] sm:%s384] %v425
                %v427 = vld [vmem:[%s391 + $0x88] sm:%s384]
                %428 = vst [vmem:[%s392 + $0x44] sm:%s384] %v427
                %v429 = vld [vmem:[%s391 + $0x90] sm:%s384]
                %430 = vst [vmem:[%s392 + $0x48] sm:%s384] %v429
                %v431 = vld [vmem:[%s391 + $0x98] sm:%s384]
                %432 = vst [vmem:[%s392 + $0x4c] sm:%s384] %v431
                %v433 = vld [vmem:[%s391 + $0xa0] sm:%s384]
                %434 = vst [vmem:[%s392 + $0x50] sm:%s384] %v433
                %v435 = vld [vmem:[%s391 + $0xa8] sm:%s384]
                %436 = vst [vmem:[%s392 + $0x54] sm:%s384] %v435
                %v437 = vld [vmem:[%s391 + $0xb0] sm:%s384]
                %438 = vst [vmem:[%s392 + $0x58] sm:%s384] %v437
                %v439 = vld [vmem:[%s391 + $0xb8] sm:%s384]
                %440 = vst [vmem:[%s392 + $0x5c] sm:%s384] %v439
                %v441 = vld [vmem:[%s391 + $0xc0] sm:%s384]
                %442 = vst [vmem:[%s392 + $0x60] sm:%s384] %v441
                %v443 = vld [vmem:[%s391 + $0xc8] sm:%s384]
                %444 = vst [vmem:[%s392 + $0x64] sm:%s384] %v443
                %v445 = vld [vmem:[%s391 + $0xd0] sm:%s384]
                %446 = vst [vmem:[%s392 + $0x68] sm:%s384] %v445
                %v447 = vld [vmem:[%s391 + $0xd8] sm:%s384]
                %448 = vst [vmem:[%s392 + $0x6c] sm:%s384] %v447
                %v449 = vld [vmem:[%s391 + $0xe0] sm:%s384]
                %450 = vst [vmem:[%s392 + $0x70] sm:%s384] %v449
                %v451 = vld [vmem:[%s391 + $0xe8] sm:%s384]
                %452 = vst [vmem:[%s392 + $0x74] sm:%s384] %v451
                %v453 = vld [vmem:[%s391 + $0xf0] sm:%s384]
                %454 = vst [vmem:[%s392 + $0x78] sm:%s384] %v453
                %v455 = vld [vmem:[%s391 + $0xf8] sm:%s384]
                %456 = vst [vmem:[%s392 + $0x7c] sm:%s384] %v455
              $region83: #{graphsage_forward.4} parent=77 // loop_footer
                %s390 = sadd.s32 1, %s386
              $region84: #{graphsage_forward.4} parent=77 // loop_footer_branch
                %385 = sbr.rel target = $region80
              $region85: #{graphsage_forward.4} parent=77 // loop_exit
                _
            $region78: #{graphsage_forward.4} parent=69 // pred_fallthru
              _
          $region70: #{graphsage_forward.4} parent=65 // pred_fallthru
            _
          %541 = vnop
        $region66: #{graphsage_forward.4} parent=23 // pred_fallthru
          _
        // Predicated region
        $region104: #{graphsage_forward.4} parent=23 // pred_check
          %p542 = pneg %p97
        $region105: #{graphsage_forward.4} parent=23 // pred_check_branch
          %544 = sbr.rel (%p542) target = $region107
        $region106: #{graphsage_forward.4} parent=23 // pred_region
          %s545 = sand.u32 %s87, 1
          %s546 = sand.u32 %s87, 1
          %s547 = smul.addr %s546, 128
          %s548 = scalar_lea.vmem [#allocation5], %s547
          %s549 = smul.u32 32, %s18
          %s550 = smul.addr %s549, 2
          %s551 = sadd.s32 1, %s550
          %s552 = smul.addr %s551, 4
          %s553 = scalar_lea.vmem %s2, %s552
          // Predicated region
          $region108: #{graphsage_forward.4} parent=106 // pred_check
            _
          $region109: #{graphsage_forward.4} parent=106 // pred_check_branch
            %555 = sbr.rel (0) target = $region111
          $region110: #{graphsage_forward.4} parent=106 // pred_region
            // Predicated region
            $region112: #{graphsage_forward.4} parent=110 // pred_check
              _
            $region113: #{graphsage_forward.4} parent=110 // pred_check_branch
              %557 = sbr.rel target = $region115
            $region114: #{graphsage_forward.4} parent=110 // pred_region
              // Predicated region
              $region127: #{graphsage_forward.4} parent=114 // pred_check
                _
              $region128: #{graphsage_forward.4} parent=114 // pred_check_branch
                %635 = sbr.rel (0) target = $region130
              $region129: #{graphsage_forward.4} parent=114 // pred_region
                loop: start=0, step=1, limit=1
                $region131: #{graphsage_forward.4} parent=129 // loop_pre_header
                  _
                $region132: #{graphsage_forward.4} parent=129 // loop_header
                  %s637 = sphi 0, %s641
                  %p638 = scmp.ge.s32.totalorder %s637, 1
                  %s642 = sphi %s553, %s553
                  %s643 = sphi %s548, %s548
                $region133: #{graphsage_forward.4} parent=129 // loop_header_branch
                  %640 = sbr.rel (%p638) target = $region137
                $region134: #{graphsage_forward.4} parent=129 // loop_body
                  _
                $region135: #{graphsage_forward.4} parent=129 // loop_footer
                  %s641 = sadd.s32 1, %s637
                $region136: #{graphsage_forward.4} parent=129 // loop_footer_branch
                  %636 = sbr.rel target = $region132
                $region137: #{graphsage_forward.4} parent=129 // loop_exit
                  _
                %s645 = ssub.s32 16, 1
                loop: start=0, step=1, limit=1
                $region138: #{graphsage_forward.4} parent=129 // loop_pre_header
                  _
                $region139: #{graphsage_forward.4} parent=129 // loop_header
                  %s647 = sphi 0, %s651
                  %p648 = scmp.ge.s32.totalorder %s647, 1
                  %s652 = sphi %s553, %s553
                  %s653 = sphi %s548, %s548
                $region140: #{graphsage_forward.4} parent=129 // loop_header_branch
                  %650 = sbr.rel (%p648) target = $region144
                $region141: #{graphsage_forward.4} parent=129 // loop_body
                  %v654 = vld [vmem:[%s652] sm:%s645]
                  %655 = vst [vmem:[%s653] sm:%s645] %v654
                  %v656 = vld [vmem:[%s652 + $0x8] sm:%s645]
                  %657 = vst [vmem:[%s653 + $0x4] sm:%s645] %v656
                  %v658 = vld [vmem:[%s652 + $0x10] sm:%s645]
                  %659 = vst [vmem:[%s653 + $0x8] sm:%s645] %v658
                  %v660 = vld [vmem:[%s652 + $0x18] sm:%s645]
                  %661 = vst [vmem:[%s653 + $0xc] sm:%s645] %v660
                  %v662 = vld [vmem:[%s652 + $0x20] sm:%s645]
                  %663 = vst [vmem:[%s653 + $0x10] sm:%s645] %v662
                  %v664 = vld [vmem:[%s652 + $0x28] sm:%s645]
                  %665 = vst [vmem:[%s653 + $0x14] sm:%s645] %v664
                  %v666 = vld [vmem:[%s652 + $0x30] sm:%s645]
                  %667 = vst [vmem:[%s653 + $0x18] sm:%s645] %v666
                  %v668 = vld [vmem:[%s652 + $0x38] sm:%s645]
                  %669 = vst [vmem:[%s653 + $0x1c] sm:%s645] %v668
                  %v670 = vld [vmem:[%s652 + $0x40] sm:%s645]
                  %671 = vst [vmem:[%s653 + $0x20] sm:%s645] %v670
                  %v672 = vld [vmem:[%s652 + $0x48] sm:%s645]
                  %673 = vst [vmem:[%s653 + $0x24] sm:%s645] %v672
                  %v674 = vld [vmem:[%s652 + $0x50] sm:%s645]
                  %675 = vst [vmem:[%s653 + $0x28] sm:%s645] %v674
                  %v676 = vld [vmem:[%s652 + $0x58] sm:%s645]
                  %677 = vst [vmem:[%s653 + $0x2c] sm:%s645] %v676
                  %v678 = vld [vmem:[%s652 + $0x60] sm:%s645]
                  %679 = vst [vmem:[%s653 + $0x30] sm:%s645] %v678
                  %v680 = vld [vmem:[%s652 + $0x68] sm:%s645]
                  %681 = vst [vmem:[%s653 + $0x34] sm:%s645] %v680
                  %v682 = vld [vmem:[%s652 + $0x70] sm:%s645]
                  %683 = vst [vmem:[%s653 + $0x38] sm:%s645] %v682
                  %v684 = vld [vmem:[%s652 + $0x78] sm:%s645]
                  %685 = vst [vmem:[%s653 + $0x3c] sm:%s645] %v684
                  %v686 = vld [vmem:[%s652 + $0x80] sm:%s645]
                  %687 = vst [vmem:[%s653 + $0x40] sm:%s645] %v686
                  %v688 = vld [vmem:[%s652 + $0x88] sm:%s645]
                  %689 = vst [vmem:[%s653 + $0x44] sm:%s645] %v688
                  %v690 = vld [vmem:[%s652 + $0x90] sm:%s645]
                  %691 = vst [vmem:[%s653 + $0x48] sm:%s645] %v690
                  %v692 = vld [vmem:[%s652 + $0x98] sm:%s645]
                  %693 = vst [vmem:[%s653 + $0x4c] sm:%s645] %v692
                  %v694 = vld [vmem:[%s652 + $0xa0] sm:%s645]
                  %695 = vst [vmem:[%s653 + $0x50] sm:%s645] %v694
                  %v696 = vld [vmem:[%s652 + $0xa8] sm:%s645]
                  %697 = vst [vmem:[%s653 + $0x54] sm:%s645] %v696
                  %v698 = vld [vmem:[%s652 + $0xb0] sm:%s645]
                  %699 = vst [vmem:[%s653 + $0x58] sm:%s645] %v698
                  %v700 = vld [vmem:[%s652 + $0xb8] sm:%s645]
                  %701 = vst [vmem:[%s653 + $0x5c] sm:%s645] %v700
                  %v702 = vld [vmem:[%s652 + $0xc0] sm:%s645]
                  %703 = vst [vmem:[%s653 + $0x60] sm:%s645] %v702
                  %v704 = vld [vmem:[%s652 + $0xc8] sm:%s645]
                  %705 = vst [vmem:[%s653 + $0x64] sm:%s645] %v704
                  %v706 = vld [vmem:[%s652 + $0xd0] sm:%s645]
                  %707 = vst [vmem:[%s653 + $0x68] sm:%s645] %v706
                  %v708 = vld [vmem:[%s652 + $0xd8] sm:%s645]
                  %709 = vst [vmem:[%s653 + $0x6c] sm:%s645] %v708
                  %v710 = vld [vmem:[%s652 + $0xe0] sm:%s645]
                  %711 = vst [vmem:[%s653 + $0x70] sm:%s645] %v710
                  %v712 = vld [vmem:[%s652 + $0xe8] sm:%s645]
                  %713 = vst [vmem:[%s653 + $0x74] sm:%s645] %v712
                  %v714 = vld [vmem:[%s652 + $0xf0] sm:%s645]
                  %715 = vst [vmem:[%s653 + $0x78] sm:%s645] %v714
                  %v716 = vld [vmem:[%s652 + $0xf8] sm:%s645]
                  %717 = vst [vmem:[%s653 + $0x7c] sm:%s645] %v716
                $region142: #{graphsage_forward.4} parent=129 // loop_footer
                  %s651 = sadd.s32 1, %s647
                $region143: #{graphsage_forward.4} parent=129 // loop_footer_branch
                  %646 = sbr.rel target = $region139
                $region144: #{graphsage_forward.4} parent=129 // loop_exit
                  _
              $region130: #{graphsage_forward.4} parent=114 // pred_fallthru
                _
            $region115: #{graphsage_forward.4} parent=110 // pred_fallthru
              _
            // Predicated region
            $region116: #{graphsage_forward.4} parent=110 // pred_check
              _
            $region117: #{graphsage_forward.4} parent=110 // pred_check_branch
              %559 = sbr.rel (0) target = $region119
            $region118: #{graphsage_forward.4} parent=110 // pred_region
              %s561 = ssub.s32 16, 1
              loop: start=0, step=1, limit=1
              $region120: #{graphsage_forward.4} parent=118 // loop_pre_header
                _
              $region121: #{graphsage_forward.4} parent=118 // loop_header
                %s563 = sphi 0, %s567
                %p564 = scmp.ge.s32.totalorder %s563, 1
                %s568 = sphi %s553, %s553
                %s569 = sphi %s548, %s548
              $region122: #{graphsage_forward.4} parent=118 // loop_header_branch
                %566 = sbr.rel (%p564) target = $region126
              $region123: #{graphsage_forward.4} parent=118 // loop_body
                %v570 = vld [vmem:[%s568] sm:%s561]
                %571 = vst [vmem:[%s569] sm:%s561] %v570
                %v572 = vld [vmem:[%s568 + $0x8] sm:%s561]
                %573 = vst [vmem:[%s569 + $0x4] sm:%s561] %v572
                %v574 = vld [vmem:[%s568 + $0x10] sm:%s561]
                %575 = vst [vmem:[%s569 + $0x8] sm:%s561] %v574
                %v576 = vld [vmem:[%s568 + $0x18] sm:%s561]
                %577 = vst [vmem:[%s569 + $0xc] sm:%s561] %v576
                %v578 = vld [vmem:[%s568 + $0x20] sm:%s561]
                %579 = vst [vmem:[%s569 + $0x10] sm:%s561] %v578
                %v580 = vld [vmem:[%s568 + $0x28] sm:%s561]
                %581 = vst [vmem:[%s569 + $0x14] sm:%s561] %v580
                %v582 = vld [vmem:[%s568 + $0x30] sm:%s561]
                %583 = vst [vmem:[%s569 + $0x18] sm:%s561] %v582
                %v584 = vld [vmem:[%s568 + $0x38] sm:%s561]
                %585 = vst [vmem:[%s569 + $0x1c] sm:%s561] %v584
                %v586 = vld [vmem:[%s568 + $0x40] sm:%s561]
                %587 = vst [vmem:[%s569 + $0x20] sm:%s561] %v586
                %v588 = vld [vmem:[%s568 + $0x48] sm:%s561]
                %589 = vst [vmem:[%s569 + $0x24] sm:%s561] %v588
                %v590 = vld [vmem:[%s568 + $0x50] sm:%s561]
                %591 = vst [vmem:[%s569 + $0x28] sm:%s561] %v590
                %v592 = vld [vmem:[%s568 + $0x58] sm:%s561]
                %593 = vst [vmem:[%s569 + $0x2c] sm:%s561] %v592
                %v594 = vld [vmem:[%s568 + $0x60] sm:%s561]
                %595 = vst [vmem:[%s569 + $0x30] sm:%s561] %v594
                %v596 = vld [vmem:[%s568 + $0x68] sm:%s561]
                %597 = vst [vmem:[%s569 + $0x34] sm:%s561] %v596
                %v598 = vld [vmem:[%s568 + $0x70] sm:%s561]
                %599 = vst [vmem:[%s569 + $0x38] sm:%s561] %v598
                %v600 = vld [vmem:[%s568 + $0x78] sm:%s561]
                %601 = vst [vmem:[%s569 + $0x3c] sm:%s561] %v600
                %v602 = vld [vmem:[%s568 + $0x80] sm:%s561]
                %603 = vst [vmem:[%s569 + $0x40] sm:%s561] %v602
                %v604 = vld [vmem:[%s568 + $0x88] sm:%s561]
                %605 = vst [vmem:[%s569 + $0x44] sm:%s561] %v604
                %v606 = vld [vmem:[%s568 + $0x90] sm:%s561]
                %607 = vst [vmem:[%s569 + $0x48] sm:%s561] %v606
                %v608 = vld [vmem:[%s568 + $0x98] sm:%s561]
                %609 = vst [vmem:[%s569 + $0x4c] sm:%s561] %v608
                %v610 = vld [vmem:[%s568 + $0xa0] sm:%s561]
                %611 = vst [vmem:[%s569 + $0x50] sm:%s561] %v610
                %v612 = vld [vmem:[%s568 + $0xa8] sm:%s561]
                %613 = vst [vmem:[%s569 + $0x54] sm:%s561] %v612
                %v614 = vld [vmem:[%s568 + $0xb0] sm:%s561]
                %615 = vst [vmem:[%s569 + $0x58] sm:%s561] %v614
                %v616 = vld [vmem:[%s568 + $0xb8] sm:%s561]
                %617 = vst [vmem:[%s569 + $0x5c] sm:%s561] %v616
                %v618 = vld [vmem:[%s568 + $0xc0] sm:%s561]
                %619 = vst [vmem:[%s569 + $0x60] sm:%s561] %v618
                %v620 = vld [vmem:[%s568 + $0xc8] sm:%s561]
                %621 = vst [vmem:[%s569 + $0x64] sm:%s561] %v620
                %v622 = vld [vmem:[%s568 + $0xd0] sm:%s561]
                %623 = vst [vmem:[%s569 + $0x68] sm:%s561] %v622
                %v624 = vld [vmem:[%s568 + $0xd8] sm:%s561]
                %625 = vst [vmem:[%s569 + $0x6c] sm:%s561] %v624
                %v626 = vld [vmem:[%s568 + $0xe0] sm:%s561]
                %627 = vst [vmem:[%s569 + $0x70] sm:%s561] %v626
                %v628 = vld [vmem:[%s568 + $0xe8] sm:%s561]
                %629 = vst [vmem:[%s569 + $0x74] sm:%s561] %v628
                %v630 = vld [vmem:[%s568 + $0xf0] sm:%s561]
                %631 = vst [vmem:[%s569 + $0x78] sm:%s561] %v630
                %v632 = vld [vmem:[%s568 + $0xf8] sm:%s561]
                %633 = vst [vmem:[%s569 + $0x7c] sm:%s561] %v632
              $region124: #{graphsage_forward.4} parent=118 // loop_footer
                %s567 = sadd.s32 1, %s563
              $region125: #{graphsage_forward.4} parent=118 // loop_footer_branch
                %562 = sbr.rel target = $region121
              $region126: #{graphsage_forward.4} parent=118 // loop_exit
                _
            $region119: #{graphsage_forward.4} parent=110 // pred_fallthru
              _
          $region111: #{graphsage_forward.4} parent=106 // pred_fallthru
            _
          %718 = vnop
        $region107: #{graphsage_forward.4} parent=23 // pred_fallthru
          _
      $region24: #{graphsage_forward.4} parent=5 // pred_fallthru
        _
      %p719 = scmp.le.s32.totalorder 1, %s11
      %p720 = scmp.lt.s32.totalorder %s11, 5
      %p721 = pnand %p719, %p720
      %p722 = pneg %p721
      // Predicated region
      $region145: #{graphsage_forward.4} parent=5 // pred_check
        _
      $region146: #{graphsage_forward.4} parent=5 // pred_check_branch
        %724 = sbr.rel (%p721) target = $region148
      $region147: #{graphsage_forward.4} parent=5 // pred_region
        %s725 = ssub.s32 %s11, 1
        %s726 = sand.u32 %s38, 1
        %s727 = sand.u32 %s38, 1
        %s728 = smul.addr %s727, 256
        %s729 = scalar_lea.vmem [#allocation3], %s728
        // Predicated region
        $region149: #{graphsage_forward.4} parent=147 // pred_check
          %p730 = pneg %p51
        $region150: #{graphsage_forward.4} parent=147 // pred_check_branch
          %732 = sbr.rel (%p730) target = $region152
        $region151: #{graphsage_forward.4} parent=147 // pred_region
          _
        $region152: #{graphsage_forward.4} parent=147 // pred_fallthru
          _
        %s733 = sand.u32 %s64, 1
        %s734 = sand.u32 %s64, 1
        %s735 = smul.addr %s734, 128
        %s736 = scalar_lea.vmem [#allocation4], %s735
        // Predicated region
        $region153: #{graphsage_forward.4} parent=147 // pred_check
          %p737 = pneg %p77
        $region154: #{graphsage_forward.4} parent=147 // pred_check_branch
          %739 = sbr.rel (%p737) target = $region156
        $region155: #{graphsage_forward.4} parent=147 // pred_region
          _
        $region156: #{graphsage_forward.4} parent=147 // pred_fallthru
          _
        %s740 = sand.u32 %s90, 1
        %s741 = sand.u32 %s90, 1
        %s742 = smul.addr %s741, 128
        %s743 = scalar_lea.vmem [#allocation5], %s742
        // Predicated region
        $region157: #{graphsage_forward.4} parent=147 // pred_check
          %p744 = pneg %p103
        $region158: #{graphsage_forward.4} parent=147 // pred_check_branch
          %746 = sbr.rel (%p744) target = $region160
        $region159: #{graphsage_forward.4} parent=147 // pred_region
          _
        $region160: #{graphsage_forward.4} parent=147 // pred_fallthru
          _
        %s747 = sand.u32 %s38, 1
        %s748 = sand.u32 %s38, 1
        %s749 = smul.addr %s748, 256
        %s750 = scalar_lea.vmem [#allocation3], %s749
        %p751 = pneg %p51
        %p752 = pneg %p48
        %s753 = sand.u32 %s64, 1
        %s754 = sand.u32 %s64, 1
        %s755 = smul.addr %s754, 128
        %s756 = scalar_lea.vmem [#allocation4], %s755
        %p757 = pneg %p77
        %p758 = pneg %p74
        %s759 = sand.u32 %s90, 1
        %s760 = sand.u32 %s90, 1
        %s761 = smul.addr %s760, 128
        %s762 = scalar_lea.vmem [#allocation5], %s761
        %p763 = pneg %p103
        %p764 = pneg %p100
        %p765 = pneg %p124
        %p766 = pneg %p121
        %p767 = pneg %p145
        %p768 = pneg %p142
        %p769 = pneg %p171
        %p770 = pneg %p168
        %s771 = smul.u32 32, %s20
        %p772 = scmp.lt.s32.totalorder %s771, 63
        %s773 = scalar_select %p772, %s771, 63
        %s774 = smul.addr %s773, 2
        %s775 = smul.addr %s774, 4
        %s776 = scalar_lea.vmem %s5, %s775
        %s777 = smul.u32 32, %s20
        %s778 = smul.u32 2, %s21
        %s779 = smul.u32 32, %s21
        %s780 = smul.u32 32, %s20
        %s781 = smul.u32 32, %s20
        %p782 = scmp.lt.s32.totalorder %s781, 63
        %s783 = scalar_select %p782, %s781, 63
        %s784 = smul.addr %s783, 2
        %s785 = smul.addr %s784, 4
        %s786 = scalar_lea.vmem %s5, %s785
        %s787 = smul.u32 32, %s20
        %p789 = scmp.eq.s32.totalorder %s21, 0
        // Predicated region
        $region161: #{graphsage_forward.4} parent=147 // pred_check
          %p790 = pneg %p789
        $region162: #{graphsage_forward.4} parent=147 // pred_check_branch
          %792 = sbr.rel (%p790) target = $region164
        $region163: #{graphsage_forward.4} parent=147 // pred_region
          %793 = vst [vmem:[#allocation2] sm:$0xff] 0.0
          %794 = vst [vmem:[#allocation2 + $0x8] sm:$0xff] 0.0
          %795 = vst [vmem:[#allocation2 + $0x10] sm:$0xff] 0.0
          %796 = vst [vmem:[#allocation2 + $0x18] sm:$0xff] 0.0
          %797 = vst [vmem:[#allocation2 + $0x20] sm:$0xff] 0.0
          %798 = vst [vmem:[#allocation2 + $0x28] sm:$0xff] 0.0
          %799 = vst [vmem:[#allocation2 + $0x30] sm:$0xff] 0.0
          %800 = vst [vmem:[#allocation2 + $0x38] sm:$0xff] 0.0
          %801 = vst [vmem:[#allocation2 + $0x40] sm:$0xff] 0.0
          %802 = vst [vmem:[#allocation2 + $0x48] sm:$0xff] 0.0
          %803 = vst [vmem:[#allocation2 + $0x50] sm:$0xff] 0.0
          %804 = vst [vmem:[#allocation2 + $0x58] sm:$0xff] 0.0
          %805 = vst [vmem:[#allocation2 + $0x60] sm:$0xff] 0.0
          %806 = vst [vmem:[#allocation2 + $0x68] sm:$0xff] 0.0
          %807 = vst [vmem:[#allocation2 + $0x70] sm:$0xff] 0.0
          %808 = vst [vmem:[#allocation2 + $0x78] sm:$0xff] 0.0
          %809 = vst [vmem:[#allocation2 + $0x80] sm:$0xff] 0.0
          %810 = vst [vmem:[#allocation2 + $0x88] sm:$0xff] 0.0
          %811 = vst [vmem:[#allocation2 + $0x90] sm:$0xff] 0.0
          %812 = vst [vmem:[#allocation2 + $0x98] sm:$0xff] 0.0
          %813 = vst [vmem:[#allocation2 + $0xa0] sm:$0xff] 0.0
          %814 = vst [vmem:[#allocation2 + $0xa8] sm:$0xff] 0.0
          %815 = vst [vmem:[#allocation2 + $0xb0] sm:$0xff] 0.0
          %816 = vst [vmem:[#allocation2 + $0xb8] sm:$0xff] 0.0
          %817 = vst [vmem:[#allocation2 + $0xc0] sm:$0xff] 0.0
          %818 = vst [vmem:[#allocation2 + $0xc8] sm:$0xff] 0.0
          %819 = vst [vmem:[#allocation2 + $0xd0] sm:$0xff] 0.0
          %820 = vst [vmem:[#allocation2 + $0xd8] sm:$0xff] 0.0
          %821 = vst [vmem:[#allocation2 + $0xe0] sm:$0xff] 0.0
          %822 = vst [vmem:[#allocation2 + $0xe8] sm:$0xff] 0.0
          %823 = vst [vmem:[#allocation2 + $0xf0] sm:$0xff] 0.0
          %824 = vst [vmem:[#allocation2 + $0xf8] sm:$0xff] 0.0
        $region164: #{graphsage_forward.4} parent=147 // pred_fallthru
          _
        %v825 = vld [vmem:[#allocation2] sm:$0xff]
        %v826 = vld [vmem:[#allocation2 + $0x8] sm:$0xff]
        %v827 = vld [vmem:[#allocation2 + $0x10] sm:$0xff]
        %v828 = vld [vmem:[#allocation2 + $0x18] sm:$0xff]
        %v829 = vld [vmem:[#allocation2 + $0x20] sm:$0xff]
        %v830 = vld [vmem:[#allocation2 + $0x28] sm:$0xff]
        %v831 = vld [vmem:[#allocation2 + $0x30] sm:$0xff]
        %v832 = vld [vmem:[#allocation2 + $0x38] sm:$0xff]
        %v833 = vld [vmem:[#allocation2 + $0x40] sm:$0xff]
        %v834 = vld [vmem:[#allocation2 + $0x48] sm:$0xff]
        %v835 = vld [vmem:[#allocation2 + $0x50] sm:$0xff]
        %v836 = vld [vmem:[#allocation2 + $0x58] sm:$0xff]
        %v837 = vld [vmem:[#allocation2 + $0x60] sm:$0xff]
        %v838 = vld [vmem:[#allocation2 + $0x68] sm:$0xff]
        %v839 = vld [vmem:[#allocation2 + $0x70] sm:$0xff]
        %v840 = vld [vmem:[#allocation2 + $0x78] sm:$0xff]
        %v841 = vld [vmem:[#allocation2 + $0x80] sm:$0xff]
        %v842 = vld [vmem:[#allocation2 + $0x88] sm:$0xff]
        %v843 = vld [vmem:[#allocation2 + $0x90] sm:$0xff]
        %v844 = vld [vmem:[#allocation2 + $0x98] sm:$0xff]
        %v845 = vld [vmem:[#allocation2 + $0xa0] sm:$0xff]
        %v846 = vld [vmem:[#allocation2 + $0xa8] sm:$0xff]
        %v847 = vld [vmem:[#allocation2 + $0xb0] sm:$0xff]
        %v848 = vld [vmem:[#allocation2 + $0xb8] sm:$0xff]
        %v849 = vld [vmem:[#allocation2 + $0xc0] sm:$0xff]
        %v850 = vld [vmem:[#allocation2 + $0xc8] sm:$0xff]
        %v851 = vld [vmem:[#allocation2 + $0xd0] sm:$0xff]
        %v852 = vld [vmem:[#allocation2 + $0xd8] sm:$0xff]
        %v853 = vld [vmem:[#allocation2 + $0xe0] sm:$0xff]
        %v854 = vld [vmem:[#allocation2 + $0xe8] sm:$0xff]
        %v855 = vld [vmem:[#allocation2 + $0xf0] sm:$0xff]
        %v856 = vld [vmem:[#allocation2 + $0xf8] sm:$0xff]
        %v857 = vld [vmem:[%s729] sm:$0xff]
        %v858 = vld [vmem:[%s729 + $0x8] sm:$0xff]
        %v859 = vld [vmem:[%s729 + $0x10] sm:$0xff]
        %v860 = vld [vmem:[%s729 + $0x18] sm:$0xff]
        %v861 = vld [vmem:[%s729 + $0x20] sm:$0xff]
        %v862 = vld [vmem:[%s729 + $0x28] sm:$0xff]
        %v863 = vld [vmem:[%s729 + $0x30] sm:$0xff]
        %v864 = vld [vmem:[%s729 + $0x38] sm:$0xff]
        %v865 = vld [vmem:[%s729 + $0x40] sm:$0xff]
        %v866 = vld [vmem:[%s729 + $0x48] sm:$0xff]
        %v867 = vld [vmem:[%s729 + $0x50] sm:$0xff]
        %v868 = vld [vmem:[%s729 + $0x58] sm:$0xff]
        %v869 = vld [vmem:[%s729 + $0x60] sm:$0xff]
        %v870 = vld [vmem:[%s729 + $0x68] sm:$0xff]
        %v871 = vld [vmem:[%s729 + $0x70] sm:$0xff]
        %v872 = vld [vmem:[%s729 + $0x78] sm:$0xff]
        %v873 = vld [vmem:[%s729 + $0x80] sm:$0xff]
        %v874 = vld [vmem:[%s729 + $0x88] sm:$0xff]
        %v875 = vld [vmem:[%s729 + $0x90] sm:$0xff]
        %v876 = vld [vmem:[%s729 + $0x98] sm:$0xff]
        %v877 = vld [vmem:[%s729 + $0xa0] sm:$0xff]
        %v878 = vld [vmem:[%s729 + $0xa8] sm:$0xff]
        %v879 = vld [vmem:[%s729 + $0xb0] sm:$0xff]
        %v880 = vld [vmem:[%s729 + $0xb8] sm:$0xff]
        %v881 = vld [vmem:[%s729 + $0xc0] sm:$0xff]
        %v882 = vld [vmem:[%s729 + $0xc8] sm:$0xff]
        %v883 = vld [vmem:[%s729 + $0xd0] sm:$0xff]
        %v884 = vld [vmem:[%s729 + $0xd8] sm:$0xff]
        %v885 = vld [vmem:[%s729 + $0xe0] sm:$0xff]
        %v886 = vld [vmem:[%s729 + $0xe8] sm:$0xff]
        %v887 = vld [vmem:[%s729 + $0xf0] sm:$0xff]
        %v888 = vld [vmem:[%s729 + $0xf8] sm:$0xff]
        %v889 = vld [vmem:[%s736] sm:$0xf]
        %v890 = vld [vmem:[%s736 + $0x4] sm:$0xf]
        %v891 = vld [vmem:[%s736 + $0x8] sm:$0xf]
        %v892 = vld [vmem:[%s736 + $0xc] sm:$0xf]
        %v893 = vld [vmem:[%s736 + $0x10] sm:$0xf]
        %v894 = vld [vmem:[%s736 + $0x14] sm:$0xf]
        %v895 = vld [vmem:[%s736 + $0x18] sm:$0xf]
        %v896 = vld [vmem:[%s736 + $0x1c] sm:$0xf]
        %v897 = vld [vmem:[%s736 + $0x20] sm:$0xf]
        %v898 = vld [vmem:[%s736 + $0x24] sm:$0xf]
        %v899 = vld [vmem:[%s736 + $0x28] sm:$0xf]
        %v900 = vld [vmem:[%s736 + $0x2c] sm:$0xf]
        %v901 = vld [vmem:[%s736 + $0x30] sm:$0xf]
        %v902 = vld [vmem:[%s736 + $0x34] sm:$0xf]
        %v903 = vld [vmem:[%s736 + $0x38] sm:$0xf]
        %v904 = vld [vmem:[%s736 + $0x3c] sm:$0xf]
        %v905 = vld [vmem:[%s736 + $0x40] sm:$0xf]
        %v906 = vld [vmem:[%s736 + $0x44] sm:$0xf]
        %v907 = vld [vmem:[%s736 + $0x48] sm:$0xf]
        %v908 = vld [vmem:[%s736 + $0x4c] sm:$0xf]
        %v909 = vld [vmem:[%s736 + $0x50] sm:$0xf]
        %v910 = vld [vmem:[%s736 + $0x54] sm:$0xf]
        %v911 = vld [vmem:[%s736 + $0x58] sm:$0xf]
        %v912 = vld [vmem:[%s736 + $0x5c] sm:$0xf]
        %v913 = vld [vmem:[%s736 + $0x60] sm:$0xf]
        %v914 = vld [vmem:[%s736 + $0x64] sm:$0xf]
        %v915 = vld [vmem:[%s736 + $0x68] sm:$0xf]
        %v916 = vld [vmem:[%s736 + $0x6c] sm:$0xf]
        %v917 = vld [vmem:[%s736 + $0x70] sm:$0xf]
        %v918 = vld [vmem:[%s736 + $0x74] sm:$0xf]
        %v919 = vld [vmem:[%s736 + $0x78] sm:$0xf]
        %v920 = vld [vmem:[%s736 + $0x7c] sm:$0xf]
        %v953 = vunpack.c.l.b16 %v857
        %v954 = vunpack.c.h.b16 %v857
        %v955 = vunpack.c.l.b16 %v858
        %v956 = vunpack.c.h.b16 %v858
        %v957 = vunpack.c.l.b16 %v859
        %v958 = vunpack.c.h.b16 %v859
        %v959 = vunpack.c.l.b16 %v860
        %v960 = vunpack.c.h.b16 %v860
        %v961 = vunpack.c.l.b16 %v861
        %v962 = vunpack.c.h.b16 %v861
        %v963 = vunpack.c.l.b16 %v862
        %v964 = vunpack.c.h.b16 %v862
        %v965 = vunpack.c.l.b16 %v863
        %v966 = vunpack.c.h.b16 %v863
        %v967 = vunpack.c.l.b16 %v864
        %v968 = vunpack.c.h.b16 %v864
        %v969 = vunpack.c.l.b16 %v865
        %v970 = vunpack.c.h.b16 %v865
        %v971 = vunpack.c.l.b16 %v866
        %v972 = vunpack.c.h.b16 %v866
        %v973 = vunpack.c.l.b16 %v867
        %v974 = vunpack.c.h.b16 %v867
        %v975 = vunpack.c.l.b16 %v868
        %v976 = vunpack.c.h.b16 %v868
        %v977 = vunpack.c.l.b16 %v869
        %v978 = vunpack.c.h.b16 %v869
        %v979 = vunpack.c.l.b16 %v870
        %v980 = vunpack.c.h.b16 %v870
        %v981 = vunpack.c.l.b16 %v871
        %v982 = vunpack.c.h.b16 %v871
        %v983 = vunpack.c.l.b16 %v872
        %v984 = vunpack.c.h.b16 %v872
        %v985 = vunpack.c.l.b16 %v873
        %v986 = vunpack.c.h.b16 %v873
        %v987 = vunpack.c.l.b16 %v874
        %v988 = vunpack.c.h.b16 %v874
        %v989 = vunpack.c.l.b16 %v875
        %v990 = vunpack.c.h.b16 %v875
        %v991 = vunpack.c.l.b16 %v876
        %v992 = vunpack.c.h.b16 %v876
        %v993 = vunpack.c.l.b16 %v877
        %v994 = vunpack.c.h.b16 %v877
        %v995 = vunpack.c.l.b16 %v878
        %v996 = vunpack.c.h.b16 %v878
        %v997 = vunpack.c.l.b16 %v879
        %v998 = vunpack.c.h.b16 %v879
        %v999 = vunpack.c.l.b16 %v880
        %v1000 = vunpack.c.h.b16 %v880
        %v1001 = vunpack.c.l.b16 %v881
        %v1002 = vunpack.c.h.b16 %v881
        %v1003 = vunpack.c.l.b16 %v882
        %v1004 = vunpack.c.h.b16 %v882
        %v1005 = vunpack.c.l.b16 %v883
        %v1006 = vunpack.c.h.b16 %v883
        %v1007 = vunpack.c.l.b16 %v884
        %v1008 = vunpack.c.h.b16 %v884
        %v1009 = vunpack.c.l.b16 %v885
        %v1010 = vunpack.c.h.b16 %v885
        %v1011 = vunpack.c.l.b16 %v886
        %v1012 = vunpack.c.h.b16 %v886
        %v1013 = vunpack.c.l.b16 %v887
        %v1014 = vunpack.c.h.b16 %v887
        %v1015 = vunpack.c.l.b16 %v888
        %v1016 = vunpack.c.h.b16 %v888
        %v1017 = vpack.c.b16 %v955, %v953
        %v1018 = vpack.c.b16 %v956, %v954
        %v1019 = vpack.c.b16 %v959, %v957
        %v1020 = vpack.c.b16 %v960, %v958
        %v1021 = vpack.c.b16 %v963, %v961
        %v1022 = vpack.c.b16 %v964, %v962
        %v1023 = vpack.c.b16 %v967, %v965
        %v1024 = vpack.c.b16 %v968, %v966
        %v1025 = vpack.c.b16 %v971, %v969
        %v1026 = vpack.c.b16 %v972, %v970
        %v1027 = vpack.c.b16 %v975, %v973
        %v1028 = vpack.c.b16 %v976, %v974
        %v1029 = vpack.c.b16 %v979, %v977
        %v1030 = vpack.c.b16 %v980, %v978
        %v1031 = vpack.c.b16 %v983, %v981
        %v1032 = vpack.c.b16 %v984, %v982
        %v1033 = vpack.c.b16 %v987, %v985
        %v1034 = vpack.c.b16 %v988, %v986
        %v1035 = vpack.c.b16 %v991, %v989
        %v1036 = vpack.c.b16 %v992, %v990
        %v1037 = vpack.c.b16 %v995, %v993
        %v1038 = vpack.c.b16 %v996, %v994
        %v1039 = vpack.c.b16 %v999, %v997
        %v1040 = vpack.c.b16 %v1000, %v998
        %v1041 = vpack.c.b16 %v1003, %v1001
        %v1042 = vpack.c.b16 %v1004, %v1002
        %v1043 = vpack.c.b16 %v1007, %v1005
        %v1044 = vpack.c.b16 %v1008, %v1006
        %v1045 = vpack.c.b16 %v1011, %v1009
        %v1046 = vpack.c.b16 %v1012, %v1010
        %v1047 = vpack.c.b16 %v1015, %v1013
        %v1048 = vpack.c.b16 %v1016, %v1014
        %v1113 = vunpack.c.l.b16 %v889
        %v1114 = vunpack.c.l.b16 %v890
        %v1115 = vunpack.c.l.b16 %v891
        %v1116 = vunpack.c.l.b16 %v892
        %v1117 = vunpack.c.l.b16 %v893
        %v1118 = vunpack.c.l.b16 %v894
        %v1119 = vunpack.c.l.b16 %v895
        %v1120 = vunpack.c.l.b16 %v896
        %v1121 = vunpack.c.l.b16 %v897
        %v1122 = vunpack.c.l.b16 %v898
        %v1123 = vunpack.c.l.b16 %v899
        %v1124 = vunpack.c.l.b16 %v900
        %v1125 = vunpack.c.l.b16 %v901
        %v1126 = vunpack.c.l.b16 %v902
        %v1127 = vunpack.c.l.b16 %v903
        %v1128 = vunpack.c.l.b16 %v904
        %v1129 = vunpack.c.l.b16 %v905
        %v1130 = vunpack.c.l.b16 %v906
        %v1131 = vunpack.c.l.b16 %v907
        %v1132 = vunpack.c.l.b16 %v908
        %v1133 = vunpack.c.l.b16 %v909
        %v1134 = vunpack.c.l.b16 %v910
        %v1135 = vunpack.c.l.b16 %v911
        %v1136 = vunpack.c.l.b16 %v912
        %v1137 = vunpack.c.l.b16 %v913
        %v1138 = vunpack.c.l.b16 %v914
        %v1139 = vunpack.c.l.b16 %v915
        %v1140 = vunpack.c.l.b16 %v916
        %v1141 = vunpack.c.l.b16 %v917
        %v1142 = vunpack.c.l.b16 %v918
        %v1143 = vunpack.c.l.b16 %v919
        %v1144 = vunpack.c.l.b16 %v920
        %v1145 = vpack.c.b16 %v1114, %v1113
        %v1146 = vpack.c.b16 %v1116, %v1115
        %v1147 = vpack.c.b16 %v1118, %v1117
        %v1148 = vpack.c.b16 %v1120, %v1119
        %v1149 = vpack.c.b16 %v1122, %v1121
        %v1150 = vpack.c.b16 %v1124, %v1123
        %v1151 = vpack.c.b16 %v1126, %v1125
        %v1152 = vpack.c.b16 %v1128, %v1127
        %v1153 = vpack.c.b16 %v1130, %v1129
        %v1154 = vpack.c.b16 %v1132, %v1131
        %v1155 = vpack.c.b16 %v1134, %v1133
        %v1156 = vpack.c.b16 %v1136, %v1135
        %v1157 = vpack.c.b16 %v1138, %v1137
        %v1158 = vpack.c.b16 %v1140, %v1139
        %v1159 = vpack.c.b16 %v1142, %v1141
        %v1160 = vpack.c.b16 %v1144, %v1143
        %1177 = vmatprep.subr.bf16.mxu0 0
        %1178 = vmatpush1.bf16.msra.mxu0 %v1152
        %1179 = vmatprep.subr.bf16.mxu0 0
        %1180 = vmatpush1.bf16.msra.mxu0 %v1151
        %1181 = vmatprep.subr.bf16.mxu0 0
        %1182 = vmatpush1.bf16.msra.mxu0 %v1150
        %1183 = vmatprep.subr.bf16.mxu0 0
        %1184 = vmatpush1.bf16.msra.mxu0 %v1149
        %1185 = vmatprep.subr.bf16.mxu0 0
        %1186 = vmatpush1.bf16.msra.mxu0 %v1148
        %1187 = vmatprep.subr.bf16.mxu0 0
        %1188 = vmatpush1.bf16.msra.mxu0 %v1147
        %1189 = vmatprep.subr.bf16.mxu0 0
        %1190 = vmatpush1.bf16.msra.mxu0 %v1146
        %1191 = vmatprep.subr.bf16.mxu0 0
        %1192 = vmatpush1.bf16.msra.mxu0 %v1145
        %1193 = vmatprep.subr.bf16.mxu0 0
        %1194 = vmatpush2.bf16.msra.mxu0 %v1160
        %1195 = vmatprep.subr.bf16.mxu0 0
        %1196 = vmatpush2.bf16.msra.mxu0 %v1159
        %1197 = vmatprep.subr.bf16.mxu0 0
        %1198 = vmatpush2.bf16.msra.mxu0 %v1158
        %1199 = vmatprep.subr.bf16.mxu0 0
        %1200 = vmatpush2.bf16.msra.mxu0 %v1157
        %1201 = vmatprep.subr.bf16.mxu0 0
        %1202 = vmatpush2.bf16.msra.mxu0 %v1156
        %1203 = vmatprep.subr.bf16.mxu0 0
        %1204 = vmatpush2.bf16.msra.mxu0 %v1155
        %1205 = vmatprep.subr.bf16.mxu0 0
        %1206 = vmatpush2.bf16.msra.mxu0 %v1154
        %1207 = vmatprep.subr.bf16.mxu0 0
        %1208 = vmatpush2.bf16.msra.mxu0 %v1153
        %1209 = vmatprep.mubr.bf16.mxu0 %v1018
        %1210 = vmatmul.mubr.bf16.gmra.mxu0 %v1017
        %v1211 = vpop.f32.mrf.mxu0
        %v1212 = vadd.f32 0.0, %v1211
        %v1213 = vpop.f32.mrf.mxu0
        %v1214 = vpop.f32.mrf.mxu0
        %v1215 = vadd.f32 0.0, %v1214
        %v1216 = vpop.f32.mrf.mxu0
        %1217 = vmatprep.mubr.bf16.mxu0 %v1020
        %1218 = vmatmul.mubr.bf16.gmra.mxu0 %v1019
        %v1219 = vpop.f32.mrf.mxu0
        %v1220 = vadd.f32 0.0, %v1219
        %v1221 = vpop.f32.mrf.mxu0
        %v1222 = vpop.f32.mrf.mxu0
        %v1223 = vadd.f32 0.0, %v1222
        %v1224 = vpop.f32.mrf.mxu0
        %1225 = vmatprep.mubr.bf16.mxu0 %v1022
        %1226 = vmatmul.mubr.bf16.gmra.mxu0 %v1021
        %v1227 = vpop.f32.mrf.mxu0
        %v1228 = vadd.f32 0.0, %v1227
        %v1229 = vpop.f32.mrf.mxu0
        %v1230 = vpop.f32.mrf.mxu0
        %v1231 = vadd.f32 0.0, %v1230
        %v1232 = vpop.f32.mrf.mxu0
        %1233 = vmatprep.mubr.bf16.mxu0 %v1024
        %1234 = vmatmul.mubr.bf16.gmra.mxu0 %v1023
        %v1235 = vpop.f32.mrf.mxu0
        %v1236 = vadd.f32 0.0, %v1235
        %v1237 = vpop.f32.mrf.mxu0
        %v1238 = vpop.f32.mrf.mxu0
        %v1239 = vadd.f32 0.0, %v1238
        %v1240 = vpop.f32.mrf.mxu0
        %1241 = vmatprep.mubr.bf16.mxu0 %v1026
        %1242 = vmatmul.mubr.bf16.gmra.mxu0 %v1025
        %v1243 = vpop.f32.mrf.mxu0
        %v1244 = vadd.f32 0.0, %v1243
        %v1245 = vpop.f32.mrf.mxu0
        %v1246 = vpop.f32.mrf.mxu0
        %v1247 = vadd.f32 0.0, %v1246
        %v1248 = vpop.f32.mrf.mxu0
        %1249 = vmatprep.mubr.bf16.mxu0 %v1028
        %1250 = vmatmul.mubr.bf16.gmra.mxu0 %v1027
        %v1251 = vpop.f32.mrf.mxu0
        %v1252 = vadd.f32 0.0, %v1251
        %v1253 = vpop.f32.mrf.mxu0
        %v1254 = vpop.f32.mrf.mxu0
        %v1255 = vadd.f32 0.0, %v1254
        %v1256 = vpop.f32.mrf.mxu0
        %1257 = vmatprep.mubr.bf16.mxu0 %v1030
        %1258 = vmatmul.mubr.bf16.gmra.mxu0 %v1029
        %v1259 = vpop.f32.mrf.mxu0
        %v1260 = vadd.f32 0.0, %v1259
        %v1261 = vpop.f32.mrf.mxu0
        %v1262 = vpop.f32.mrf.mxu0
        %v1263 = vadd.f32 0.0, %v1262
        %v1264 = vpop.f32.mrf.mxu0
        %1265 = vmatprep.mubr.bf16.mxu0 %v1032
        %1266 = vmatmul.mubr.bf16.gmra.mxu0 %v1031
        %v1267 = vpop.f32.mrf.mxu0
        %v1268 = vadd.f32 0.0, %v1267
        %v1269 = vpop.f32.mrf.mxu0
        %v1270 = vpop.f32.mrf.mxu0
        %v1271 = vadd.f32 0.0, %v1270
        %v1272 = vpop.f32.mrf.mxu0
        %1273 = vmatprep.mubr.bf16.mxu0 %v1034
        %1274 = vmatmul.mubr.bf16.gmra.mxu0 %v1033
        %v1275 = vpop.f32.mrf.mxu0
        %v1276 = vadd.f32 0.0, %v1275
        %v1277 = vpop.f32.mrf.mxu0
        %v1278 = vpop.f32.mrf.mxu0
        %v1279 = vadd.f32 0.0, %v1278
        %v1280 = vpop.f32.mrf.mxu0
        %1281 = vmatprep.mubr.bf16.mxu0 %v1036
        %1282 = vmatmul.mubr.bf16.gmra.mxu0 %v1035
        %v1283 = vpop.f32.mrf.mxu0
        %v1284 = vadd.f32 0.0, %v1283
        %v1285 = vpop.f32.mrf.mxu0
        %v1286 = vpop.f32.mrf.mxu0
        %v1287 = vadd.f32 0.0, %v1286
        %v1288 = vpop.f32.mrf.mxu0
        %1289 = vmatprep.mubr.bf16.mxu0 %v1038
        %1290 = vmatmul.mubr.bf16.gmra.mxu0 %v1037
        %v1291 = vpop.f32.mrf.mxu0
        %v1292 = vadd.f32 0.0, %v1291
        %v1293 = vpop.f32.mrf.mxu0
        %v1294 = vpop.f32.mrf.mxu0
        %v1295 = vadd.f32 0.0, %v1294
        %v1296 = vpop.f32.mrf.mxu0
        %1297 = vmatprep.mubr.bf16.mxu0 %v1040
        %1298 = vmatmul.mubr.bf16.gmra.mxu0 %v1039
        %v1299 = vpop.f32.mrf.mxu0
        %v1300 = vadd.f32 0.0, %v1299
        %v1301 = vpop.f32.mrf.mxu0
        %v1302 = vpop.f32.mrf.mxu0
        %v1303 = vadd.f32 0.0, %v1302
        %v1304 = vpop.f32.mrf.mxu0
        %1305 = vmatprep.mubr.bf16.mxu0 %v1042
        %1306 = vmatmul.mubr.bf16.gmra.mxu0 %v1041
        %v1307 = vpop.f32.mrf.mxu0
        %v1308 = vadd.f32 0.0, %v1307
        %v1309 = vpop.f32.mrf.mxu0
        %v1310 = vpop.f32.mrf.mxu0
        %v1311 = vadd.f32 0.0, %v1310
        %v1312 = vpop.f32.mrf.mxu0
        %1313 = vmatprep.mubr.bf16.mxu0 %v1044
        %1314 = vmatmul.mubr.bf16.gmra.mxu0 %v1043
        %v1315 = vpop.f32.mrf.mxu0
        %v1316 = vadd.f32 0.0, %v1315
        %v1317 = vpop.f32.mrf.mxu0
        %v1318 = vpop.f32.mrf.mxu0
        %v1319 = vadd.f32 0.0, %v1318
        %v1320 = vpop.f32.mrf.mxu0
        %1321 = vmatprep.mubr.bf16.mxu0 %v1046
        %1322 = vmatmul.mubr.bf16.gmra.mxu0 %v1045
        %v1323 = vpop.f32.mrf.mxu0
        %v1324 = vadd.f32 0.0, %v1323
        %v1325 = vpop.f32.mrf.mxu0
        %v1326 = vpop.f32.mrf.mxu0
        %v1327 = vadd.f32 0.0, %v1326
        %v1328 = vpop.f32.mrf.mxu0
        %1329 = vmatprep.mubr.bf16.mxu0 %v1048
        %1330 = vmatmul.mubr.bf16.gmra.mxu0 %v1047
        %v1331 = vpop.f32.mrf.mxu0
        %v1332 = vadd.f32 0.0, %v1331
        %v1333 = vpop.f32.mrf.mxu0
        %v1334 = vpop.f32.mrf.mxu0
        %v1335 = vadd.f32 0.0, %v1334
        %v1336 = vpop.f32.mrf.mxu0
        %1337 = vdwg.mxu0
        %v1338 = vadd.f32 %v825, %v1212
        %v1339 = vadd.f32 %v826, %v1215
        %v1340 = vadd.f32 %v827, %v1220
        %v1341 = vadd.f32 %v828, %v1223
        %v1342 = vadd.f32 %v829, %v1228
        %v1343 = vadd.f32 %v830, %v1231
        %v1344 = vadd.f32 %v831, %v1236
        %v1345 = vadd.f32 %v832, %v1239
        %v1346 = vadd.f32 %v833, %v1244
        %v1347 = vadd.f32 %v834, %v1247
        %v1348 = vadd.f32 %v835, %v1252
        %v1349 = vadd.f32 %v836, %v1255
        %v1350 = vadd.f32 %v837, %v1260
        %v1351 = vadd.f32 %v838, %v1263
        %v1352 = vadd.f32 %v839, %v1268
        %v1353 = vadd.f32 %v840, %v1271
        %v1354 = vadd.f32 %v841, %v1276
        %v1355 = vadd.f32 %v842, %v1279
        %v1356 = vadd.f32 %v843, %v1284
        %v1357 = vadd.f32 %v844, %v1287
        %v1358 = vadd.f32 %v845, %v1292
        %v1359 = vadd.f32 %v846, %v1295
        %v1360 = vadd.f32 %v847, %v1300
        %v1361 = vadd.f32 %v848, %v1303
        %v1362 = vadd.f32 %v849, %v1308
        %v1363 = vadd.f32 %v850, %v1311
        %v1364 = vadd.f32 %v851, %v1316
        %v1365 = vadd.f32 %v852, %v1319
        %v1366 = vadd.f32 %v853, %v1324
        %v1367 = vadd.f32 %v854, %v1327
        %v1368 = vadd.f32 %v855, %v1332
        %v1369 = vadd.f32 %v856, %v1335
        %1370 = vst [vmem:[#allocation2] sm:$0xff] %v1338
        %1371 = vst [vmem:[#allocation2 + $0x8] sm:$0xff] %v1339
        %1372 = vst [vmem:[#allocation2 + $0x10] sm:$0xff] %v1340
        %1373 = vst [vmem:[#allocation2 + $0x18] sm:$0xff] %v1341
        %1374 = vst [vmem:[#allocation2 + $0x20] sm:$0xff] %v1342
        %1375 = vst [vmem:[#allocation2 + $0x28] sm:$0xff] %v1343
        %1376 = vst [vmem:[#allocation2 + $0x30] sm:$0xff] %v1344
        %1377 = vst [vmem:[#allocation2 + $0x38] sm:$0xff] %v1345
        %1378 = vst [vmem:[#allocation2 + $0x40] sm:$0xff] %v1346
        %1379 = vst [vmem:[#allocation2 + $0x48] sm:$0xff] %v1347
        %1380 = vst [vmem:[#allocation2 + $0x50] sm:$0xff] %v1348
        %1381 = vst [vmem:[#allocation2 + $0x58] sm:$0xff] %v1349
        %1382 = vst [vmem:[#allocation2 + $0x60] sm:$0xff] %v1350
        %1383 = vst [vmem:[#allocation2 + $0x68] sm:$0xff] %v1351
        %1384 = vst [vmem:[#allocation2 + $0x70] sm:$0xff] %v1352
        %1385 = vst [vmem:[#allocation2 + $0x78] sm:$0xff] %v1353
        %1386 = vst [vmem:[#allocation2 + $0x80] sm:$0xff] %v1354
        %1387 = vst [vmem:[#allocation2 + $0x88] sm:$0xff] %v1355
        %1388 = vst [vmem:[#allocation2 + $0x90] sm:$0xff] %v1356
        %1389 = vst [vmem:[#allocation2 + $0x98] sm:$0xff] %v1357
        %1390 = vst [vmem:[#allocation2 + $0xa0] sm:$0xff] %v1358
        %1391 = vst [vmem:[#allocation2 + $0xa8] sm:$0xff] %v1359
        %1392 = vst [vmem:[#allocation2 + $0xb0] sm:$0xff] %v1360
        %1393 = vst [vmem:[#allocation2 + $0xb8] sm:$0xff] %v1361
        %1394 = vst [vmem:[#allocation2 + $0xc0] sm:$0xff] %v1362
        %1395 = vst [vmem:[#allocation2 + $0xc8] sm:$0xff] %v1363
        %1396 = vst [vmem:[#allocation2 + $0xd0] sm:$0xff] %v1364
        %1397 = vst [vmem:[#allocation2 + $0xd8] sm:$0xff] %v1365
        %1398 = vst [vmem:[#allocation2 + $0xe0] sm:$0xff] %v1366
        %1399 = vst [vmem:[#allocation2 + $0xe8] sm:$0xff] %v1367
        %1400 = vst [vmem:[#allocation2 + $0xf0] sm:$0xff] %v1368
        %1401 = vst [vmem:[#allocation2 + $0xf8] sm:$0xff] %v1369
        %p1402 = scmp.eq.s32.totalorder %s21, 1
        // Predicated region
        $region165: #{graphsage_forward.4} parent=147 // pred_check
          %p1403 = pneg %p1402
        $region166: #{graphsage_forward.4} parent=147 // pred_check_branch
          %1405 = sbr.rel (%p1403) target = $region168
        $region167: #{graphsage_forward.4} parent=147 // pred_region
          %v1406 = vld [vmem:[#allocation2] sm:$0xff]
          %v1407 = vld [vmem:[#allocation2 + $0x8] sm:$0xff]
          %v1408 = vld [vmem:[#allocation2 + $0x10] sm:$0xff]
          %v1409 = vld [vmem:[#allocation2 + $0x18] sm:$0xff]
          %v1410 = vld [vmem:[#allocation2 + $0x20] sm:$0xff]
          %v1411 = vld [vmem:[#allocation2 + $0x28] sm:$0xff]
          %v1412 = vld [vmem:[#allocation2 + $0x30] sm:$0xff]
          %v1413 = vld [vmem:[#allocation2 + $0x38] sm:$0xff]
          %v1414 = vld [vmem:[#allocation2 + $0x40] sm:$0xff]
          %v1415 = vld [vmem:[#allocation2 + $0x48] sm:$0xff]
          %v1416 = vld [vmem:[#allocation2 + $0x50] sm:$0xff]
          %v1417 = vld [vmem:[#allocation2 + $0x58] sm:$0xff]
          %v1418 = vld [vmem:[#allocation2 + $0x60] sm:$0xff]
          %v1419 = vld [vmem:[#allocation2 + $0x68] sm:$0xff]
          %v1420 = vld [vmem:[#allocation2 + $0x70] sm:$0xff]
          %v1421 = vld [vmem:[#allocation2 + $0x78] sm:$0xff]
          %v1422 = vld [vmem:[#allocation2 + $0x80] sm:$0xff]
          %v1423 = vld [vmem:[#allocation2 + $0x88] sm:$0xff]
          %v1424 = vld [vmem:[#allocation2 + $0x90] sm:$0xff]
          %v1425 = vld [vmem:[#allocation2 + $0x98] sm:$0xff]
          %v1426 = vld [vmem:[#allocation2 + $0xa0] sm:$0xff]
          %v1427 = vld [vmem:[#allocation2 + $0xa8] sm:$0xff]
          %v1428 = vld [vmem:[#allocation2 + $0xb0] sm:$0xff]
          %v1429 = vld [vmem:[#allocation2 + $0xb8] sm:$0xff]
          %v1430 = vld [vmem:[#allocation2 + $0xc0] sm:$0xff]
          %v1431 = vld [vmem:[#allocation2 + $0xc8] sm:$0xff]
          %v1432 = vld [vmem:[#allocation2 + $0xd0] sm:$0xff]
          %v1433 = vld [vmem:[#allocation2 + $0xd8] sm:$0xff]
          %v1434 = vld [vmem:[#allocation2 + $0xe0] sm:$0xff]
          %v1435 = vld [vmem:[#allocation2 + $0xe8] sm:$0xff]
          %v1436 = vld [vmem:[#allocation2 + $0xf0] sm:$0xff]
          %v1437 = vld [vmem:[#allocation2 + $0xf8] sm:$0xff]
          %v1438 = vld [vmem:[%s743] sm:$0xf]
          %v1439 = vld [vmem:[%s743 + $0x4] sm:$0xf]
          %v1440 = vld [vmem:[%s743 + $0x8] sm:$0xf]
          %v1441 = vld [vmem:[%s743 + $0xc] sm:$0xf]
          %v1442 = vld [vmem:[%s743 + $0x10] sm:$0xf]
          %v1443 = vld [vmem:[%s743 + $0x14] sm:$0xf]
          %v1444 = vld [vmem:[%s743 + $0x18] sm:$0xf]
          %v1445 = vld [vmem:[%s743 + $0x1c] sm:$0xf]
          %v1446 = vld [vmem:[%s743 + $0x20] sm:$0xf]
          %v1447 = vld [vmem:[%s743 + $0x24] sm:$0xf]
          %v1448 = vld [vmem:[%s743 + $0x28] sm:$0xf]
          %v1449 = vld [vmem:[%s743 + $0x2c] sm:$0xf]
          %v1450 = vld [vmem:[%s743 + $0x30] sm:$0xf]
          %v1451 = vld [vmem:[%s743 + $0x34] sm:$0xf]
          %v1452 = vld [vmem:[%s743 + $0x38] sm:$0xf]
          %v1453 = vld [vmem:[%s743 + $0x3c] sm:$0xf]
          %v1454 = vld [vmem:[%s743 + $0x40] sm:$0xf]
          %v1455 = vld [vmem:[%s743 + $0x44] sm:$0xf]
          %v1456 = vld [vmem:[%s743 + $0x48] sm:$0xf]
          %v1457 = vld [vmem:[%s743 + $0x4c] sm:$0xf]
          %v1458 = vld [vmem:[%s743 + $0x50] sm:$0xf]
          %v1459 = vld [vmem:[%s743 + $0x54] sm:$0xf]
          %v1460 = vld [vmem:[%s743 + $0x58] sm:$0xf]
          %v1461 = vld [vmem:[%s743 + $0x5c] sm:$0xf]
          %v1462 = vld [vmem:[%s743 + $0x60] sm:$0xf]
          %v1463 = vld [vmem:[%s743 + $0x64] sm:$0xf]
          %v1464 = vld [vmem:[%s743 + $0x68] sm:$0xf]
          %v1465 = vld [vmem:[%s743 + $0x6c] sm:$0xf]
          %v1466 = vld [vmem:[%s743 + $0x70] sm:$0xf]
          %v1467 = vld [vmem:[%s743 + $0x74] sm:$0xf]
          %v1468 = vld [vmem:[%s743 + $0x78] sm:$0xf]
          %v1469 = vld [vmem:[%s743 + $0x7c] sm:$0xf]
          %v1470 = vunpack.c.l.bf16 %v1438
          %v1471 = vunpack.c.l.bf16 %v1439
          %v1472 = vunpack.c.l.bf16 %v1440
          %v1473 = vunpack.c.l.bf16 %v1441
          %v1474 = vunpack.c.l.bf16 %v1442
          %v1475 = vunpack.c.l.bf16 %v1443
          %v1476 = vunpack.c.l.bf16 %v1444
          %v1477 = vunpack.c.l.bf16 %v1445
          %v1478 = vunpack.c.l.bf16 %v1446
          %v1479 = vunpack.c.l.bf16 %v1447
          %v1480 = vunpack.c.l.bf16 %v1448
          %v1481 = vunpack.c.l.bf16 %v1449
          %v1482 = vunpack.c.l.bf16 %v1450
          %v1483 = vunpack.c.l.bf16 %v1451
          %v1484 = vunpack.c.l.bf16 %v1452
          %v1485 = vunpack.c.l.bf16 %v1453
          %v1486 = vunpack.c.l.bf16 %v1454
          %v1487 = vunpack.c.l.bf16 %v1455
          %v1488 = vunpack.c.l.bf16 %v1456
          %v1489 = vunpack.c.l.bf16 %v1457
          %v1490 = vunpack.c.l.bf16 %v1458
          %v1491 = vunpack.c.l.bf16 %v1459
          %v1492 = vunpack.c.l.bf16 %v1460
          %v1493 = vunpack.c.l.bf16 %v1461
          %v1494 = vunpack.c.l.bf16 %v1462
          %v1495 = vunpack.c.l.bf16 %v1463
          %v1496 = vunpack.c.l.bf16 %v1464
          %v1497 = vunpack.c.l.bf16 %v1465
          %v1498 = vunpack.c.l.bf16 %v1466
          %v1499 = vunpack.c.l.bf16 %v1467
          %v1500 = vunpack.c.l.bf16 %v1468
          %v1501 = vunpack.c.l.bf16 %v1469
          %v1502 = vadd.f32 %v1406, %v1470
          %v1503 = vadd.f32 %v1407, %v1471
          %v1504 = vadd.f32 %v1408, %v1472
          %v1505 = vadd.f32 %v1409, %v1473
          %v1506 = vadd.f32 %v1410, %v1474
          %v1507 = vadd.f32 %v1411, %v1475
          %v1508 = vadd.f32 %v1412, %v1476
          %v1509 = vadd.f32 %v1413, %v1477
          %v1510 = vadd.f32 %v1414, %v1478
          %v1511 = vadd.f32 %v1415, %v1479
          %v1512 = vadd.f32 %v1416, %v1480
          %v1513 = vadd.f32 %v1417, %v1481
          %v1514 = vadd.f32 %v1418, %v1482
          %v1515 = vadd.f32 %v1419, %v1483
          %v1516 = vadd.f32 %v1420, %v1484
          %v1517 = vadd.f32 %v1421, %v1485
          %v1518 = vadd.f32 %v1422, %v1486
          %v1519 = vadd.f32 %v1423, %v1487
          %v1520 = vadd.f32 %v1424, %v1488
          %v1521 = vadd.f32 %v1425, %v1489
          %v1522 = vadd.f32 %v1426, %v1490
          %v1523 = vadd.f32 %v1427, %v1491
          %v1524 = vadd.f32 %v1428, %v1492
          %v1525 = vadd.f32 %v1429, %v1493
          %v1526 = vadd.f32 %v1430, %v1494
          %v1527 = vadd.f32 %v1431, %v1495
          %v1528 = vadd.f32 %v1432, %v1496
          %v1529 = vadd.f32 %v1433, %v1497
          %v1530 = vadd.f32 %v1434, %v1498
          %v1531 = vadd.f32 %v1435, %v1499
          %v1532 = vadd.f32 %v1436, %v1500
          %v1533 = vadd.f32 %v1437, %v1501
          %v1534 = vld [vmem:[%s3] sm:$0x1]
          %v1536 = vlaneseq
          %v1537 = vshrl.u32 %v1536, 7
          %v1538 = vsub.s32 0, %v1537
          %v1539 = vrot.slane %v1534, %v1538
          %v1541 = vadd.f32 %v1502, %v1539
          %v1542 = vadd.f32 %v1503, %v1539
          %v1543 = vadd.f32 %v1504, %v1539
          %v1544 = vadd.f32 %v1505, %v1539
          %v1545 = vadd.f32 %v1506, %v1539
          %v1546 = vadd.f32 %v1507, %v1539
          %v1547 = vadd.f32 %v1508, %v1539
          %v1548 = vadd.f32 %v1509, %v1539
          %v1549 = vadd.f32 %v1510, %v1539
          %v1550 = vadd.f32 %v1511, %v1539
          %v1551 = vadd.f32 %v1512, %v1539
          %v1552 = vadd.f32 %v1513, %v1539
          %v1553 = vadd.f32 %v1514, %v1539
          %v1554 = vadd.f32 %v1515, %v1539
          %v1555 = vadd.f32 %v1516, %v1539
          %v1556 = vadd.f32 %v1517, %v1539
          %v1557 = vadd.f32 %v1518, %v1539
          %v1558 = vadd.f32 %v1519, %v1539
          %v1559 = vadd.f32 %v1520, %v1539
          %v1560 = vadd.f32 %v1521, %v1539
          %v1561 = vadd.f32 %v1522, %v1539
          %v1562 = vadd.f32 %v1523, %v1539
          %v1563 = vadd.f32 %v1524, %v1539
          %v1564 = vadd.f32 %v1525, %v1539
          %v1565 = vadd.f32 %v1526, %v1539
          %v1566 = vadd.f32 %v1527, %v1539
          %v1567 = vadd.f32 %v1528, %v1539
          %v1568 = vadd.f32 %v1529, %v1539
          %v1569 = vadd.f32 %v1530, %v1539
          %v1570 = vadd.f32 %v1531, %v1539
          %v1571 = vadd.f32 %v1532, %v1539
          %v1572 = vadd.f32 %v1533, %v1539
          %v1573 = vmax.f32 %v1541, 0.0
          %v1574 = vmax.f32 %v1542, 0.0
          %v1575 = vmax.f32 %v1543, 0.0
          %v1576 = vmax.f32 %v1544, 0.0
          %v1577 = vmax.f32 %v1545, 0.0
          %v1578 = vmax.f32 %v1546, 0.0
          %v1579 = vmax.f32 %v1547, 0.0
          %v1580 = vmax.f32 %v1548, 0.0
          %v1581 = vmax.f32 %v1549, 0.0
          %v1582 = vmax.f32 %v1550, 0.0
          %v1583 = vmax.f32 %v1551, 0.0
          %v1584 = vmax.f32 %v1552, 0.0
          %v1585 = vmax.f32 %v1553, 0.0
          %v1586 = vmax.f32 %v1554, 0.0
          %v1587 = vmax.f32 %v1555, 0.0
          %v1588 = vmax.f32 %v1556, 0.0
          %v1589 = vmax.f32 %v1557, 0.0
          %v1590 = vmax.f32 %v1558, 0.0
          %v1591 = vmax.f32 %v1559, 0.0
          %v1592 = vmax.f32 %v1560, 0.0
          %v1593 = vmax.f32 %v1561, 0.0
          %v1594 = vmax.f32 %v1562, 0.0
          %v1595 = vmax.f32 %v1563, 0.0
          %v1596 = vmax.f32 %v1564, 0.0
          %v1597 = vmax.f32 %v1565, 0.0
          %v1598 = vmax.f32 %v1566, 0.0
          %v1599 = vmax.f32 %v1567, 0.0
          %v1600 = vmax.f32 %v1568, 0.0
          %v1601 = vmax.f32 %v1569, 0.0
          %v1602 = vmax.f32 %v1570, 0.0
          %v1603 = vmax.f32 %v1571, 0.0
          %v1604 = vmax.f32 %v1572, 0.0
          %v1605 = vpack.c.bf16 %v1574, %v1573
          %v1606 = vpack.c.bf16 %v1576, %v1575
          %v1607 = vpack.c.bf16 %v1578, %v1577
          %v1608 = vpack.c.bf16 %v1580, %v1579
          %v1609 = vpack.c.bf16 %v1582, %v1581
          %v1610 = vpack.c.bf16 %v1584, %v1583
          %v1611 = vpack.c.bf16 %v1586, %v1585
          %v1612 = vpack.c.bf16 %v1588, %v1587
          %v1613 = vpack.c.bf16 %v1590, %v1589
          %v1614 = vpack.c.bf16 %v1592, %v1591
          %v1615 = vpack.c.bf16 %v1594, %v1593
          %v1616 = vpack.c.bf16 %v1596, %v1595
          %v1617 = vpack.c.bf16 %v1598, %v1597
          %v1618 = vpack.c.bf16 %v1600, %v1599
          %v1619 = vpack.c.bf16 %v1602, %v1601
          %v1620 = vpack.c.bf16 %v1604, %v1603
          %v1621 = vld [vmem:[%s4] sm:$0xff]
          %v1622 = vld [vmem:[%s4 + $0x8] sm:$0xff]
          %v1623 = vld [vmem:[%s4 + $0x10] sm:$0xff]
          %v1624 = vld [vmem:[%s4 + $0x18] sm:$0xff]
          %v1625 = vld [vmem:[%s4 + $0x20] sm:$0xff]
          %v1626 = vld [vmem:[%s4 + $0x28] sm:$0xff]
          %v1627 = vld [vmem:[%s4 + $0x30] sm:$0xff]
          %v1628 = vld [vmem:[%s4 + $0x38] sm:$0xff]
          %v1629 = vld [vmem:[%s4 + $0x40] sm:$0xff]
          %v1630 = vld [vmem:[%s4 + $0x48] sm:$0xff]
          %v1631 = vld [vmem:[%s4 + $0x50] sm:$0xff]
          %v1632 = vld [vmem:[%s4 + $0x58] sm:$0xff]
          %v1633 = vld [vmem:[%s4 + $0x60] sm:$0xff]
          %v1634 = vld [vmem:[%s4 + $0x68] sm:$0xff]
          %v1635 = vld [vmem:[%s4 + $0x70] sm:$0xff]
          %v1636 = vld [vmem:[%s4 + $0x78] sm:$0xff]
          %v1653 = vunpack.c.l.b16 %v1621
          %v1654 = vunpack.c.h.b16 %v1621
          %v1655 = vunpack.c.l.b16 %v1622
          %v1656 = vunpack.c.h.b16 %v1622
          %v1657 = vunpack.c.l.b16 %v1623
          %v1658 = vunpack.c.h.b16 %v1623
          %v1659 = vunpack.c.l.b16 %v1624
          %v1660 = vunpack.c.h.b16 %v1624
          %v1661 = vunpack.c.l.b16 %v1625
          %v1662 = vunpack.c.h.b16 %v1625
          %v1663 = vunpack.c.l.b16 %v1626
          %v1664 = vunpack.c.h.b16 %v1626
          %v1665 = vunpack.c.l.b16 %v1627
          %v1666 = vunpack.c.h.b16 %v1627
          %v1667 = vunpack.c.l.b16 %v1628
          %v1668 = vunpack.c.h.b16 %v1628
          %v1669 = vunpack.c.l.b16 %v1629
          %v1670 = vunpack.c.h.b16 %v1629
          %v1671 = vunpack.c.l.b16 %v1630
          %v1672 = vunpack.c.h.b16 %v1630
          %v1673 = vunpack.c.l.b16 %v1631
          %v1674 = vunpack.c.h.b16 %v1631
          %v1675 = vunpack.c.l.b16 %v1632
          %v1676 = vunpack.c.h.b16 %v1632
          %v1677 = vunpack.c.l.b16 %v1633
          %v1678 = vunpack.c.h.b16 %v1633
          %v1679 = vunpack.c.l.b16 %v1634
          %v1680 = vunpack.c.h.b16 %v1634
          %v1681 = vunpack.c.l.b16 %v1635
          %v1682 = vunpack.c.h.b16 %v1635
          %v1683 = vunpack.c.l.b16 %v1636
          %v1684 = vunpack.c.h.b16 %v1636
          %v1685 = vpack.c.b16 %v1655, %v1653
          %v1686 = vpack.c.b16 %v1656, %v1654
          %v1687 = vpack.c.b16 %v1659, %v1657
          %v1688 = vpack.c.b16 %v1660, %v1658
          %v1689 = vpack.c.b16 %v1663, %v1661
          %v1690 = vpack.c.b16 %v1664, %v1662
          %v1691 = vpack.c.b16 %v1667, %v1665
          %v1692 = vpack.c.b16 %v1668, %v1666
          %v1693 = vpack.c.b16 %v1671, %v1669
          %v1694 = vpack.c.b16 %v1672, %v1670
          %v1695 = vpack.c.b16 %v1675, %v1673
          %v1696 = vpack.c.b16 %v1676, %v1674
          %v1697 = vpack.c.b16 %v1679, %v1677
          %v1698 = vpack.c.b16 %v1680, %v1678
          %v1699 = vpack.c.b16 %v1683, %v1681
          %v1700 = vpack.c.b16 %v1684, %v1682
          %1717 = vmatprep.subr.bf16.mxu0 %v1700
          %1718 = vmatpush1.bf16.msra.mxu0 %v1699
          %1719 = vmatprep.subr.bf16.mxu0 %v1698
          %1720 = vmatpush1.bf16.msra.mxu0 %v1697
          %1721 = vmatprep.subr.bf16.mxu0 %v1696
          %1722 = vmatpush1.bf16.msra.mxu0 %v1695
          %1723 = vmatprep.subr.bf16.mxu0 %v1694
          %1724 = vmatpush1.bf16.msra.mxu0 %v1693
          %1725 = vmatprep.subr.bf16.mxu0 %v1692
          %1726 = vmatpush1.bf16.msra.mxu0 %v1691
          %1727 = vmatprep.subr.bf16.mxu0 %v1690
          %1728 = vmatpush1.bf16.msra.mxu0 %v1689
          %1729 = vmatprep.subr.bf16.mxu0 %v1688
          %1730 = vmatpush1.bf16.msra.mxu0 %v1687
          %1731 = vmatprep.subr.bf16.mxu0 %v1686
          %1732 = vmatpush1.bf16.msra.mxu0 %v1685
          %1733 = vmatprep.subr.bf16.mxu0 0
          %1734 = vmatpush2.bf16.msra.mxu0 0
          %1735 = vmatprep.subr.bf16.mxu0 0
          %1736 = vmatpush2.bf16.msra.mxu0 0
          %1737 = vmatprep.subr.bf16.mxu0 0
          %1738 = vmatpush2.bf16.msra.mxu0 0
          %1739 = vmatprep.subr.bf16.mxu0 0
          %1740 = vmatpush2.bf16.msra.mxu0 0
          %1741 = vmatprep.subr.bf16.mxu0 0
          %1742 = vmatpush2.bf16.msra.mxu0 0
          %1743 = vmatprep.subr.bf16.mxu0 0
          %1744 = vmatpush2.bf16.msra.mxu0 0
          %1745 = vmatprep.subr.bf16.mxu0 0
          %1746 = vmatpush2.bf16.msra.mxu0 0
          %1747 = vmatprep.subr.bf16.mxu0 0
          %1748 = vmatpush2.bf16.msra.mxu0 0
          %1749 = vmatprep.mubr.bf16.mxu0 0
          %1750 = vmatmul.mubr.bf16.gmra.mxu0 %v1605
          %v1751 = vpop.f32.mrf.mxu0
          %v1752 = vadd.f32 0.0, %v1751
          %v1753 = vpop.f32.mrf.mxu0
          %v1754 = vadd.f32 0.0, %v1753
          %v1755 = vpop.f32.mrf.mxu0
          %v1756 = vadd.f32 0.0, %v1755
          %v1757 = vpop.f32.mrf.mxu0
          %v1758 = vadd.f32 0.0, %v1757
          %1759 = vmatprep.mubr.bf16.mxu0 0
          %1760 = vmatmul.mubr.bf16.gmra.mxu0 %v1606
          %v1761 = vpop.f32.mrf.mxu0
          %v1762 = vadd.f32 0.0, %v1761
          %v1763 = vpop.f32.mrf.mxu0
          %v1764 = vadd.f32 0.0, %v1763
          %v1765 = vpop.f32.mrf.mxu0
          %v1766 = vadd.f32 0.0, %v1765
          %v1767 = vpop.f32.mrf.mxu0
          %v1768 = vadd.f32 0.0, %v1767
          %1769 = vmatprep.mubr.bf16.mxu0 0
          %1770 = vmatmul.mubr.bf16.gmra.mxu0 %v1607
          %v1771 = vpop.f32.mrf.mxu0
          %v1772 = vadd.f32 0.0, %v1771
          %v1773 = vpop.f32.mrf.mxu0
          %v1774 = vadd.f32 0.0, %v1773
          %v1775 = vpop.f32.mrf.mxu0
          %v1776 = vadd.f32 0.0, %v1775
          %v1777 = vpop.f32.mrf.mxu0
          %v1778 = vadd.f32 0.0, %v1777
          %1779 = vmatprep.mubr.bf16.mxu0 0
          %1780 = vmatmul.mubr.bf16.gmra.mxu0 %v1608
          %v1781 = vpop.f32.mrf.mxu0
          %v1782 = vadd.f32 0.0, %v1781
          %v1783 = vpop.f32.mrf.mxu0
          %v1784 = vadd.f32 0.0, %v1783
          %v1785 = vpop.f32.mrf.mxu0
          %v1786 = vadd.f32 0.0, %v1785
          %v1787 = vpop.f32.mrf.mxu0
          %v1788 = vadd.f32 0.0, %v1787
          %1789 = vmatprep.mubr.bf16.mxu0 0
          %1790 = vmatmul.mubr.bf16.gmra.mxu0 %v1609
          %v1791 = vpop.f32.mrf.mxu0
          %v1792 = vadd.f32 0.0, %v1791
          %v1793 = vpop.f32.mrf.mxu0
          %v1794 = vadd.f32 0.0, %v1793
          %v1795 = vpop.f32.mrf.mxu0
          %v1796 = vadd.f32 0.0, %v1795
          %v1797 = vpop.f32.mrf.mxu0
          %v1798 = vadd.f32 0.0, %v1797
          %1799 = vmatprep.mubr.bf16.mxu0 0
          %1800 = vmatmul.mubr.bf16.gmra.mxu0 %v1610
          %v1801 = vpop.f32.mrf.mxu0
          %v1802 = vadd.f32 0.0, %v1801
          %v1803 = vpop.f32.mrf.mxu0
          %v1804 = vadd.f32 0.0, %v1803
          %v1805 = vpop.f32.mrf.mxu0
          %v1806 = vadd.f32 0.0, %v1805
          %v1807 = vpop.f32.mrf.mxu0
          %v1808 = vadd.f32 0.0, %v1807
          %1809 = vmatprep.mubr.bf16.mxu0 0
          %1810 = vmatmul.mubr.bf16.gmra.mxu0 %v1611
          %v1811 = vpop.f32.mrf.mxu0
          %v1812 = vadd.f32 0.0, %v1811
          %v1813 = vpop.f32.mrf.mxu0
          %v1814 = vadd.f32 0.0, %v1813
          %v1815 = vpop.f32.mrf.mxu0
          %v1816 = vadd.f32 0.0, %v1815
          %v1817 = vpop.f32.mrf.mxu0
          %v1818 = vadd.f32 0.0, %v1817
          %1819 = vmatprep.mubr.bf16.mxu0 0
          %1820 = vmatmul.mubr.bf16.gmra.mxu0 %v1612
          %v1821 = vpop.f32.mrf.mxu0
          %v1822 = vadd.f32 0.0, %v1821
          %v1823 = vpop.f32.mrf.mxu0
          %v1824 = vadd.f32 0.0, %v1823
          %v1825 = vpop.f32.mrf.mxu0
          %v1826 = vadd.f32 0.0, %v1825
          %v1827 = vpop.f32.mrf.mxu0
          %v1828 = vadd.f32 0.0, %v1827
          %1829 = vmatprep.mubr.bf16.mxu0 0
          %1830 = vmatmul.mubr.bf16.gmra.mxu0 %v1613
          %v1831 = vpop.f32.mrf.mxu0
          %v1832 = vadd.f32 0.0, %v1831
          %v1833 = vpop.f32.mrf.mxu0
          %v1834 = vadd.f32 0.0, %v1833
          %v1835 = vpop.f32.mrf.mxu0
          %v1836 = vadd.f32 0.0, %v1835
          %v1837 = vpop.f32.mrf.mxu0
          %v1838 = vadd.f32 0.0, %v1837
          %1839 = vmatprep.mubr.bf16.mxu0 0
          %1840 = vmatmul.mubr.bf16.gmra.mxu0 %v1614
          %v1841 = vpop.f32.mrf.mxu0
          %v1842 = vadd.f32 0.0, %v1841
          %v1843 = vpop.f32.mrf.mxu0
          %v1844 = vadd.f32 0.0, %v1843
          %v1845 = vpop.f32.mrf.mxu0
          %v1846 = vadd.f32 0.0, %v1845
          %v1847 = vpop.f32.mrf.mxu0
          %v1848 = vadd.f32 0.0, %v1847
          %1849 = vmatprep.mubr.bf16.mxu0 0
          %1850 = vmatmul.mubr.bf16.gmra.mxu0 %v1615
          %v1851 = vpop.f32.mrf.mxu0
          %v1852 = vadd.f32 0.0, %v1851
          %v1853 = vpop.f32.mrf.mxu0
          %v1854 = vadd.f32 0.0, %v1853
          %v1855 = vpop.f32.mrf.mxu0
          %v1856 = vadd.f32 0.0, %v1855
          %v1857 = vpop.f32.mrf.mxu0
          %v1858 = vadd.f32 0.0, %v1857
          %1859 = vmatprep.mubr.bf16.mxu0 0
          %1860 = vmatmul.mubr.bf16.gmra.mxu0 %v1616
          %v1861 = vpop.f32.mrf.mxu0
          %v1862 = vadd.f32 0.0, %v1861
          %v1863 = vpop.f32.mrf.mxu0
          %v1864 = vadd.f32 0.0, %v1863
          %v1865 = vpop.f32.mrf.mxu0
          %v1866 = vadd.f32 0.0, %v1865
          %v1867 = vpop.f32.mrf.mxu0
          %v1868 = vadd.f32 0.0, %v1867
          %1869 = vmatprep.mubr.bf16.mxu0 0
          %1870 = vmatmul.mubr.bf16.gmra.mxu0 %v1617
          %v1871 = vpop.f32.mrf.mxu0
          %v1872 = vadd.f32 0.0, %v1871
          %v1873 = vpop.f32.mrf.mxu0
          %v1874 = vadd.f32 0.0, %v1873
          %v1875 = vpop.f32.mrf.mxu0
          %v1876 = vadd.f32 0.0, %v1875
          %v1877 = vpop.f32.mrf.mxu0
          %v1878 = vadd.f32 0.0, %v1877
          %1879 = vmatprep.mubr.bf16.mxu0 0
          %1880 = vmatmul.mubr.bf16.gmra.mxu0 %v1618
          %v1881 = vpop.f32.mrf.mxu0
          %v1882 = vadd.f32 0.0, %v1881
          %v1883 = vpop.f32.mrf.mxu0
          %v1884 = vadd.f32 0.0, %v1883
          %v1885 = vpop.f32.mrf.mxu0
          %v1886 = vadd.f32 0.0, %v1885
          %v1887 = vpop.f32.mrf.mxu0
          %v1888 = vadd.f32 0.0, %v1887
          %1889 = vmatprep.mubr.bf16.mxu0 0
          %1890 = vmatmul.mubr.bf16.gmra.mxu0 %v1619
          %v1891 = vpop.f32.mrf.mxu0
          %v1892 = vadd.f32 0.0, %v1891
          %v1893 = vpop.f32.mrf.mxu0
          %v1894 = vadd.f32 0.0, %v1893
          %v1895 = vpop.f32.mrf.mxu0
          %v1896 = vadd.f32 0.0, %v1895
          %v1897 = vpop.f32.mrf.mxu0
          %v1898 = vadd.f32 0.0, %v1897
          %1899 = vmatprep.mubr.bf16.mxu0 0
          %1900 = vmatmul.mubr.bf16.gmra.mxu0 %v1620
          %v1901 = vpop.f32.mrf.mxu0
          %v1902 = vadd.f32 0.0, %v1901
          %v1903 = vpop.f32.mrf.mxu0
          %v1904 = vadd.f32 0.0, %v1903
          %v1905 = vpop.f32.mrf.mxu0
          %v1906 = vadd.f32 0.0, %v1905
          %v1907 = vpop.f32.mrf.mxu0
          %v1908 = vadd.f32 0.0, %v1907
          %1909 = vdwg.mxu0
          %v1910 = vpack.c.bf16 %v1756, %v1752
          %v1911 = vpack.c.bf16 %v1758, %v1754
          %v1912 = vpack.c.bf16 %v1766, %v1762
          %v1913 = vpack.c.bf16 %v1768, %v1764
          %v1914 = vpack.c.bf16 %v1776, %v1772
          %v1915 = vpack.c.bf16 %v1778, %v1774
          %v1916 = vpack.c.bf16 %v1786, %v1782
          %v1917 = vpack.c.bf16 %v1788, %v1784
          %v1918 = vpack.c.bf16 %v1796, %v1792
          %v1919 = vpack.c.bf16 %v1798, %v1794
          %v1920 = vpack.c.bf16 %v1806, %v1802
          %v1921 = vpack.c.bf16 %v1808, %v1804
          %v1922 = vpack.c.bf16 %v1816, %v1812
          %v1923 = vpack.c.bf16 %v1818, %v1814
          %v1924 = vpack.c.bf16 %v1826, %v1822
          %v1925 = vpack.c.bf16 %v1828, %v1824
          %v1926 = vpack.c.bf16 %v1836, %v1832
          %v1927 = vpack.c.bf16 %v1838, %v1834
          %v1928 = vpack.c.bf16 %v1846, %v1842
          %v1929 = vpack.c.bf16 %v1848, %v1844
          %v1930 = vpack.c.bf16 %v1856, %v1852
          %v1931 = vpack.c.bf16 %v1858, %v1854
          %v1932 = vpack.c.bf16 %v1866, %v1862
          %v1933 = vpack.c.bf16 %v1868, %v1864
          %v1934 = vpack.c.bf16 %v1876, %v1872
          %v1935 = vpack.c.bf16 %v1878, %v1874
          %v1936 = vpack.c.bf16 %v1886, %v1882
          %v1937 = vpack.c.bf16 %v1888, %v1884
          %v1938 = vpack.c.bf16 %v1896, %v1892
          %v1939 = vpack.c.bf16 %v1898, %v1894
          %v1940 = vpack.c.bf16 %v1906, %v1902
          %v1941 = vpack.c.bf16 %v1908, %v1904
          %v1974 = vunpack.c.l.b16 %v1910
          %v1975 = vunpack.c.l.b16 %v1911
          %v1976 = vunpack.c.h.b16 %v1910
          %v1977 = vunpack.c.h.b16 %v1911
          %v1978 = vunpack.c.l.b16 %v1912
          %v1979 = vunpack.c.l.b16 %v1913
          %v1980 = vunpack.c.h.b16 %v1912
          %v1981 = vunpack.c.h.b16 %v1913
          %v1982 = vunpack.c.l.b16 %v1914
          %v1983 = vunpack.c.l.b16 %v1915
          %v1984 = vunpack.c.h.b16 %v1914
          %v1985 = vunpack.c.h.b16 %v1915
          %v1986 = vunpack.c.l.b16 %v1916
          %v1987 = vunpack.c.l.b16 %v1917
          %v1988 = vunpack.c.h.b16 %v1916
          %v1989 = vunpack.c.h.b16 %v1917
          %v1990 = vunpack.c.l.b16 %v1918
          %v1991 = vunpack.c.l.b16 %v1919
          %v1992 = vunpack.c.h.b16 %v1918
          %v1993 = vunpack.c.h.b16 %v1919
          %v1994 = vunpack.c.l.b16 %v1920
          %v1995 = vunpack.c.l.b16 %v1921
          %v1996 = vunpack.c.h.b16 %v1920
          %v1997 = vunpack.c.h.b16 %v1921
          %v1998 = vunpack.c.l.b16 %v1922
          %v1999 = vunpack.c.l.b16 %v1923
          %v2000 = vunpack.c.h.b16 %v1922
          %v2001 = vunpack.c.h.b16 %v1923
          %v2002 = vunpack.c.l.b16 %v1924
          %v2003 = vunpack.c.l.b16 %v1925
          %v2004 = vunpack.c.h.b16 %v1924
          %v2005 = vunpack.c.h.b16 %v1925
          %v2006 = vunpack.c.l.b16 %v1926
          %v2007 = vunpack.c.l.b16 %v1927
          %v2008 = vunpack.c.h.b16 %v1926
          %v2009 = vunpack.c.h.b16 %v1927
          %v2010 = vunpack.c.l.b16 %v1928
          %v2011 = vunpack.c.l.b16 %v1929
          %v2012 = vunpack.c.h.b16 %v1928
          %v2013 = vunpack.c.h.b16 %v1929
          %v2014 = vunpack.c.l.b16 %v1930
          %v2015 = vunpack.c.l.b16 %v1931
          %v2016 = vunpack.c.h.b16 %v1930
          %v2017 = vunpack.c.h.b16 %v1931
          %v2018 = vunpack.c.l.b16 %v1932
          %v2019 = vunpack.c.l.b16 %v1933
          %v2020 = vunpack.c.h.b16 %v1932
          %v2021 = vunpack.c.h.b16 %v1933
          %v2022 = vunpack.c.l.b16 %v1934
          %v2023 = vunpack.c.l.b16 %v1935
          %v2024 = vunpack.c.h.b16 %v1934
          %v2025 = vunpack.c.h.b16 %v1935
          %v2026 = vunpack.c.l.b16 %v1936
          %v2027 = vunpack.c.l.b16 %v1937
          %v2028 = vunpack.c.h.b16 %v1936
          %v2029 = vunpack.c.h.b16 %v1937
          %v2030 = vunpack.c.l.b16 %v1938
          %v2031 = vunpack.c.l.b16 %v1939
          %v2032 = vunpack.c.h.b16 %v1938
          %v2033 = vunpack.c.h.b16 %v1939
          %v2034 = vunpack.c.l.b16 %v1940
          %v2035 = vunpack.c.l.b16 %v1941
          %v2036 = vunpack.c.h.b16 %v1940
          %v2037 = vunpack.c.h.b16 %v1941
          %v2038 = vpack.c.b16 %v1975, %v1974
          %v2039 = vpack.c.b16 %v1977, %v1976
          %v2040 = vpack.c.b16 %v1979, %v1978
          %v2041 = vpack.c.b16 %v1981, %v1980
          %v2042 = vpack.c.b16 %v1983, %v1982
          %v2043 = vpack.c.b16 %v1985, %v1984
          %v2044 = vpack.c.b16 %v1987, %v1986
          %v2045 = vpack.c.b16 %v1989, %v1988
          %v2046 = vpack.c.b16 %v1991, %v1990
          %v2047 = vpack.c.b16 %v1993, %v1992
          %v2048 = vpack.c.b16 %v1995, %v1994
          %v2049 = vpack.c.b16 %v1997, %v1996
          %v2050 = vpack.c.b16 %v1999, %v1998
          %v2051 = vpack.c.b16 %v2001, %v2000
          %v2052 = vpack.c.b16 %v2003, %v2002
          %v2053 = vpack.c.b16 %v2005, %v2004
          %v2054 = vpack.c.b16 %v2007, %v2006
          %v2055 = vpack.c.b16 %v2009, %v2008
          %v2056 = vpack.c.b16 %v2011, %v2010
          %v2057 = vpack.c.b16 %v2013, %v2012
          %v2058 = vpack.c.b16 %v2015, %v2014
          %v2059 = vpack.c.b16 %v2017, %v2016
          %v2060 = vpack.c.b16 %v2019, %v2018
          %v2061 = vpack.c.b16 %v2021, %v2020
          %v2062 = vpack.c.b16 %v2023, %v2022
          %v2063 = vpack.c.b16 %v2025, %v2024
          %v2064 = vpack.c.b16 %v2027, %v2026
          %v2065 = vpack.c.b16 %v2029, %v2028
          %v2066 = vpack.c.b16 %v2031, %v2030
          %v2067 = vpack.c.b16 %v2033, %v2032
          %v2068 = vpack.c.b16 %v2035, %v2034
          %v2069 = vpack.c.b16 %v2037, %v2036
          %2102 = vst [vmem:[%s786] sm:$0xff] %v2038
          %2103 = vst [vmem:[%s786 + $0x8] sm:$0xff] %v2039
          %2104 = vst [vmem:[%s786 + $0x10] sm:$0xff] %v2040
          %2105 = vst [vmem:[%s786 + $0x18] sm:$0xff] %v2041
          %2106 = vst [vmem:[%s786 + $0x20] sm:$0xff] %v2042
          %2107 = vst [vmem:[%s786 + $0x28] sm:$0xff] %v2043
          %2108 = vst [vmem:[%s786 + $0x30] sm:$0xff] %v2044
          %2109 = vst [vmem:[%s786 + $0x38] sm:$0xff] %v2045
          %2110 = vst [vmem:[%s786 + $0x40] sm:$0xff] %v2046
          %2111 = vst [vmem:[%s786 + $0x48] sm:$0xff] %v2047
          %2112 = vst [vmem:[%s786 + $0x50] sm:$0xff] %v2048
          %2113 = vst [vmem:[%s786 + $0x58] sm:$0xff] %v2049
          %2114 = vst [vmem:[%s786 + $0x60] sm:$0xff] %v2050
          %2115 = vst [vmem:[%s786 + $0x68] sm:$0xff] %v2051
          %2116 = vst [vmem:[%s786 + $0x70] sm:$0xff] %v2052
          %2117 = vst [vmem:[%s786 + $0x78] sm:$0xff] %v2053
          %2118 = vst [vmem:[%s786 + $0x80] sm:$0xff] %v2054
          %2119 = vst [vmem:[%s786 + $0x88] sm:$0xff] %v2055
          %2120 = vst [vmem:[%s786 + $0x90] sm:$0xff] %v2056
          %2121 = vst [vmem:[%s786 + $0x98] sm:$0xff] %v2057
          %2122 = vst [vmem:[%s786 + $0xa0] sm:$0xff] %v2058
          %2123 = vst [vmem:[%s786 + $0xa8] sm:$0xff] %v2059
          %2124 = vst [vmem:[%s786 + $0xb0] sm:$0xff] %v2060
          %2125 = vst [vmem:[%s786 + $0xb8] sm:$0xff] %v2061
          %2126 = vst [vmem:[%s786 + $0xc0] sm:$0xff] %v2062
          %2127 = vst [vmem:[%s786 + $0xc8] sm:$0xff] %v2063
          %2128 = vst [vmem:[%s786 + $0xd0] sm:$0xff] %v2064
          %2129 = vst [vmem:[%s786 + $0xd8] sm:$0xff] %v2065
          %2130 = vst [vmem:[%s786 + $0xe0] sm:$0xff] %v2066
          %2131 = vst [vmem:[%s786 + $0xe8] sm:$0xff] %v2067
          %2132 = vst [vmem:[%s786 + $0xf0] sm:$0xff] %v2068
          %2133 = vst [vmem:[%s786 + $0xf8] sm:$0xff] %v2069
        $region168: #{graphsage_forward.4} parent=147 // pred_fallthru
          _
        %s2134 = smul.u32 32, %s20
        %p2135 = scmp.lt.s32.totalorder %s2134, 63
        %s2136 = scalar_select %p2135, %s2134, 63
        %s2137 = smul.addr %s2136, 2
        %s2138 = smul.addr %s2137, 4
        %s2139 = scalar_lea.vmem %s5, %s2138
        // Predicated region
        $region169: #{graphsage_forward.4} parent=147 // pred_check
          %p2140 = pneg %p168
        $region170: #{graphsage_forward.4} parent=147 // pred_check_branch
          %2142 = sbr.rel (%p2140) target = $region172
        $region171: #{graphsage_forward.4} parent=147 // pred_region
          %s2143 = smul.u32 32, %s20
        $region172: #{graphsage_forward.4} parent=147 // pred_fallthru
          _
      $region148: #{graphsage_forward.4} parent=5 // pred_fallthru
        _
      %p2144 = scmp.le.s32.totalorder 2, %s11
      // Predicated region
      $region173: #{graphsage_forward.4} parent=5 // pred_check
        %p2145 = pneg %p2144
      $region174: #{graphsage_forward.4} parent=5 // pred_check_branch
        %2147 = sbr.rel (%p2145) target = $region176
      $region175: #{graphsage_forward.4} parent=5 // pred_region
        %s2148 = ssub.s32 %s11, 2
        // Predicated region
        $region177: #{graphsage_forward.4} parent=175 // pred_check
          %p2149 = pneg %p174
        $region178: #{graphsage_forward.4} parent=175 // pred_check_branch
          %2151 = sbr.rel (%p2149) target = $region180
        $region179: #{graphsage_forward.4} parent=175 // pred_region
          %s2152 = smul.u32 32, %s22
          %p2153 = scmp.lt.s32.totalorder %s2152, 63
          %s2154 = scalar_select %p2153, %s2152, 63
          %s2155 = smul.addr %s2154, 2
          %s2156 = smul.addr %s2155, 4
          %s2157 = scalar_lea.vmem %s5, %s2156
        $region180: #{graphsage_forward.4} parent=175 // pred_fallthru
          _
      $region176: #{graphsage_forward.4} parent=5 // pred_fallthru
        _
    $region6: #{graphsage_forward.4} parent=1 // loop_footer
      %s15 = sadd.s32 1, %s11
    $region7: #{graphsage_forward.4} parent=1 // loop_footer_branch
      %10 = sbr.rel target = $region3
    $region8: #{graphsage_forward.4} parent=1 // loop_exit
      _

</llo_original>
